<compile_context>
chip_gen: v6e
topology: v6e:2x2x1
jax: 0.10.0
libtpu: 0.0.40
codegen_flags: <defaults>
</compile_context>

<pallas_src>
import functools

import jax
import jax.numpy as jnp
from jax import lax
from jax.experimental import pallas as pl
from jax.experimental.pallas import tpu as pltpu


def wae_disc_kernel(x_ref, w1_ref, w2_ref, w3_ref, w4_ref, c_ref, o_ref, *, n_split):
    """One batch tile: 4x(Linear+ReLU) -> Linear(512->1) -> Sigmoid, feature-major.

    x_ref : (tb, z)     bf16  batch tile (rows = batch)
    w*_ref: (dim_h, K)  bf16  PyTorch (out, in) layout, resident
    c_ref : (dim_h, 8)  f32   packed constants: cols 0-3 = b1..b4,
                              col 4 = final 512->1 weight column, c[0,5] = final bias
    o_ref : (1, tb)     f32   lane-dense sigmoid row
    """
    tb = x_ref.shape[0]
    sub = tb // n_split

    b = [c_ref[:, i:i + 1] for i in range(4)]        # (dim_h, 1) each
    w5 = c_ref[:, 4:5]                                # (dim_h, 1)
    b5 = c_ref[0:1, 5:6]                              # (1, 1)

    # ---- Layer 1: (dim_h, z) @ (z, sub) per lane sub-tile, contracting on z.
    # The sub-chains are fully independent -> one basic block, so the LLO
    # scheduler can overlap MXU of one with the VPU epilogue of the other.
    hs = []
    for s in range(n_split):
        x_s = x_ref[s * sub:(s + 1) * sub, :]                         # (sub, z) bf16
        h = lax.dot_general(w1_ref[...], x_s,
                            (((1,), (1,)), ((), ())),                 # contract on z
                            preferred_element_type=jnp.float32)       # (dim_h, sub) f32
        hs.append(jnp.maximum(h + b[0], 0.0).astype(jnp.bfloat16))    # bf16 before spill

    # ---- Hidden layers 2-4 ----------------------------------------------------
    for li, w_ref in enumerate((w2_ref, w3_ref, w4_ref), start=1):
        w = w_ref[...]
        hs = [jnp.maximum(
                  jnp.dot(w, h, preferred_element_type=jnp.float32) + b[li],
                  0.0).astype(jnp.bfloat16)
              for h in hs]

    # ---- Final 512 -> 1: VPU multiply + sublane (XLU) reduce, no N=1 MXU pass.
    for s, h in enumerate(hs):
        logits = jnp.sum(h.astype(jnp.float32) * w5, axis=0, keepdims=True) + b5
        o_ref[:, s * sub:(s + 1) * sub] = jax.nn.sigmoid(logits)      # (1, sub)


def _round_up(n, m):
    return ((n + m - 1) // m) * m


def _cdiv(a, b):
    return -(-a // b)


def _plan_tiles(B, tile_b):
    """Lane-aligned tiling plan -> (padded_batch, tile_width, grid_len).

    * batch padded to a multiple of 128 lanes (lane-dense stores, full MXU pass)
    * grid length forced even when >1 so v7x megacore keeps both TCs busy
      (costs at most one extra padded tile on single-TC chips).
    """
    b_pad = _round_up(max(B, 128), 128)
    tb = max(128, (min(tile_b, b_pad) // 128) * 128)
    n = _cdiv(b_pad, tb)
    if n > 1 and n % 2 == 1:
        n += 1
    return n * tb, tb, n


def _vmem_limit_bytes(z, dim_h, tb):
    """Computed VMEM budget: resident weights + double-buffered IO + activation
    working set + margin (~13 MiB at tb=512) — leaves headroom on v7x's 64 MiB."""
    w_bytes = dim_h * z * 2 + 3 * dim_h * dim_h * 2       # bf16 weights, single-buffered
    c_bytes = dim_h * 128 * 4                              # packed consts, lane-padded
    io_bytes = 2 * tb * z * 2 + 2 * 8 * tb * 4             # x tile + out row, double-buffered
    act_bytes = 6 * dim_h * tb * 4                         # f32 intermediates / spill headroom
    return min(_round_up(w_bytes + c_bytes + io_bytes + act_bytes + (4 << 20), 1 << 20),
               32 * 1024 * 1024)


def wae_discriminator(x, params, *, tile_b=512):
    """x: (B, z_size). params: see init_params. Returns (B, 1) sigmoid scores."""
    B, z = x.shape
    dim_h = params["w1"].shape[0]

    b_total, tb, n_tiles = _plan_tiles(B, tile_b)
    n_split = 2 if tb % 256 == 0 else 1       # keep sub-tiles 128-lane aligned

    # bf16 input halves the per-tile x DMA; pad batch with zero rows (padded
    # columns are independent of real ones and are sliced off below).
    xb = x.astype(jnp.bfloat16)
    if b_total != B:
        xb = jnp.pad(xb, ((0, b_total - B), (0, 0)))

    def const_spec(shape):
        # Constant index_map -> fetched once; single-buffer to save VMEM.
        return pl.BlockSpec(shape, lambda i: (0, 0), pipeline_mode=pl.Buffered(1))

    flops = 2 * b_total * (z * dim_h + 3 * dim_h * dim_h + dim_h)
    bytes_accessed = (b_total * z * 2
                      + sum(int(v.size) * v.dtype.itemsize for v in params.values())
                      + b_total * 4)

    out = pl.pallas_call(
        functools.partial(wae_disc_kernel, n_split=n_split),
        out_shape=jax.ShapeDtypeStruct((1, b_total), jnp.float32),
        grid=(n_tiles,),
        in_specs=[
            pl.BlockSpec((tb, z), lambda i: (i, 0)),          # x tile (batch rows)
            const_spec(params["w1"].shape),
            const_spec(params["w2"].shape),
            const_spec(params["w3"].shape),
            const_spec(params["w4"].shape),
            const_spec(params["consts"].shape),
        ],
        out_specs=pl.BlockSpec((1, tb), lambda i: (0, i)),    # lane-dense sigmoid row
        compiler_params=pltpu.CompilerParams(
            dimension_semantics=("parallel",),
            vmem_limit_bytes=_vmem_limit_bytes(z, dim_h, tb)),
        cost_estimate=pl.CostEstimate(flops=flops, transcendentals=b_total,
                                      bytes_accessed=bytes_accessed),
    )(xb,
      params["w1"], params["w2"], params["w3"], params["w4"],
      params["consts"])

    return out[0, :B].reshape(B, 1)


def init_params(key, z_size=128, dim_h=512, std=0.0099999):
    """Matches the torch init: weight ~ N(0, 0.0099999), bias = 0.
    Hidden weights kept in PyTorch (out, in) layout as bf16 (MXU native).
    All tiny constants are packed into ONE (dim_h, 8) f32 array `consts`:
        consts[:, i]  = bias of hidden layer i+1  (i = 0..3)
        consts[:, 4]  = final 512->1 weight column
        consts[0, 5]  = final layer bias
    """
    ks = jax.random.split(key, 5)
    dims = [(dim_h, z_size), (dim_h, dim_h), (dim_h, dim_h), (dim_h, dim_h), (1, dim_h)]
    ws = [(std * jax.random.normal(k, d)).astype(jnp.float32) for k, d in zip(ks, dims)]

    params = {f"w{i}": ws[i - 1].astype(jnp.bfloat16) for i in range(1, 5)}
    consts = jnp.zeros((dim_h, 8), jnp.float32)            # biases are zero at init
    consts = consts.at[:, 4].set(ws[4].reshape(dim_h))     # final weight column (f32)
    params["consts"] = consts
    return params


def reference_forward(x, params):
    """Pure-JAX f32 reference (weights upcast from their stored dtype)."""
    c = params["consts"]
    h = x
    for i in range(4):
        w = params[f"w{i + 1}"].astype(jnp.float32)        # (out, in)
        h = jnp.maximum(h @ w.T + c[:, i][None, :], 0.0)
    logits = h @ c[:, 4:5] + c[0, 5]
    return jax.nn.sigmoid(logits)


if __name__ == "__main__":
    key = jax.random.PRNGKey(0)
    k_param, k_x1, k_x2 = jax.random.split(key, 3)

    z_size, dim_h = 128, 512
    params = init_params(k_param, z_size=z_size, dim_h=dim_h)

    # Small batch: padded to 128 lanes inside the wrapper, single tile, no split.
    x_small = jax.random.normal(k_x1, (8, z_size), dtype=jnp.float32)
    out_small = jax.block_until_ready(wae_discriminator(x_small, params))
    ref_small = reference_forward(x_small, params)
    assert out_small.shape == (8, 1)
    assert jnp.allclose(out_small, ref_small, atol=2e-3)

    # Larger batch: 2-way lane split per tile, multi-step (even) grid, batch padding.
    x_big = jax.random.normal(k_x2, (300, z_size), dtype=jnp.float32)
    out_big = jax.block_until_ready(wae_discriminator(x_big, params, tile_b=256))
    ref_big = reference_forward(x_big, params)
    assert out_big.shape == (300, 1)
    assert jnp.allclose(out_big, ref_big, atol=2e-3)

    print("KERNEL_OK")
</pallas_src>

<mosaic_0001>
module attributes {stable_mosaic.version = 11 : i64} {
  func.func @wae_disc_kernel(%arg0: i32, %arg1: memref<128x128xbf16, #tpu.memory_space<vmem>>, %arg2: memref<512x128xbf16, #tpu.memory_space<vmem>>, %arg3: memref<512x512xbf16, #tpu.memory_space<vmem>>, %arg4: memref<512x512xbf16, #tpu.memory_space<vmem>>, %arg5: memref<512x512xbf16, #tpu.memory_space<vmem>>, %arg6: memref<512x8xf32, #tpu.memory_space<vmem>>, %arg7: memref<1x128xf32, #tpu.memory_space<vmem>>) attributes {dimension_semantics = [#tpu.dimension_semantics<parallel>], iteration_bounds = array<i64: 1>, scalar_prefetch = 0 : i64, scratch_operands = 0 : i64, tpu.core_type = #tpu.core_type<tc>, window_params = [{transform_indices = @transform_0, window_bounds = array<i64: 128, 128>}, {pipeline_mode = #tpu.pipeline_mode<synchronous>, transform_indices = @transform_1, window_bounds = array<i64: 512, 128>}, {pipeline_mode = #tpu.pipeline_mode<synchronous>, transform_indices = @transform_2, window_bounds = array<i64: 512, 512>}, {pipeline_mode = #tpu.pipeline_mode<synchronous>, transform_indices = @transform_3, window_bounds = array<i64: 512, 512>}, {pipeline_mode = #tpu.pipeline_mode<synchronous>, transform_indices = @transform_4, window_bounds = array<i64: 512, 512>}, {pipeline_mode = #tpu.pipeline_mode<synchronous>, transform_indices = @transform_5, window_bounds = array<i64: 512, 8>}, {transform_indices = @transform_6, window_bounds = array<i64: 1, 128>}]} {
    %c0 = arith.constant 0 : index
    %c0_0 = arith.constant 0 : index
    %0 = vector.load %arg6[%c0, %c0_0] : memref<512x8xf32, #tpu.memory_space<vmem>>, vector<512x1xf32>
    %c0_1 = arith.constant 0 : index
    %c1 = arith.constant 1 : index
    %1 = vector.load %arg6[%c0_1, %c1] : memref<512x8xf32, #tpu.memory_space<vmem>>, vector<512x1xf32>
    %c0_2 = arith.constant 0 : index
    %c2 = arith.constant 2 : index
    %2 = vector.load %arg6[%c0_2, %c2] : memref<512x8xf32, #tpu.memory_space<vmem>>, vector<512x1xf32>
    %c0_3 = arith.constant 0 : index
    %c3 = arith.constant 3 : index
    %3 = vector.load %arg6[%c0_3, %c3] : memref<512x8xf32, #tpu.memory_space<vmem>>, vector<512x1xf32>
    %c0_4 = arith.constant 0 : index
    %c4 = arith.constant 4 : index
    %4 = vector.load %arg6[%c0_4, %c4] : memref<512x8xf32, #tpu.memory_space<vmem>>, vector<512x1xf32>
    %c0_5 = arith.constant 0 : index
    %c5 = arith.constant 5 : index
    %5 = vector.load %arg6[%c0_5, %c5] : memref<512x8xf32, #tpu.memory_space<vmem>>, vector<1x1xf32>
    %c0_6 = arith.constant 0 : index
    %c0_7 = arith.constant 0 : index
    %6 = vector.load %arg1[%c0_6, %c0_7] : memref<128x128xbf16, #tpu.memory_space<vmem>>, vector<128x128xbf16>
    %c0_8 = arith.constant 0 : index
    %c0_9 = arith.constant 0 : index
    %7 = vector.load %arg2[%c0_8, %c0_9] : memref<512x128xbf16, #tpu.memory_space<vmem>>, vector<512x128xbf16>
    %cst = arith.constant dense<0.000000e+00> : vector<512x128xf32>
    %8 = tpu.matmul %7, %6, %cst {dimension_numbers = #tpu.dot_dimension_numbers<[1], [1], [0], [0], [0, 0, 1, 0], [], []>} : vector<512x128xbf16>, vector<128x128xbf16>, vector<512x128xf32> -> vector<512x128xf32>
    %9 = vector.broadcast %0 : vector<512x1xf32> to vector<512x128xf32>
    %10 = arith.addf %8, %9 : vector<512x128xf32>
    %cst_10 = arith.constant 0.000000e+00 : f32
    %11 = vector.broadcast %cst_10 : f32 to vector<512x128xf32>
    %12 = arith.maximumf %10, %11 : vector<512x128xf32>
    %13 = arith.truncf %12 : vector<512x128xf32> to vector<512x128xbf16>
    %c0_11 = arith.constant 0 : index
    %c0_12 = arith.constant 0 : index
    %14 = vector.load %arg3[%c0_11, %c0_12] : memref<512x512xbf16, #tpu.memory_space<vmem>>, vector<512x512xbf16>
    %cst_13 = arith.constant dense<0.000000e+00> : vector<512x128xf32>
    %15 = tpu.matmul %14, %13, %cst_13 {dimension_numbers = #tpu.dot_dimension_numbers<[1], [0], [0], [1], [0, 0, 1, 1], [], []>} : vector<512x512xbf16>, vector<512x128xbf16>, vector<512x128xf32> -> vector<512x128xf32>
    %16 = vector.broadcast %1 : vector<512x1xf32> to vector<512x128xf32>
    %17 = arith.addf %15, %16 : vector<512x128xf32>
    %cst_14 = arith.constant 0.000000e+00 : f32
    %18 = vector.broadcast %cst_14 : f32 to vector<512x128xf32>
    %19 = arith.maximumf %17, %18 : vector<512x128xf32>
    %20 = arith.truncf %19 : vector<512x128xf32> to vector<512x128xbf16>
    %c0_15 = arith.constant 0 : index
    %c0_16 = arith.constant 0 : index
    %21 = vector.load %arg4[%c0_15, %c0_16] : memref<512x512xbf16, #tpu.memory_space<vmem>>, vector<512x512xbf16>
    %cst_17 = arith.constant dense<0.000000e+00> : vector<512x128xf32>
    %22 = tpu.matmul %21, %20, %cst_17 {dimension_numbers = #tpu.dot_dimension_numbers<[1], [0], [0], [1], [0, 0, 1, 1], [], []>} : vector<512x512xbf16>, vector<512x128xbf16>, vector<512x128xf32> -> vector<512x128xf32>
    %23 = vector.broadcast %2 : vector<512x1xf32> to vector<512x128xf32>
    %24 = arith.addf %22, %23 : vector<512x128xf32>
    %cst_18 = arith.constant 0.000000e+00 : f32
    %25 = vector.broadcast %cst_18 : f32 to vector<512x128xf32>
    %26 = arith.maximumf %24, %25 : vector<512x128xf32>
    %27 = arith.truncf %26 : vector<512x128xf32> to vector<512x128xbf16>
    %c0_19 = arith.constant 0 : index
    %c0_20 = arith.constant 0 : index
    %28 = vector.load %arg5[%c0_19, %c0_20] : memref<512x512xbf16, #tpu.memory_space<vmem>>, vector<512x512xbf16>
    %cst_21 = arith.constant dense<0.000000e+00> : vector<512x128xf32>
    %29 = tpu.matmul %28, %27, %cst_21 {dimension_numbers = #tpu.dot_dimension_numbers<[1], [0], [0], [1], [0, 0, 1, 1], [], []>} : vector<512x512xbf16>, vector<512x128xbf16>, vector<512x128xf32> -> vector<512x128xf32>
    %30 = vector.broadcast %3 : vector<512x1xf32> to vector<512x128xf32>
    %31 = arith.addf %29, %30 : vector<512x128xf32>
    %cst_22 = arith.constant 0.000000e+00 : f32
    %32 = vector.broadcast %cst_22 : f32 to vector<512x128xf32>
    %33 = arith.maximumf %31, %32 : vector<512x128xf32>
    %34 = arith.truncf %33 : vector<512x128xf32> to vector<512x128xbf16>
    %35 = arith.extf %34 : vector<512x128xbf16> to vector<512x128xf32>
    %36 = vector.broadcast %4 : vector<512x1xf32> to vector<512x128xf32>
    %37 = arith.mulf %35, %36 : vector<512x128xf32>
    %cst_23 = arith.constant dense<0.000000e+00> : vector<128xf32>
    %38 = vector.multi_reduction <add>, %37, %cst_23 [0] : vector<512x128xf32> to vector<128xf32>
    %39 = vector.shape_cast %38 : vector<128xf32> to vector<1x128xf32>
    %40 = vector.broadcast %5 : vector<1x1xf32> to vector<1x128xf32>
    %41 = arith.addf %39, %40 : vector<1x128xf32>
    %42 = arith.negf %41 : vector<1x128xf32>
    %43 = math.exp %42 : vector<1x128xf32>
    %cst_24 = arith.constant 1.000000e+00 : f32
    %44 = vector.broadcast %cst_24 : f32 to vector<1x128xf32>
    %45 = arith.addf %44, %43 : vector<1x128xf32>
    %46 = arith.divf %44, %45 : vector<1x128xf32>
    %c0_25 = arith.constant 0 : index
    %c0_26 = arith.constant 0 : index
    %47 = vector.load %arg7[%c0_25, %c0_26] : memref<1x128xf32, #tpu.memory_space<vmem>>, vector<1x128xf32>
    tpu.vector_store %arg7[%c0_25, %c0_26], %46 {strides = array<i32>} : memref<1x128xf32, #tpu.memory_space<vmem>>, vector<1x128xf32>,
    return
  }
  func.func @transform_0(%arg0: i32) -> (i32, i32) {
    %c0_i32 = arith.constant 0 : i32
    %c0_i32_0 = arith.constant 0 : i32
    return %arg0, %c0_i32 : i32, i32
  }
  func.func @transform_1(%arg0: i32) -> (i32, i32) {
    %c0_i32 = arith.constant 0 : i32
    %c0_i32_0 = arith.constant 0 : i32
    %c0_i32_1 = arith.constant 0 : i32
    return %c0_i32, %c0_i32_0 : i32, i32
  }
  func.func @transform_2(%arg0: i32) -> (i32, i32) {
    %c0_i32 = arith.constant 0 : i32
    %c0_i32_0 = arith.constant 0 : i32
    %c0_i32_1 = arith.constant 0 : i32
    return %c0_i32, %c0_i32_0 : i32, i32
  }
  func.func @transform_3(%arg0: i32) -> (i32, i32) {
    %c0_i32 = arith.constant 0 : i32
    %c0_i32_0 = arith.constant 0 : i32
    %c0_i32_1 = arith.constant 0 : i32
    return %c0_i32, %c0_i32_0 : i32, i32
  }
  func.func @transform_4(%arg0: i32) -> (i32, i32) {
    %c0_i32 = arith.constant 0 : i32
    %c0_i32_0 = arith.constant 0 : i32
    %c0_i32_1 = arith.constant 0 : i32
    return %c0_i32, %c0_i32_0 : i32, i32
  }
  func.func @transform_5(%arg0: i32) -> (i32, i32) {
    %c0_i32 = arith.constant 0 : i32
    %c0_i32_0 = arith.constant 0 : i32
    %c0_i32_1 = arith.constant 0 : i32
    return %c0_i32, %c0_i32_0 : i32, i32
  }
  func.func @transform_6(%arg0: i32) -> (i32, i32) {
    %c0_i32 = arith.constant 0 : i32
    %c0_i32_0 = arith.constant 0 : i32
    return %c0_i32, %arg0 : i32, i32
  }
}

</mosaic_0001>

<llo_original>
// kernel: tpu_custom_call.1
$region0: #{tpu_custom_call.1}
  #allocation0 [shape = 'u32[]', space=smem, size = 0x4, offset = 0x4, fixed_abs, tag = 'smem constant byte address 0x4 - core index']
  #allocation1 [shape = 'u32[144,128]{1,0:T(1,128)}', space=vmem, size = 0x12000, scoped, tag = 'internal scratch']
  %s0 = inlined_call_operand.vmem [shape: bf16[128,128], index: 0, kind: input, shape index: {}]
  %s1 = inlined_call_operand.vmem [shape: bf16[512,128], index: 1, kind: input, shape index: {}]
  %s2 = inlined_call_operand.hbm [shape: bf16[512,512], index: 2, kind: input, shape index: {}]
  %s3 = inlined_call_operand.hbm [shape: bf16[512,512], index: 3, kind: input, shape index: {}]
  %s4 = inlined_call_operand.hbm [shape: bf16[512,512], index: 4, kind: input, shape index: {}]
  %s5 = inlined_call_operand.vmem [shape: f32[512,8], index: 5, kind: input, shape index: {}]
  %s6 = inlined_call_operand.hbm [shape: f32[1,128], index: 6, kind: output, shape index: {}]
  %s7 = sld [smem:[#allocation0]]
  $region46: #{tpu_custom_call.1} parent=0
    _
  %s9 = ssub.s32 1, %s7
  %s10 = scalar_select 0, %s9, %s7
  $region1: #{tpu_custom_call.1} parent=0
    #allocation2 [shape = 'u8[524288]{0}', space=vmem, size = 0x80000, scoped, tag = 'input window, operand 2, single buffered']
    #allocation3 [shape = 's32[1]{0}', space=sflag, size = 0x4, scoped, tag = 'scoped memory for tpu_custom_call.1']
    #allocation4 [shape = 's32[1]{0}', space=sflag, size = 0x4, scoped, tag = 'scoped memory for tpu_custom_call.1']
    #allocation5 [shape = 'u8[524288]{0}', space=vmem, size = 0x80000, scoped, tag = 'input window, operand 3, single buffered']
    #allocation6 [shape = 's32[1]{0}', space=sflag, size = 0x4, scoped, tag = 'scoped memory for tpu_custom_call.1']
    #allocation7 [shape = 'u8[524288]{0}', space=vmem, size = 0x80000, scoped, tag = 'input window, operand 4, single buffered']
    #allocation8 [shape = 'u8[512]{0}', space=vmem, size = 0x400, scoped, tag = 'output window, operand 0, single buffered']
    %11 = vsyncpa [#allocation3], 0
    %12 = vsyncpa [#allocation6], 0
    %13 = vsyncpa [#allocation4], 0
    // Predicated region
    $region2: #{tpu_custom_call.1} parent=1 // pred_check
      _
    $region3: #{tpu_custom_call.1} parent=1 // pred_check_branch
      %15 = sbr.rel (0) target = $region5
    $region4: #{tpu_custom_call.1} parent=1 // pred_region
      _
    $region5: #{tpu_custom_call.1} parent=1 // pred_fallthru
      _
    // Predicated region
    $region6: #{tpu_custom_call.1} parent=1 // pred_check
      _
    $region7: #{tpu_custom_call.1} parent=1 // pred_check_branch
      %17 = sbr.rel (0) target = $region9
    $region8: #{tpu_custom_call.1} parent=1 // pred_region
      _
    $region9: #{tpu_custom_call.1} parent=1 // pred_fallthru
      _
    // Predicated region
    $region10: #{tpu_custom_call.1} parent=1 // pred_check
      _
    $region11: #{tpu_custom_call.1} parent=1 // pred_check_branch
      %19 = sbr.rel (0) target = $region13
    $region12: #{tpu_custom_call.1} parent=1 // pred_region
      %s21 = ssub.s32 16384, 16384
      %22 = vsyncadd [#allocation3], %s21
      %s23 = sshll.u32 [#allocation2], 4
      %s24 = int_to_ptr.vmem [resolvable:$true] %s23
      %29 = dma.hbm_to_vmem [thread:$0]  %s2, 16384, %s24, [#allocation3], 256, 256, 16
    $region13: #{tpu_custom_call.1} parent=1 // pred_fallthru
      _
    // Predicated region
    $region14: #{tpu_custom_call.1} parent=1 // pred_check
      _
    $region15: #{tpu_custom_call.1} parent=1 // pred_check_branch
      %31 = sbr.rel (0) target = $region17
    $region16: #{tpu_custom_call.1} parent=1 // pred_region
      %s33 = ssub.s32 16384, 16384
      %34 = vsyncadd [#allocation6], %s33
      %s35 = sshll.u32 [#allocation5], 4
      %s36 = int_to_ptr.vmem [resolvable:$true] %s35
      %41 = dma.hbm_to_vmem [thread:$0]  %s3, 16384, %s36, [#allocation6], 256, 256, 16
    $region17: #{tpu_custom_call.1} parent=1 // pred_fallthru
      _
    // Predicated region
    $region18: #{tpu_custom_call.1} parent=1 // pred_check
      _
    $region19: #{tpu_custom_call.1} parent=1 // pred_check_branch
      %43 = sbr.rel (0) target = $region21
    $region20: #{tpu_custom_call.1} parent=1 // pred_region
      %s45 = ssub.s32 16384, 16384
      %46 = vsyncadd [#allocation6], %s45
      %s47 = sshll.u32 [#allocation7], 4
      %s48 = int_to_ptr.vmem [resolvable:$true] %s47
      %53 = dma.hbm_to_vmem [thread:$0]  %s4, 16384, %s48, [#allocation6], 256, 256, 16
    $region21: #{tpu_custom_call.1} parent=1 // pred_fallthru
      _
    // Predicated region
    $region22: #{tpu_custom_call.1} parent=1 // pred_check
      _
    $region23: #{tpu_custom_call.1} parent=1 // pred_check_branch
      %55 = sbr.rel (0) target = $region25
    $region24: #{tpu_custom_call.1} parent=1 // pred_region
      _
    $region25: #{tpu_custom_call.1} parent=1 // pred_fallthru
      _
    // Predicated region
    $region26: #{tpu_custom_call.1} parent=1 // pred_check
      _
    $region27: #{tpu_custom_call.1} parent=1 // pred_check_branch
      %57 = sbr.rel (0) target = $region29
    $region28: #{tpu_custom_call.1} parent=1 // pred_region
      %58 = dma.done [#allocation3], 16384
    $region29: #{tpu_custom_call.1} parent=1 // pred_fallthru
      _
    // Predicated region
    $region30: #{tpu_custom_call.1} parent=1 // pred_check
      _
    $region31: #{tpu_custom_call.1} parent=1 // pred_check_branch
      %60 = sbr.rel (0) target = $region33
    $region32: #{tpu_custom_call.1} parent=1 // pred_region
      %61 = dma.done [#allocation6], 16384
    $region33: #{tpu_custom_call.1} parent=1 // pred_fallthru
      _
    // Predicated region
    $region34: #{tpu_custom_call.1} parent=1 // pred_check
      _
    $region35: #{tpu_custom_call.1} parent=1 // pred_check_branch
      %63 = sbr.rel (0) target = $region37
    $region36: #{tpu_custom_call.1} parent=1 // pred_region
      %64 = dma.done [#allocation6], 16384
    $region37: #{tpu_custom_call.1} parent=1 // pred_fallthru
      _
    %v66 = vld [vmem:[%s5] sm:$0xff]
    %v67 = vld [vmem:[%s5 + $0x8] sm:$0xff]
    %v68 = vld [vmem:[%s5 + $0x10] sm:$0xff]
    %v69 = vld [vmem:[%s5 + $0x18] sm:$0xff]
    %v70 = vld [vmem:[%s5 + $0x20] sm:$0xff]
    %v71 = vld [vmem:[%s5 + $0x28] sm:$0xff]
    %v72 = vld [vmem:[%s5 + $0x30] sm:$0xff]
    %v73 = vld [vmem:[%s5 + $0x38] sm:$0xff]
    %v74 = vld [vmem:[%s5 + $0x40] sm:$0xff]
    %v75 = vld [vmem:[%s5 + $0x48] sm:$0xff]
    %v76 = vld [vmem:[%s5 + $0x50] sm:$0xff]
    %v77 = vld [vmem:[%s5 + $0x58] sm:$0xff]
    %v78 = vld [vmem:[%s5 + $0x60] sm:$0xff]
    %v79 = vld [vmem:[%s5 + $0x68] sm:$0xff]
    %v80 = vld [vmem:[%s5 + $0x70] sm:$0xff]
    %v81 = vld [vmem:[%s5 + $0x78] sm:$0xff]
    %v82 = vld [vmem:[%s5 + $0x80] sm:$0xff]
    %v83 = vld [vmem:[%s5 + $0x88] sm:$0xff]
    %v84 = vld [vmem:[%s5 + $0x90] sm:$0xff]
    %v85 = vld [vmem:[%s5 + $0x98] sm:$0xff]
    %v86 = vld [vmem:[%s5 + $0xa0] sm:$0xff]
    %v87 = vld [vmem:[%s5 + $0xa8] sm:$0xff]
    %v88 = vld [vmem:[%s5 + $0xb0] sm:$0xff]
    %v89 = vld [vmem:[%s5 + $0xb8] sm:$0xff]
    %v90 = vld [vmem:[%s5 + $0xc0] sm:$0xff]
    %v91 = vld [vmem:[%s5 + $0xc8] sm:$0xff]
    %v92 = vld [vmem:[%s5 + $0xd0] sm:$0xff]
    %v93 = vld [vmem:[%s5 + $0xd8] sm:$0xff]
    %v94 = vld [vmem:[%s5 + $0xe0] sm:$0xff]
    %v95 = vld [vmem:[%s5 + $0xe8] sm:$0xff]
    %v96 = vld [vmem:[%s5 + $0xf0] sm:$0xff]
    %v97 = vld [vmem:[%s5 + $0xf8] sm:$0xff]
    %v98 = vld [vmem:[%s5 + $0x100] sm:$0xff]
    %v99 = vld [vmem:[%s5 + $0x108] sm:$0xff]
    %v100 = vld [vmem:[%s5 + $0x110] sm:$0xff]
    %v101 = vld [vmem:[%s5 + $0x118] sm:$0xff]
    %v102 = vld [vmem:[%s5 + $0x120] sm:$0xff]
    %v103 = vld [vmem:[%s5 + $0x128] sm:$0xff]
    %v104 = vld [vmem:[%s5 + $0x130] sm:$0xff]
    %v105 = vld [vmem:[%s5 + $0x138] sm:$0xff]
    %v106 = vld [vmem:[%s5 + $0x140] sm:$0xff]
    %v107 = vld [vmem:[%s5 + $0x148] sm:$0xff]
    %v108 = vld [vmem:[%s5 + $0x150] sm:$0xff]
    %v109 = vld [vmem:[%s5 + $0x158] sm:$0xff]
    %v110 = vld [vmem:[%s5 + $0x160] sm:$0xff]
    %v111 = vld [vmem:[%s5 + $0x168] sm:$0xff]
    %v112 = vld [vmem:[%s5 + $0x170] sm:$0xff]
    %v113 = vld [vmem:[%s5 + $0x178] sm:$0xff]
    %v114 = vld [vmem:[%s5 + $0x180] sm:$0xff]
    %v115 = vld [vmem:[%s5 + $0x188] sm:$0xff]
    %v116 = vld [vmem:[%s5 + $0x190] sm:$0xff]
    %v117 = vld [vmem:[%s5 + $0x198] sm:$0xff]
    %v118 = vld [vmem:[%s5 + $0x1a0] sm:$0xff]
    %v119 = vld [vmem:[%s5 + $0x1a8] sm:$0xff]
    %v120 = vld [vmem:[%s5 + $0x1b0] sm:$0xff]
    %v121 = vld [vmem:[%s5 + $0x1b8] sm:$0xff]
    %v122 = vld [vmem:[%s5 + $0x1c0] sm:$0xff]
    %v123 = vld [vmem:[%s5 + $0x1c8] sm:$0xff]
    %v124 = vld [vmem:[%s5 + $0x1d0] sm:$0xff]
    %v125 = vld [vmem:[%s5 + $0x1d8] sm:$0xff]
    %v126 = vld [vmem:[%s5 + $0x1e0] sm:$0xff]
    %v127 = vld [vmem:[%s5 + $0x1e8] sm:$0xff]
    %v128 = vld [vmem:[%s5 + $0x1f0] sm:$0xff]
    %v129 = vld [vmem:[%s5 + $0x1f8] sm:$0xff]
    %v130 = vld [vmem:[%s5] sm:$0x1]
    %v131 = vld [vmem:[%s0] sm:$0xf]
    %v132 = vld [vmem:[%s0 + $0x4] sm:$0xf]
    %v133 = vld [vmem:[%s0 + $0x8] sm:$0xf]
    %v134 = vld [vmem:[%s0 + $0xc] sm:$0xf]
    %v135 = vld [vmem:[%s0 + $0x10] sm:$0xf]
    %v136 = vld [vmem:[%s0 + $0x14] sm:$0xf]
    %v137 = vld [vmem:[%s0 + $0x18] sm:$0xf]
    %v138 = vld [vmem:[%s0 + $0x1c] sm:$0xf]
    %v139 = vld [vmem:[%s0 + $0x20] sm:$0xf]
    %v140 = vld [vmem:[%s0 + $0x24] sm:$0xf]
    %v141 = vld [vmem:[%s0 + $0x28] sm:$0xf]
    %v142 = vld [vmem:[%s0 + $0x2c] sm:$0xf]
    %v143 = vld [vmem:[%s0 + $0x30] sm:$0xf]
    %v144 = vld [vmem:[%s0 + $0x34] sm:$0xf]
    %v145 = vld [vmem:[%s0 + $0x38] sm:$0xf]
    %v146 = vld [vmem:[%s0 + $0x3c] sm:$0xf]
    %v147 = vld [vmem:[%s1] sm:$0xf]
    %v148 = vld [vmem:[%s1 + $0x4] sm:$0xf]
    %v149 = vld [vmem:[%s1 + $0x8] sm:$0xf]
    %v150 = vld [vmem:[%s1 + $0xc] sm:$0xf]
    %v151 = vld [vmem:[%s1 + $0x10] sm:$0xf]
    %v152 = vld [vmem:[%s1 + $0x14] sm:$0xf]
    %v153 = vld [vmem:[%s1 + $0x18] sm:$0xf]
    %v154 = vld [vmem:[%s1 + $0x1c] sm:$0xf]
    %v155 = vld [vmem:[%s1 + $0x20] sm:$0xf]
    %v156 = vld [vmem:[%s1 + $0x24] sm:$0xf]
    %v157 = vld [vmem:[%s1 + $0x28] sm:$0xf]
    %v158 = vld [vmem:[%s1 + $0x2c] sm:$0xf]
    %v159 = vld [vmem:[%s1 + $0x30] sm:$0xf]
    %v160 = vld [vmem:[%s1 + $0x34] sm:$0xf]
    %v161 = vld [vmem:[%s1 + $0x38] sm:$0xf]
    %v162 = vld [vmem:[%s1 + $0x3c] sm:$0xf]
    %v163 = vld [vmem:[%s1 + $0x40] sm:$0xf]
    %v164 = vld [vmem:[%s1 + $0x44] sm:$0xf]
    %v165 = vld [vmem:[%s1 + $0x48] sm:$0xf]
    %v166 = vld [vmem:[%s1 + $0x4c] sm:$0xf]
    %v167 = vld [vmem:[%s1 + $0x50] sm:$0xf]
    %v168 = vld [vmem:[%s1 + $0x54] sm:$0xf]
    %v169 = vld [vmem:[%s1 + $0x58] sm:$0xf]
    %v170 = vld [vmem:[%s1 + $0x5c] sm:$0xf]
    %v171 = vld [vmem:[%s1 + $0x60] sm:$0xf]
    %v172 = vld [vmem:[%s1 + $0x64] sm:$0xf]
    %v173 = vld [vmem:[%s1 + $0x68] sm:$0xf]
    %v174 = vld [vmem:[%s1 + $0x6c] sm:$0xf]
    %v175 = vld [vmem:[%s1 + $0x70] sm:$0xf]
    %v176 = vld [vmem:[%s1 + $0x74] sm:$0xf]
    %v177 = vld [vmem:[%s1 + $0x78] sm:$0xf]
    %v178 = vld [vmem:[%s1 + $0x7c] sm:$0xf]
    %v179 = vld [vmem:[%s1 + $0x80] sm:$0xf]
    %v180 = vld [vmem:[%s1 + $0x84] sm:$0xf]
    %v181 = vld [vmem:[%s1 + $0x88] sm:$0xf]
    %v182 = vld [vmem:[%s1 + $0x8c] sm:$0xf]
    %v183 = vld [vmem:[%s1 + $0x90] sm:$0xf]
    %v184 = vld [vmem:[%s1 + $0x94] sm:$0xf]
    %v185 = vld [vmem:[%s1 + $0x98] sm:$0xf]
    %v186 = vld [vmem:[%s1 + $0x9c] sm:$0xf]
    %v187 = vld [vmem:[%s1 + $0xa0] sm:$0xf]
    %v188 = vld [vmem:[%s1 + $0xa4] sm:$0xf]
    %v189 = vld [vmem:[%s1 + $0xa8] sm:$0xf]
    %v190 = vld [vmem:[%s1 + $0xac] sm:$0xf]
    %v191 = vld [vmem:[%s1 + $0xb0] sm:$0xf]
    %v192 = vld [vmem:[%s1 + $0xb4] sm:$0xf]
    %v193 = vld [vmem:[%s1 + $0xb8] sm:$0xf]
    %v194 = vld [vmem:[%s1 + $0xbc] sm:$0xf]
    %v195 = vld [vmem:[%s1 + $0xc0] sm:$0xf]
    %v196 = vld [vmem:[%s1 + $0xc4] sm:$0xf]
    %v197 = vld [vmem:[%s1 + $0xc8] sm:$0xf]
    %v198 = vld [vmem:[%s1 + $0xcc] sm:$0xf]
    %v199 = vld [vmem:[%s1 + $0xd0] sm:$0xf]
    %v200 = vld [vmem:[%s1 + $0xd4] sm:$0xf]
    %v201 = vld [vmem:[%s1 + $0xd8] sm:$0xf]
    %v202 = vld [vmem:[%s1 + $0xdc] sm:$0xf]
    %v203 = vld [vmem:[%s1 + $0xe0] sm:$0xf]
    %v204 = vld [vmem:[%s1 + $0xe4] sm:$0xf]
    %v205 = vld [vmem:[%s1 + $0xe8] sm:$0xf]
    %v206 = vld [vmem:[%s1 + $0xec] sm:$0xf]
    %v207 = vld [vmem:[%s1 + $0xf0] sm:$0xf]
    %v208 = vld [vmem:[%s1 + $0xf4] sm:$0xf]
    %v209 = vld [vmem:[%s1 + $0xf8] sm:$0xf]
    %v210 = vld [vmem:[%s1 + $0xfc] sm:$0xf]
    %212 = vset.pattern.permute.xlu0 0
    %213 = vperm.xlu0 %212, %v66
    %v214 = vpop.permute.xlu0 %213
    %217 = vset.pattern.permute.xlu0 0
    %218 = vperm.xlu0 %217, %v67
    %v219 = vpop.permute.xlu0 %218
    %222 = vset.pattern.permute.xlu0 0
    %223 = vperm.xlu0 %222, %v68
    %v224 = vpop.permute.xlu0 %223
    %227 = vset.pattern.permute.xlu0 0
    %228 = vperm.xlu0 %227, %v69
    %v229 = vpop.permute.xlu0 %228
    %232 = vset.pattern.permute.xlu0 0
    %233 = vperm.xlu0 %232, %v70
    %v234 = vpop.permute.xlu0 %233
    %237 = vset.pattern.permute.xlu0 0
    %238 = vperm.xlu0 %237, %v71
    %v239 = vpop.permute.xlu0 %238
    %242 = vset.pattern.permute.xlu0 0
    %243 = vperm.xlu0 %242, %v72
    %v244 = vpop.permute.xlu0 %243
    %247 = vset.pattern.permute.xlu0 0
    %248 = vperm.xlu0 %247, %v73
    %v249 = vpop.permute.xlu0 %248
    %252 = vset.pattern.permute.xlu0 0
    %253 = vperm.xlu0 %252, %v74
    %v254 = vpop.permute.xlu0 %253
    %257 = vset.pattern.permute.xlu0 0
    %258 = vperm.xlu0 %257, %v75
    %v259 = vpop.permute.xlu0 %258
    %262 = vset.pattern.permute.xlu0 0
    %263 = vperm.xlu0 %262, %v76
    %v264 = vpop.permute.xlu0 %263
    %267 = vset.pattern.permute.xlu0 0
    %268 = vperm.xlu0 %267, %v77
    %v269 = vpop.permute.xlu0 %268
    %272 = vset.pattern.permute.xlu0 0
    %273 = vperm.xlu0 %272, %v78
    %v274 = vpop.permute.xlu0 %273
    %277 = vset.pattern.permute.xlu0 0
    %278 = vperm.xlu0 %277, %v79
    %v279 = vpop.permute.xlu0 %278
    %282 = vset.pattern.permute.xlu0 0
    %283 = vperm.xlu0 %282, %v80
    %v284 = vpop.permute.xlu0 %283
    %287 = vset.pattern.permute.xlu0 0
    %288 = vperm.xlu0 %287, %v81
    %v289 = vpop.permute.xlu0 %288
    %292 = vset.pattern.permute.xlu0 0
    %293 = vperm.xlu0 %292, %v82
    %v294 = vpop.permute.xlu0 %293
    %297 = vset.pattern.permute.xlu0 0
    %298 = vperm.xlu0 %297, %v83
    %v299 = vpop.permute.xlu0 %298
    %302 = vset.pattern.permute.xlu0 0
    %303 = vperm.xlu0 %302, %v84
    %v304 = vpop.permute.xlu0 %303
    %307 = vset.pattern.permute.xlu0 0
    %308 = vperm.xlu0 %307, %v85
    %v309 = vpop.permute.xlu0 %308
    %312 = vset.pattern.permute.xlu0 0
    %313 = vperm.xlu0 %312, %v86
    %v314 = vpop.permute.xlu0 %313
    %317 = vset.pattern.permute.xlu0 0
    %318 = vperm.xlu0 %317, %v87
    %v319 = vpop.permute.xlu0 %318
    %322 = vset.pattern.permute.xlu0 0
    %323 = vperm.xlu0 %322, %v88
    %v324 = vpop.permute.xlu0 %323
    %327 = vset.pattern.permute.xlu0 0
    %328 = vperm.xlu0 %327, %v89
    %v329 = vpop.permute.xlu0 %328
    %332 = vset.pattern.permute.xlu0 0
    %333 = vperm.xlu0 %332, %v90
    %v334 = vpop.permute.xlu0 %333
    %337 = vset.pattern.permute.xlu0 0
    %338 = vperm.xlu0 %337, %v91
    %v339 = vpop.permute.xlu0 %338
    %342 = vset.pattern.permute.xlu0 0
    %343 = vperm.xlu0 %342, %v92
    %v344 = vpop.permute.xlu0 %343
    %347 = vset.pattern.permute.xlu0 0
    %348 = vperm.xlu0 %347, %v93
    %v349 = vpop.permute.xlu0 %348
    %352 = vset.pattern.permute.xlu0 0
    %353 = vperm.xlu0 %352, %v94
    %v354 = vpop.permute.xlu0 %353
    %357 = vset.pattern.permute.xlu0 0
    %358 = vperm.xlu0 %357, %v95
    %v359 = vpop.permute.xlu0 %358
    %362 = vset.pattern.permute.xlu0 0
    %363 = vperm.xlu0 %362, %v96
    %v364 = vpop.permute.xlu0 %363
    %367 = vset.pattern.permute.xlu0 0
    %368 = vperm.xlu0 %367, %v97
    %v369 = vpop.permute.xlu0 %368
    %372 = vset.pattern.permute.xlu0 0
    %373 = vperm.xlu0 %372, %v98
    %v374 = vpop.permute.xlu0 %373
    %377 = vset.pattern.permute.xlu0 0
    %378 = vperm.xlu0 %377, %v99
    %v379 = vpop.permute.xlu0 %378
    %382 = vset.pattern.permute.xlu0 0
    %383 = vperm.xlu0 %382, %v100
    %v384 = vpop.permute.xlu0 %383
    %387 = vset.pattern.permute.xlu0 0
    %388 = vperm.xlu0 %387, %v101
    %v389 = vpop.permute.xlu0 %388
    %392 = vset.pattern.permute.xlu0 0
    %393 = vperm.xlu0 %392, %v102
    %v394 = vpop.permute.xlu0 %393
    %397 = vset.pattern.permute.xlu0 0
    %398 = vperm.xlu0 %397, %v103
    %v399 = vpop.permute.xlu0 %398
    %402 = vset.pattern.permute.xlu0 0
    %403 = vperm.xlu0 %402, %v104
    %v404 = vpop.permute.xlu0 %403
    %407 = vset.pattern.permute.xlu0 0
    %408 = vperm.xlu0 %407, %v105
    %v409 = vpop.permute.xlu0 %408
    %412 = vset.pattern.permute.xlu0 0
    %413 = vperm.xlu0 %412, %v106
    %v414 = vpop.permute.xlu0 %413
    %417 = vset.pattern.permute.xlu0 0
    %418 = vperm.xlu0 %417, %v107
    %v419 = vpop.permute.xlu0 %418
    %422 = vset.pattern.permute.xlu0 0
    %423 = vperm.xlu0 %422, %v108
    %v424 = vpop.permute.xlu0 %423
    %427 = vset.pattern.permute.xlu0 0
    %428 = vperm.xlu0 %427, %v109
    %v429 = vpop.permute.xlu0 %428
    %432 = vset.pattern.permute.xlu0 0
    %433 = vperm.xlu0 %432, %v110
    %v434 = vpop.permute.xlu0 %433
    %437 = vset.pattern.permute.xlu0 0
    %438 = vperm.xlu0 %437, %v111
    %v439 = vpop.permute.xlu0 %438
    %442 = vset.pattern.permute.xlu0 0
    %443 = vperm.xlu0 %442, %v112
    %v444 = vpop.permute.xlu0 %443
    %447 = vset.pattern.permute.xlu0 0
    %448 = vperm.xlu0 %447, %v113
    %v449 = vpop.permute.xlu0 %448
    %452 = vset.pattern.permute.xlu0 0
    %453 = vperm.xlu0 %452, %v114
    %v454 = vpop.permute.xlu0 %453
    %457 = vset.pattern.permute.xlu0 0
    %458 = vperm.xlu0 %457, %v115
    %v459 = vpop.permute.xlu0 %458
    %462 = vset.pattern.permute.xlu0 0
    %463 = vperm.xlu0 %462, %v116
    %v464 = vpop.permute.xlu0 %463
    %467 = vset.pattern.permute.xlu0 0
    %468 = vperm.xlu0 %467, %v117
    %v469 = vpop.permute.xlu0 %468
    %472 = vset.pattern.permute.xlu0 0
    %473 = vperm.xlu0 %472, %v118
    %v474 = vpop.permute.xlu0 %473
    %477 = vset.pattern.permute.xlu0 0
    %478 = vperm.xlu0 %477, %v119
    %v479 = vpop.permute.xlu0 %478
    %482 = vset.pattern.permute.xlu0 0
    %483 = vperm.xlu0 %482, %v120
    %v484 = vpop.permute.xlu0 %483
    %487 = vset.pattern.permute.xlu0 0
    %488 = vperm.xlu0 %487, %v121
    %v489 = vpop.permute.xlu0 %488
    %492 = vset.pattern.permute.xlu0 0
    %493 = vperm.xlu0 %492, %v122
    %v494 = vpop.permute.xlu0 %493
    %497 = vset.pattern.permute.xlu0 0
    %498 = vperm.xlu0 %497, %v123
    %v499 = vpop.permute.xlu0 %498
    %502 = vset.pattern.permute.xlu0 0
    %503 = vperm.xlu0 %502, %v124
    %v504 = vpop.permute.xlu0 %503
    %507 = vset.pattern.permute.xlu0 0
    %508 = vperm.xlu0 %507, %v125
    %v509 = vpop.permute.xlu0 %508
    %512 = vset.pattern.permute.xlu0 0
    %513 = vperm.xlu0 %512, %v126
    %v514 = vpop.permute.xlu0 %513
    %517 = vset.pattern.permute.xlu0 0
    %518 = vperm.xlu0 %517, %v127
    %v519 = vpop.permute.xlu0 %518
    %522 = vset.pattern.permute.xlu0 0
    %523 = vperm.xlu0 %522, %v128
    %v524 = vpop.permute.xlu0 %523
    %527 = vset.pattern.permute.xlu0 0
    %528 = vperm.xlu0 %527, %v129
    %v529 = vpop.permute.xlu0 %528
    %v595 = vunpack.c.l.b16 %v147
    %v596 = vunpack.c.l.b16 %v148
    %v597 = vunpack.c.l.b16 %v149
    %v598 = vunpack.c.l.b16 %v150
    %v599 = vunpack.c.l.b16 %v151
    %v600 = vunpack.c.l.b16 %v152
    %v601 = vunpack.c.l.b16 %v153
    %v602 = vunpack.c.l.b16 %v154
    %v603 = vunpack.c.l.b16 %v155
    %v604 = vunpack.c.l.b16 %v156
    %v605 = vunpack.c.l.b16 %v157
    %v606 = vunpack.c.l.b16 %v158
    %v607 = vunpack.c.l.b16 %v159
    %v608 = vunpack.c.l.b16 %v160
    %v609 = vunpack.c.l.b16 %v161
    %v610 = vunpack.c.l.b16 %v162
    %v611 = vunpack.c.l.b16 %v163
    %v612 = vunpack.c.l.b16 %v164
    %v613 = vunpack.c.l.b16 %v165
    %v614 = vunpack.c.l.b16 %v166
    %v615 = vunpack.c.l.b16 %v167
    %v616 = vunpack.c.l.b16 %v168
    %v617 = vunpack.c.l.b16 %v169
    %v618 = vunpack.c.l.b16 %v170
    %v619 = vunpack.c.l.b16 %v171
    %v620 = vunpack.c.l.b16 %v172
    %v621 = vunpack.c.l.b16 %v173
    %v622 = vunpack.c.l.b16 %v174
    %v623 = vunpack.c.l.b16 %v175
    %v624 = vunpack.c.l.b16 %v176
    %v625 = vunpack.c.l.b16 %v177
    %v626 = vunpack.c.l.b16 %v178
    %v627 = vunpack.c.l.b16 %v179
    %v628 = vunpack.c.l.b16 %v180
    %v629 = vunpack.c.l.b16 %v181
    %v630 = vunpack.c.l.b16 %v182
    %v631 = vunpack.c.l.b16 %v183
    %v632 = vunpack.c.l.b16 %v184
    %v633 = vunpack.c.l.b16 %v185
    %v634 = vunpack.c.l.b16 %v186
    %v635 = vunpack.c.l.b16 %v187
    %v636 = vunpack.c.l.b16 %v188
    %v637 = vunpack.c.l.b16 %v189
    %v638 = vunpack.c.l.b16 %v190
    %v639 = vunpack.c.l.b16 %v191
    %v640 = vunpack.c.l.b16 %v192
    %v641 = vunpack.c.l.b16 %v193
    %v642 = vunpack.c.l.b16 %v194
    %v643 = vunpack.c.l.b16 %v195
    %v644 = vunpack.c.l.b16 %v196
    %v645 = vunpack.c.l.b16 %v197
    %v646 = vunpack.c.l.b16 %v198
    %v647 = vunpack.c.l.b16 %v199
    %v648 = vunpack.c.l.b16 %v200
    %v649 = vunpack.c.l.b16 %v201
    %v650 = vunpack.c.l.b16 %v202
    %v651 = vunpack.c.l.b16 %v203
    %v652 = vunpack.c.l.b16 %v204
    %v653 = vunpack.c.l.b16 %v205
    %v654 = vunpack.c.l.b16 %v206
    %v655 = vunpack.c.l.b16 %v207
    %v656 = vunpack.c.l.b16 %v208
    %v657 = vunpack.c.l.b16 %v209
    %v658 = vunpack.c.l.b16 %v210
    %v659 = vpack.c.b16 %v596, %v595
    %v660 = vpack.c.b16 %v598, %v597
    %v661 = vpack.c.b16 %v600, %v599
    %v662 = vpack.c.b16 %v602, %v601
    %v663 = vpack.c.b16 %v604, %v603
    %v664 = vpack.c.b16 %v606, %v605
    %v665 = vpack.c.b16 %v608, %v607
    %v666 = vpack.c.b16 %v610, %v609
    %v667 = vpack.c.b16 %v612, %v611
    %v668 = vpack.c.b16 %v614, %v613
    %v669 = vpack.c.b16 %v616, %v615
    %v670 = vpack.c.b16 %v618, %v617
    %v671 = vpack.c.b16 %v620, %v619
    %v672 = vpack.c.b16 %v622, %v621
    %v673 = vpack.c.b16 %v624, %v623
    %v674 = vpack.c.b16 %v626, %v625
    %v675 = vpack.c.b16 %v628, %v627
    %v676 = vpack.c.b16 %v630, %v629
    %v677 = vpack.c.b16 %v632, %v631
    %v678 = vpack.c.b16 %v634, %v633
    %v679 = vpack.c.b16 %v636, %v635
    %v680 = vpack.c.b16 %v638, %v637
    %v681 = vpack.c.b16 %v640, %v639
    %v682 = vpack.c.b16 %v642, %v641
    %v683 = vpack.c.b16 %v644, %v643
    %v684 = vpack.c.b16 %v646, %v645
    %v685 = vpack.c.b16 %v648, %v647
    %v686 = vpack.c.b16 %v650, %v649
    %v687 = vpack.c.b16 %v652, %v651
    %v688 = vpack.c.b16 %v654, %v653
    %v689 = vpack.c.b16 %v656, %v655
    %v690 = vpack.c.b16 %v658, %v657
    %v739 = vunpack.c.l.b16 %v131
    %v740 = vunpack.c.l.b16 %v132
    %v741 = vunpack.c.l.b16 %v133
    %v742 = vunpack.c.l.b16 %v134
    %v743 = vunpack.c.l.b16 %v135
    %v744 = vunpack.c.l.b16 %v136
    %v745 = vunpack.c.l.b16 %v137
    %v746 = vunpack.c.l.b16 %v138
    %v747 = vunpack.c.l.b16 %v139
    %v748 = vunpack.c.l.b16 %v140
    %v749 = vunpack.c.l.b16 %v141
    %v750 = vunpack.c.l.b16 %v142
    %v751 = vunpack.c.l.b16 %v143
    %v752 = vunpack.c.l.b16 %v144
    %v753 = vunpack.c.l.b16 %v145
    %v754 = vunpack.c.l.b16 %v146
    %v755 = vpack.c.b16 %v740, %v739
    %v756 = vpack.c.b16 %v742, %v741
    %v757 = vpack.c.b16 %v744, %v743
    %v758 = vpack.c.b16 %v746, %v745
    %v759 = vpack.c.b16 %v748, %v747
    %v760 = vpack.c.b16 %v750, %v749
    %v761 = vpack.c.b16 %v752, %v751
    %v762 = vpack.c.b16 %v754, %v753
    %771 = vmatprep.subr.bf16.mxu0 0
    %772 = vmatpush1.bf16.xpose.msra.mxu0 %v762
    %773 = vmatprep.subr.bf16.mxu0 0
    %774 = vmatpush1.bf16.xpose.msra.mxu0 %v761
    %775 = vmatprep.subr.bf16.mxu0 0
    %776 = vmatpush1.bf16.xpose.msra.mxu0 %v760
    %777 = vmatprep.subr.bf16.mxu0 0
    %778 = vmatpush1.bf16.xpose.msra.mxu0 %v759
    %779 = vmatprep.subr.bf16.mxu0 0
    %780 = vmatpush1.bf16.xpose.msra.mxu0 %v758
    %781 = vmatprep.subr.bf16.mxu0 0
    %782 = vmatpush1.bf16.xpose.msra.mxu0 %v757
    %783 = vmatprep.subr.bf16.mxu0 0
    %784 = vmatpush1.bf16.xpose.msra.mxu0 %v756
    %785 = vmatprep.subr.bf16.mxu0 0
    %786 = vmatpush1.bf16.xpose.msra.mxu0 %v755
    %787 = vmatprep.subr.bf16.mxu0 0
    %788 = vmatpush2.bf16.xpose.msra.mxu0 0
    %789 = vmatprep.subr.bf16.mxu0 0
    %790 = vmatpush2.bf16.xpose.msra.mxu0 0
    %791 = vmatprep.subr.bf16.mxu0 0
    %792 = vmatpush2.bf16.xpose.msra.mxu0 0
    %793 = vmatprep.subr.bf16.mxu0 0
    %794 = vmatpush2.bf16.xpose.msra.mxu0 0
    %795 = vmatprep.subr.bf16.mxu0 0
    %796 = vmatpush2.bf16.xpose.msra.mxu0 0
    %797 = vmatprep.subr.bf16.mxu0 0
    %798 = vmatpush2.bf16.xpose.msra.mxu0 0
    %799 = vmatprep.subr.bf16.mxu0 0
    %800 = vmatpush2.bf16.xpose.msra.mxu0 0
    %801 = vmatprep.subr.bf16.mxu0 0
    %802 = vmatpush2.bf16.xpose.msra.mxu0 0
    %803 = vmatprep.mubr.bf16.mxu0 0
    %804 = vmatmul.mubr.bf16.gmra.mxu0 %v659
    %v805 = vpop.f32.mrf.mxu0
    %v806 = vadd.f32 %v214, %v805
    %v807 = vpop.f32.mrf.mxu0
    %v808 = vpop.f32.mrf.mxu0
    %v809 = vadd.f32 %v219, %v808
    %v810 = vpop.f32.mrf.mxu0
    %811 = vmatprep.mubr.bf16.mxu0 0
    %812 = vmatmul.mubr.bf16.gmra.mxu0 %v660
    %v813 = vpop.f32.mrf.mxu0
    %v814 = vadd.f32 %v224, %v813
    %v815 = vpop.f32.mrf.mxu0
    %v816 = vpop.f32.mrf.mxu0
    %v817 = vadd.f32 %v229, %v816
    %v818 = vpop.f32.mrf.mxu0
    %819 = vmatprep.mubr.bf16.mxu0 0
    %820 = vmatmul.mubr.bf16.gmra.mxu0 %v661
    %v821 = vpop.f32.mrf.mxu0
    %v822 = vadd.f32 %v234, %v821
    %v823 = vpop.f32.mrf.mxu0
    %v824 = vpop.f32.mrf.mxu0
    %v825 = vadd.f32 %v239, %v824
    %v826 = vpop.f32.mrf.mxu0
    %827 = vmatprep.mubr.bf16.mxu0 0
    %828 = vmatmul.mubr.bf16.gmra.mxu0 %v662
    %v829 = vpop.f32.mrf.mxu0
    %v830 = vadd.f32 %v244, %v829
    %v831 = vpop.f32.mrf.mxu0
    %v832 = vpop.f32.mrf.mxu0
    %v833 = vadd.f32 %v249, %v832
    %v834 = vpop.f32.mrf.mxu0
    %835 = vmatprep.mubr.bf16.mxu0 0
    %836 = vmatmul.mubr.bf16.gmra.mxu0 %v663
    %v837 = vpop.f32.mrf.mxu0
    %v838 = vadd.f32 %v254, %v837
    %v839 = vpop.f32.mrf.mxu0
    %v840 = vpop.f32.mrf.mxu0
    %v841 = vadd.f32 %v259, %v840
    %v842 = vpop.f32.mrf.mxu0
    %843 = vmatprep.mubr.bf16.mxu0 0
    %844 = vmatmul.mubr.bf16.gmra.mxu0 %v664
    %v845 = vpop.f32.mrf.mxu0
    %v846 = vadd.f32 %v264, %v845
    %v847 = vpop.f32.mrf.mxu0
    %v848 = vpop.f32.mrf.mxu0
    %v849 = vadd.f32 %v269, %v848
    %v850 = vpop.f32.mrf.mxu0
    %851 = vmatprep.mubr.bf16.mxu0 0
    %852 = vmatmul.mubr.bf16.gmra.mxu0 %v665
    %v853 = vpop.f32.mrf.mxu0
    %v854 = vadd.f32 %v274, %v853
    %v855 = vpop.f32.mrf.mxu0
    %v856 = vpop.f32.mrf.mxu0
    %v857 = vadd.f32 %v279, %v856
    %v858 = vpop.f32.mrf.mxu0
    %859 = vmatprep.mubr.bf16.mxu0 0
    %860 = vmatmul.mubr.bf16.gmra.mxu0 %v666
    %v861 = vpop.f32.mrf.mxu0
    %v862 = vadd.f32 %v284, %v861
    %v863 = vpop.f32.mrf.mxu0
    %v864 = vpop.f32.mrf.mxu0
    %v865 = vadd.f32 %v289, %v864
    %v866 = vpop.f32.mrf.mxu0
    %867 = vmatprep.mubr.bf16.mxu0 0
    %868 = vmatmul.mubr.bf16.gmra.mxu0 %v667
    %v869 = vpop.f32.mrf.mxu0
    %v870 = vadd.f32 %v294, %v869
    %v871 = vpop.f32.mrf.mxu0
    %v872 = vpop.f32.mrf.mxu0
    %v873 = vadd.f32 %v299, %v872
    %v874 = vpop.f32.mrf.mxu0
    %875 = vmatprep.mubr.bf16.mxu0 0
    %876 = vmatmul.mubr.bf16.gmra.mxu0 %v668
    %v877 = vpop.f32.mrf.mxu0
    %v878 = vadd.f32 %v304, %v877
    %v879 = vpop.f32.mrf.mxu0
    %v880 = vpop.f32.mrf.mxu0
    %v881 = vadd.f32 %v309, %v880
    %v882 = vpop.f32.mrf.mxu0
    %883 = vmatprep.mubr.bf16.mxu0 0
    %884 = vmatmul.mubr.bf16.gmra.mxu0 %v669
    %v885 = vpop.f32.mrf.mxu0
    %v886 = vadd.f32 %v314, %v885
    %v887 = vpop.f32.mrf.mxu0
    %v888 = vpop.f32.mrf.mxu0
    %v889 = vadd.f32 %v319, %v888
    %v890 = vpop.f32.mrf.mxu0
    %891 = vmatprep.mubr.bf16.mxu0 0
    %892 = vmatmul.mubr.bf16.gmra.mxu0 %v670
    %v893 = vpop.f32.mrf.mxu0
    %v894 = vadd.f32 %v324, %v893
    %v895 = vpop.f32.mrf.mxu0
    %v896 = vpop.f32.mrf.mxu0
    %v897 = vadd.f32 %v329, %v896
    %v898 = vpop.f32.mrf.mxu0
    %899 = vmatprep.mubr.bf16.mxu0 0
    %900 = vmatmul.mubr.bf16.gmra.mxu0 %v671
    %v901 = vpop.f32.mrf.mxu0
    %v902 = vadd.f32 %v334, %v901
    %v903 = vpop.f32.mrf.mxu0
    %v904 = vpop.f32.mrf.mxu0
    %v905 = vadd.f32 %v339, %v904
    %v906 = vpop.f32.mrf.mxu0
    %907 = vmatprep.mubr.bf16.mxu0 0
    %908 = vmatmul.mubr.bf16.gmra.mxu0 %v672
    %v909 = vpop.f32.mrf.mxu0
    %v910 = vadd.f32 %v344, %v909
    %v911 = vpop.f32.mrf.mxu0
    %v912 = vpop.f32.mrf.mxu0
    %v913 = vadd.f32 %v349, %v912
    %v914 = vpop.f32.mrf.mxu0
    %915 = vmatprep.mubr.bf16.mxu0 0
    %916 = vmatmul.mubr.bf16.gmra.mxu0 %v673
    %v917 = vpop.f32.mrf.mxu0
    %v918 = vadd.f32 %v354, %v917
    %v919 = vpop.f32.mrf.mxu0
    %v920 = vpop.f32.mrf.mxu0
    %v921 = vadd.f32 %v359, %v920
    %v922 = vpop.f32.mrf.mxu0
    %923 = vmatprep.mubr.bf16.mxu0 0
    %924 = vmatmul.mubr.bf16.gmra.mxu0 %v674
    %v925 = vpop.f32.mrf.mxu0
    %v926 = vadd.f32 %v364, %v925
    %v927 = vpop.f32.mrf.mxu0
    %v928 = vpop.f32.mrf.mxu0
    %v929 = vadd.f32 %v369, %v928
    %v930 = vpop.f32.mrf.mxu0
    %931 = vmatprep.mubr.bf16.mxu0 0
    %932 = vmatmul.mubr.bf16.gmra.mxu0 %v675
    %v933 = vpop.f32.mrf.mxu0
    %v934 = vadd.f32 %v374, %v933
    %v935 = vpop.f32.mrf.mxu0
    %v936 = vpop.f32.mrf.mxu0
    %v937 = vadd.f32 %v379, %v936
    %v938 = vpop.f32.mrf.mxu0
    %939 = vmatprep.mubr.bf16.mxu0 0
    %940 = vmatmul.mubr.bf16.gmra.mxu0 %v676
    %v941 = vpop.f32.mrf.mxu0
    %v942 = vadd.f32 %v384, %v941
    %v943 = vpop.f32.mrf.mxu0
    %v944 = vpop.f32.mrf.mxu0
    %v945 = vadd.f32 %v389, %v944
    %v946 = vpop.f32.mrf.mxu0
    %947 = vmatprep.mubr.bf16.mxu0 0
    %948 = vmatmul.mubr.bf16.gmra.mxu0 %v677
    %v949 = vpop.f32.mrf.mxu0
    %v950 = vadd.f32 %v394, %v949
    %v951 = vpop.f32.mrf.mxu0
    %v952 = vpop.f32.mrf.mxu0
    %v953 = vadd.f32 %v399, %v952
    %v954 = vpop.f32.mrf.mxu0
    %955 = vmatprep.mubr.bf16.mxu0 0
    %956 = vmatmul.mubr.bf16.gmra.mxu0 %v678
    %v957 = vpop.f32.mrf.mxu0
    %v958 = vadd.f32 %v404, %v957
    %v959 = vpop.f32.mrf.mxu0
    %v960 = vpop.f32.mrf.mxu0
    %v961 = vadd.f32 %v409, %v960
    %v962 = vpop.f32.mrf.mxu0
    %963 = vmatprep.mubr.bf16.mxu0 0
    %964 = vmatmul.mubr.bf16.gmra.mxu0 %v679
    %v965 = vpop.f32.mrf.mxu0
    %v966 = vadd.f32 %v414, %v965
    %v967 = vpop.f32.mrf.mxu0
    %v968 = vpop.f32.mrf.mxu0
    %v969 = vadd.f32 %v419, %v968
    %v970 = vpop.f32.mrf.mxu0
    %971 = vmatprep.mubr.bf16.mxu0 0
    %972 = vmatmul.mubr.bf16.gmra.mxu0 %v680
    %v973 = vpop.f32.mrf.mxu0
    %v974 = vadd.f32 %v424, %v973
    %v975 = vpop.f32.mrf.mxu0
    %v976 = vpop.f32.mrf.mxu0
    %v977 = vadd.f32 %v429, %v976
    %v978 = vpop.f32.mrf.mxu0
    %979 = vmatprep.mubr.bf16.mxu0 0
    %980 = vmatmul.mubr.bf16.gmra.mxu0 %v681
    %v981 = vpop.f32.mrf.mxu0
    %v982 = vadd.f32 %v434, %v981
    %v983 = vpop.f32.mrf.mxu0
    %v984 = vpop.f32.mrf.mxu0
    %v985 = vadd.f32 %v439, %v984
    %v986 = vpop.f32.mrf.mxu0
    %987 = vmatprep.mubr.bf16.mxu0 0
    %988 = vmatmul.mubr.bf16.gmra.mxu0 %v682
    %v989 = vpop.f32.mrf.mxu0
    %v990 = vadd.f32 %v444, %v989
    %v991 = vpop.f32.mrf.mxu0
    %v992 = vpop.f32.mrf.mxu0
    %v993 = vadd.f32 %v449, %v992
    %v994 = vpop.f32.mrf.mxu0
    %995 = vmatprep.mubr.bf16.mxu0 0
    %996 = vmatmul.mubr.bf16.gmra.mxu0 %v683
    %v997 = vpop.f32.mrf.mxu0
    %v998 = vadd.f32 %v454, %v997
    %v999 = vpop.f32.mrf.mxu0
    %v1000 = vpop.f32.mrf.mxu0
    %v1001 = vadd.f32 %v459, %v1000
    %v1002 = vpop.f32.mrf.mxu0
    %1003 = vmatprep.mubr.bf16.mxu0 0
    %1004 = vmatmul.mubr.bf16.gmra.mxu0 %v684
    %v1005 = vpop.f32.mrf.mxu0
    %v1006 = vadd.f32 %v464, %v1005
    %v1007 = vpop.f32.mrf.mxu0
    %v1008 = vpop.f32.mrf.mxu0
    %v1009 = vadd.f32 %v469, %v1008
    %v1010 = vpop.f32.mrf.mxu0
    %1011 = vmatprep.mubr.bf16.mxu0 0
    %1012 = vmatmul.mubr.bf16.gmra.mxu0 %v685
    %v1013 = vpop.f32.mrf.mxu0
    %v1014 = vadd.f32 %v474, %v1013
    %v1015 = vpop.f32.mrf.mxu0
    %v1016 = vpop.f32.mrf.mxu0
    %v1017 = vadd.f32 %v479, %v1016
    %v1018 = vpop.f32.mrf.mxu0
    %1019 = vmatprep.mubr.bf16.mxu0 0
    %1020 = vmatmul.mubr.bf16.gmra.mxu0 %v686
    %v1021 = vpop.f32.mrf.mxu0
    %v1022 = vadd.f32 %v484, %v1021
    %v1023 = vpop.f32.mrf.mxu0
    %v1024 = vpop.f32.mrf.mxu0
    %v1025 = vadd.f32 %v489, %v1024
    %v1026 = vpop.f32.mrf.mxu0
    %1027 = vmatprep.mubr.bf16.mxu0 0
    %1028 = vmatmul.mubr.bf16.gmra.mxu0 %v687
    %v1029 = vpop.f32.mrf.mxu0
    %v1030 = vadd.f32 %v494, %v1029
    %v1031 = vpop.f32.mrf.mxu0
    %v1032 = vpop.f32.mrf.mxu0
    %v1033 = vadd.f32 %v499, %v1032
    %v1034 = vpop.f32.mrf.mxu0
    %1035 = vmatprep.mubr.bf16.mxu0 0
    %1036 = vmatmul.mubr.bf16.gmra.mxu0 %v688
    %v1037 = vpop.f32.mrf.mxu0
    %v1038 = vadd.f32 %v504, %v1037
    %v1039 = vpop.f32.mrf.mxu0
    %v1040 = vpop.f32.mrf.mxu0
    %v1041 = vadd.f32 %v509, %v1040
    %v1042 = vpop.f32.mrf.mxu0
    %1043 = vmatprep.mubr.bf16.mxu0 0
    %1044 = vmatmul.mubr.bf16.gmra.mxu0 %v689
    %v1045 = vpop.f32.mrf.mxu0
    %v1046 = vadd.f32 %v514, %v1045
    %v1047 = vpop.f32.mrf.mxu0
    %v1048 = vpop.f32.mrf.mxu0
    %v1049 = vadd.f32 %v519, %v1048
    %v1050 = vpop.f32.mrf.mxu0
    %1051 = vmatprep.mubr.bf16.mxu0 0
    %1052 = vmatmul.mubr.bf16.gmra.mxu0 %v690
    %v1053 = vpop.f32.mrf.mxu0
    %v1054 = vadd.f32 %v524, %v1053
    %v1055 = vpop.f32.mrf.mxu0
    %v1056 = vpop.f32.mrf.mxu0
    %v1057 = vadd.f32 %v529, %v1056
    %v1058 = vpop.f32.mrf.mxu0
    %1059 = vdwg.mxu0
    %v1060 = vmax.f32 %v806, 0.0
    %v1061 = vmax.f32 %v809, 0.0
    %v1062 = vmax.f32 %v814, 0.0
    %v1063 = vmax.f32 %v817, 0.0
    %v1064 = vmax.f32 %v822, 0.0
    %v1065 = vmax.f32 %v825, 0.0
    %v1066 = vmax.f32 %v830, 0.0
    %v1067 = vmax.f32 %v833, 0.0
    %v1068 = vmax.f32 %v838, 0.0
    %v1069 = vmax.f32 %v841, 0.0
    %v1070 = vmax.f32 %v846, 0.0
    %v1071 = vmax.f32 %v849, 0.0
    %v1072 = vmax.f32 %v854, 0.0
    %v1073 = vmax.f32 %v857, 0.0
    %v1074 = vmax.f32 %v862, 0.0
    %v1075 = vmax.f32 %v865, 0.0
    %v1076 = vmax.f32 %v870, 0.0
    %v1077 = vmax.f32 %v873, 0.0
    %v1078 = vmax.f32 %v878, 0.0
    %v1079 = vmax.f32 %v881, 0.0
    %v1080 = vmax.f32 %v886, 0.0
    %v1081 = vmax.f32 %v889, 0.0
    %v1082 = vmax.f32 %v894, 0.0
    %v1083 = vmax.f32 %v897, 0.0
    %v1084 = vmax.f32 %v902, 0.0
    %v1085 = vmax.f32 %v905, 0.0
    %v1086 = vmax.f32 %v910, 0.0
    %v1087 = vmax.f32 %v913, 0.0
    %v1088 = vmax.f32 %v918, 0.0
    %v1089 = vmax.f32 %v921, 0.0
    %v1090 = vmax.f32 %v926, 0.0
    %v1091 = vmax.f32 %v929, 0.0
    %v1092 = vmax.f32 %v934, 0.0
    %v1093 = vmax.f32 %v937, 0.0
    %v1094 = vmax.f32 %v942, 0.0
    %v1095 = vmax.f32 %v945, 0.0
    %v1096 = vmax.f32 %v950, 0.0
    %v1097 = vmax.f32 %v953, 0.0
    %v1098 = vmax.f32 %v958, 0.0
    %v1099 = vmax.f32 %v961, 0.0
    %v1100 = vmax.f32 %v966, 0.0
    %v1101 = vmax.f32 %v969, 0.0
    %v1102 = vmax.f32 %v974, 0.0
    %v1103 = vmax.f32 %v977, 0.0
    %v1104 = vmax.f32 %v982, 0.0
    %v1105 = vmax.f32 %v985, 0.0
    %v1106 = vmax.f32 %v990, 0.0
    %v1107 = vmax.f32 %v993, 0.0
    %v1108 = vmax.f32 %v998, 0.0
    %v1109 = vmax.f32 %v1001, 0.0
    %v1110 = vmax.f32 %v1006, 0.0
    %v1111 = vmax.f32 %v1009, 0.0
    %v1112 = vmax.f32 %v1014, 0.0
    %v1113 = vmax.f32 %v1017, 0.0
    %v1114 = vmax.f32 %v1022, 0.0
    %v1115 = vmax.f32 %v1025, 0.0
    %v1116 = vmax.f32 %v1030, 0.0
    %v1117 = vmax.f32 %v1033, 0.0
    %v1118 = vmax.f32 %v1038, 0.0
    %v1119 = vmax.f32 %v1041, 0.0
    %v1120 = vmax.f32 %v1046, 0.0
    %v1121 = vmax.f32 %v1049, 0.0
    %v1122 = vmax.f32 %v1054, 0.0
    %v1123 = vmax.f32 %v1057, 0.0
    %v1124 = vpack.c.bf16 %v1061, %v1060
    %v1125 = vpack.c.bf16 %v1063, %v1062
    %v1126 = vpack.c.bf16 %v1065, %v1064
    %v1127 = vpack.c.bf16 %v1067, %v1066
    %v1128 = vpack.c.bf16 %v1069, %v1068
    %v1129 = vpack.c.bf16 %v1071, %v1070
    %v1130 = vpack.c.bf16 %v1073, %v1072
    %v1131 = vpack.c.bf16 %v1075, %v1074
    %v1132 = vpack.c.bf16 %v1077, %v1076
    %v1133 = vpack.c.bf16 %v1079, %v1078
    %v1134 = vpack.c.bf16 %v1081, %v1080
    %v1135 = vpack.c.bf16 %v1083, %v1082
    %v1136 = vpack.c.bf16 %v1085, %v1084
    %v1137 = vpack.c.bf16 %v1087, %v1086
    %v1138 = vpack.c.bf16 %v1089, %v1088
    %v1139 = vpack.c.bf16 %v1091, %v1090
    %v1140 = vpack.c.bf16 %v1093, %v1092
    %v1141 = vpack.c.bf16 %v1095, %v1094
    %v1142 = vpack.c.bf16 %v1097, %v1096
    %v1143 = vpack.c.bf16 %v1099, %v1098
    %v1144 = vpack.c.bf16 %v1101, %v1100
    %v1145 = vpack.c.bf16 %v1103, %v1102
    %v1146 = vpack.c.bf16 %v1105, %v1104
    %v1147 = vpack.c.bf16 %v1107, %v1106
    %v1148 = vpack.c.bf16 %v1109, %v1108
    %v1149 = vpack.c.bf16 %v1111, %v1110
    %v1150 = vpack.c.bf16 %v1113, %v1112
    %v1151 = vpack.c.bf16 %v1115, %v1114
    %v1152 = vpack.c.bf16 %v1117, %v1116
    %v1153 = vpack.c.bf16 %v1119, %v1118
    %v1154 = vpack.c.bf16 %v1121, %v1120
    %v1155 = vpack.c.bf16 %v1123, %v1122
    %v1156 = vld [vmem:[#allocation2] sm:$0xff]
    %v1157 = vld [vmem:[#allocation2 + $0x8] sm:$0xff]
    %v1158 = vld [vmem:[#allocation2 + $0x10] sm:$0xff]
    %v1159 = vld [vmem:[#allocation2 + $0x18] sm:$0xff]
    %v1160 = vld [vmem:[#allocation2 + $0x20] sm:$0xff]
    %v1161 = vld [vmem:[#allocation2 + $0x28] sm:$0xff]
    %v1162 = vld [vmem:[#allocation2 + $0x30] sm:$0xff]
    %v1163 = vld [vmem:[#allocation2 + $0x38] sm:$0xff]
    %v1164 = vld [vmem:[#allocation2 + $0x40] sm:$0xff]
    %v1165 = vld [vmem:[#allocation2 + $0x48] sm:$0xff]
    %v1166 = vld [vmem:[#allocation2 + $0x50] sm:$0xff]
    %v1167 = vld [vmem:[#allocation2 + $0x58] sm:$0xff]
    %v1168 = vld [vmem:[#allocation2 + $0x60] sm:$0xff]
    %v1169 = vld [vmem:[#allocation2 + $0x68] sm:$0xff]
    %v1170 = vld [vmem:[#allocation2 + $0x70] sm:$0xff]
    %v1171 = vld [vmem:[#allocation2 + $0x78] sm:$0xff]
    %v1172 = vld [vmem:[#allocation2 + $0x80] sm:$0xff]
    %v1173 = vld [vmem:[#allocation2 + $0x88] sm:$0xff]
    %v1174 = vld [vmem:[#allocation2 + $0x90] sm:$0xff]
    %v1175 = vld [vmem:[#allocation2 + $0x98] sm:$0xff]
    %v1176 = vld [vmem:[#allocation2 + $0xa0] sm:$0xff]
    %v1177 = vld [vmem:[#allocation2 + $0xa8] sm:$0xff]
    %v1178 = vld [vmem:[#allocation2 + $0xb0] sm:$0xff]
    %v1179 = vld [vmem:[#allocation2 + $0xb8] sm:$0xff]
    %v1180 = vld [vmem:[#allocation2 + $0xc0] sm:$0xff]
    %v1181 = vld [vmem:[#allocation2 + $0xc8] sm:$0xff]
    %v1182 = vld [vmem:[#allocation2 + $0xd0] sm:$0xff]
    %v1183 = vld [vmem:[#allocation2 + $0xd8] sm:$0xff]
    %v1184 = vld [vmem:[#allocation2 + $0xe0] sm:$0xff]
    %v1185 = vld [vmem:[#allocation2 + $0xe8] sm:$0xff]
    %v1186 = vld [vmem:[#allocation2 + $0xf0] sm:$0xff]
    %v1187 = vld [vmem:[#allocation2 + $0xf8] sm:$0xff]
    %v1188 = vld [vmem:[#allocation2 + $0x100] sm:$0xff]
    %v1189 = vld [vmem:[#allocation2 + $0x108] sm:$0xff]
    %v1190 = vld [vmem:[#allocation2 + $0x110] sm:$0xff]
    %v1191 = vld [vmem:[#allocation2 + $0x118] sm:$0xff]
    %v1192 = vld [vmem:[#allocation2 + $0x120] sm:$0xff]
    %v1193 = vld [vmem:[#allocation2 + $0x128] sm:$0xff]
    %v1194 = vld [vmem:[#allocation2 + $0x130] sm:$0xff]
    %v1195 = vld [vmem:[#allocation2 + $0x138] sm:$0xff]
    %v1196 = vld [vmem:[#allocation2 + $0x140] sm:$0xff]
    %v1197 = vld [vmem:[#allocation2 + $0x148] sm:$0xff]
    %v1198 = vld [vmem:[#allocation2 + $0x150] sm:$0xff]
    %v1199 = vld [vmem:[#allocation2 + $0x158] sm:$0xff]
    %v1200 = vld [vmem:[#allocation2 + $0x160] sm:$0xff]
    %v1201 = vld [vmem:[#allocation2 + $0x168] sm:$0xff]
    %v1202 = vld [vmem:[#allocation2 + $0x170] sm:$0xff]
    %v1203 = vld [vmem:[#allocation2 + $0x178] sm:$0xff]
    %v1204 = vld [vmem:[#allocation2 + $0x180] sm:$0xff]
    %v1205 = vld [vmem:[#allocation2 + $0x188] sm:$0xff]
    %v1206 = vld [vmem:[#allocation2 + $0x190] sm:$0xff]
    %v1207 = vld [vmem:[#allocation2 + $0x198] sm:$0xff]
    %v1208 = vld [vmem:[#allocation2 + $0x1a0] sm:$0xff]
    %v1209 = vld [vmem:[#allocation2 + $0x1a8] sm:$0xff]
    %v1210 = vld [vmem:[#allocation2 + $0x1b0] sm:$0xff]
    %v1211 = vld [vmem:[#allocation2 + $0x1b8] sm:$0xff]
    %v1212 = vld [vmem:[#allocation2 + $0x1c0] sm:$0xff]
    %v1213 = vld [vmem:[#allocation2 + $0x1c8] sm:$0xff]
    %v1214 = vld [vmem:[#allocation2 + $0x1d0] sm:$0xff]
    %v1215 = vld [vmem:[#allocation2 + $0x1d8] sm:$0xff]
    %v1216 = vld [vmem:[#allocation2 + $0x1e0] sm:$0xff]
    %v1217 = vld [vmem:[#allocation2 + $0x1e8] sm:$0xff]
    %v1218 = vld [vmem:[#allocation2 + $0x1f0] sm:$0xff]
    %v1219 = vld [vmem:[#allocation2 + $0x1f8] sm:$0xff]
    %v1220 = vld [vmem:[#allocation2 + $0x200] sm:$0xff]
    %v1221 = vld [vmem:[#allocation2 + $0x208] sm:$0xff]
    %v1222 = vld [vmem:[#allocation2 + $0x210] sm:$0xff]
    %v1223 = vld [vmem:[#allocation2 + $0x218] sm:$0xff]
    %v1224 = vld [vmem:[#allocation2 + $0x220] sm:$0xff]
    %v1225 = vld [vmem:[#allocation2 + $0x228] sm:$0xff]
    %v1226 = vld [vmem:[#allocation2 + $0x230] sm:$0xff]
    %v1227 = vld [vmem:[#allocation2 + $0x238] sm:$0xff]
    %v1228 = vld [vmem:[#allocation2 + $0x240] sm:$0xff]
    %v1229 = vld [vmem:[#allocation2 + $0x248] sm:$0xff]
    %v1230 = vld [vmem:[#allocation2 + $0x250] sm:$0xff]
    %v1231 = vld [vmem:[#allocation2 + $0x258] sm:$0xff]
    %v1232 = vld [vmem:[#allocation2 + $0x260] sm:$0xff]
    %v1233 = vld [vmem:[#allocation2 + $0x268] sm:$0xff]
    %v1234 = vld [vmem:[#allocation2 + $0x270] sm:$0xff]
    %v1235 = vld [vmem:[#allocation2 + $0x278] sm:$0xff]
    %v1236 = vld [vmem:[#allocation2 + $0x280] sm:$0xff]
    %v1237 = vld [vmem:[#allocation2 + $0x288] sm:$0xff]
    %v1238 = vld [vmem:[#allocation2 + $0x290] sm:$0xff]
    %v1239 = vld [vmem:[#allocation2 + $0x298] sm:$0xff]
    %v1240 = vld [vmem:[#allocation2 + $0x2a0] sm:$0xff]
    %v1241 = vld [vmem:[#allocation2 + $0x2a8] sm:$0xff]
    %v1242 = vld [vmem:[#allocation2 + $0x2b0] sm:$0xff]
    %v1243 = vld [vmem:[#allocation2 + $0x2b8] sm:$0xff]
    %v1244 = vld [vmem:[#allocation2 + $0x2c0] sm:$0xff]
    %v1245 = vld [vmem:[#allocation2 + $0x2c8] sm:$0xff]
    %v1246 = vld [vmem:[#allocation2 + $0x2d0] sm:$0xff]
    %v1247 = vld [vmem:[#allocation2 + $0x2d8] sm:$0xff]
    %v1248 = vld [vmem:[#allocation2 + $0x2e0] sm:$0xff]
    %v1249 = vld [vmem:[#allocation2 + $0x2e8] sm:$0xff]
    %v1250 = vld [vmem:[#allocation2 + $0x2f0] sm:$0xff]
    %v1251 = vld [vmem:[#allocation2 + $0x2f8] sm:$0xff]
    %v1252 = vld [vmem:[#allocation2 + $0x300] sm:$0xff]
    %v1253 = vld [vmem:[#allocation2 + $0x308] sm:$0xff]
    %v1254 = vld [vmem:[#allocation2 + $0x310] sm:$0xff]
    %v1255 = vld [vmem:[#allocation2 + $0x318] sm:$0xff]
    %v1256 = vld [vmem:[#allocation2 + $0x320] sm:$0xff]
    %v1257 = vld [vmem:[#allocation2 + $0x328] sm:$0xff]
    %v1258 = vld [vmem:[#allocation2 + $0x330] sm:$0xff]
    %v1259 = vld [vmem:[#allocation2 + $0x338] sm:$0xff]
    %v1260 = vld [vmem:[#allocation2 + $0x340] sm:$0xff]
    %v1261 = vld [vmem:[#allocation2 + $0x348] sm:$0xff]
    %v1262 = vld [vmem:[#allocation2 + $0x350] sm:$0xff]
    %v1263 = vld [vmem:[#allocation2 + $0x358] sm:$0xff]
    %v1264 = vld [vmem:[#allocation2 + $0x360] sm:$0xff]
    %v1265 = vld [vmem:[#allocation2 + $0x368] sm:$0xff]
    %v1266 = vld [vmem:[#allocation2 + $0x370] sm:$0xff]
    %v1267 = vld [vmem:[#allocation2 + $0x378] sm:$0xff]
    %v1268 = vld [vmem:[#allocation2 + $0x380] sm:$0xff]
    %v1269 = vld [vmem:[#allocation2 + $0x388] sm:$0xff]
    %v1270 = vld [vmem:[#allocation2 + $0x390] sm:$0xff]
    %v1271 = vld [vmem:[#allocation2 + $0x398] sm:$0xff]
    %v1272 = vld [vmem:[#allocation2 + $0x3a0] sm:$0xff]
    %v1273 = vld [vmem:[#allocation2 + $0x3a8] sm:$0xff]
    %v1274 = vld [vmem:[#allocation2 + $0x3b0] sm:$0xff]
    %v1275 = vld [vmem:[#allocation2 + $0x3b8] sm:$0xff]
    %v1276 = vld [vmem:[#allocation2 + $0x3c0] sm:$0xff]
    %v1277 = vld [vmem:[#allocation2 + $0x3c8] sm:$0xff]
    %v1278 = vld [vmem:[#allocation2 + $0x3d0] sm:$0xff]
    %v1279 = vld [vmem:[#allocation2 + $0x3d8] sm:$0xff]
    %v1280 = vld [vmem:[#allocation2 + $0x3e0] sm:$0xff]
    %v1281 = vld [vmem:[#allocation2 + $0x3e8] sm:$0xff]
    %v1282 = vld [vmem:[#allocation2 + $0x3f0] sm:$0xff]
    %v1283 = vld [vmem:[#allocation2 + $0x3f8] sm:$0xff]
    %1284 = vset.pattern.permute.xlu0 1
    %1285 = vperm.xlu0 %1284, %v66
    %v1286 = vpop.permute.xlu0 %1285
    %1288 = vset.pattern.permute.xlu0 1
    %1289 = vperm.xlu0 %1288, %v67
    %v1290 = vpop.permute.xlu0 %1289
    %1292 = vset.pattern.permute.xlu0 1
    %1293 = vperm.xlu0 %1292, %v68
    %v1294 = vpop.permute.xlu0 %1293
    %1296 = vset.pattern.permute.xlu0 1
    %1297 = vperm.xlu0 %1296, %v69
    %v1298 = vpop.permute.xlu0 %1297
    %1300 = vset.pattern.permute.xlu0 1
    %1301 = vperm.xlu0 %1300, %v70
    %v1302 = vpop.permute.xlu0 %1301
    %1304 = vset.pattern.permute.xlu0 1
    %1305 = vperm.xlu0 %1304, %v71
    %v1306 = vpop.permute.xlu0 %1305
    %1308 = vset.pattern.permute.xlu0 1
    %1309 = vperm.xlu0 %1308, %v72
    %v1310 = vpop.permute.xlu0 %1309
    %1312 = vset.pattern.permute.xlu0 1
    %1313 = vperm.xlu0 %1312, %v73
    %v1314 = vpop.permute.xlu0 %1313
    %1316 = vset.pattern.permute.xlu0 1
    %1317 = vperm.xlu0 %1316, %v74
    %v1318 = vpop.permute.xlu0 %1317
    %1320 = vset.pattern.permute.xlu0 1
    %1321 = vperm.xlu0 %1320, %v75
    %v1322 = vpop.permute.xlu0 %1321
    %1324 = vset.pattern.permute.xlu0 1
    %1325 = vperm.xlu0 %1324, %v76
    %v1326 = vpop.permute.xlu0 %1325
    %1328 = vset.pattern.permute.xlu0 1
    %1329 = vperm.xlu0 %1328, %v77
    %v1330 = vpop.permute.xlu0 %1329
    %1332 = vset.pattern.permute.xlu0 1
    %1333 = vperm.xlu0 %1332, %v78
    %v1334 = vpop.permute.xlu0 %1333
    %1336 = vset.pattern.permute.xlu0 1
    %1337 = vperm.xlu0 %1336, %v79
    %v1338 = vpop.permute.xlu0 %1337
    %1340 = vset.pattern.permute.xlu0 1
    %1341 = vperm.xlu0 %1340, %v80
    %v1342 = vpop.permute.xlu0 %1341
    %1344 = vset.pattern.permute.xlu0 1
    %1345 = vperm.xlu0 %1344, %v81
    %v1346 = vpop.permute.xlu0 %1345
    %1348 = vset.pattern.permute.xlu0 1
    %1349 = vperm.xlu0 %1348, %v82
    %v1350 = vpop.permute.xlu0 %1349
    %1352 = vset.pattern.permute.xlu0 1
    %1353 = vperm.xlu0 %1352, %v83
    %v1354 = vpop.permute.xlu0 %1353
    %1356 = vset.pattern.permute.xlu0 1
    %1357 = vperm.xlu0 %1356, %v84
    %v1358 = vpop.permute.xlu0 %1357
    %1360 = vset.pattern.permute.xlu0 1
    %1361 = vperm.xlu0 %1360, %v85
    %v1362 = vpop.permute.xlu0 %1361
    %1364 = vset.pattern.permute.xlu0 1
    %1365 = vperm.xlu0 %1364, %v86
    %v1366 = vpop.permute.xlu0 %1365
    %1368 = vset.pattern.permute.xlu0 1
    %1369 = vperm.xlu0 %1368, %v87
    %v1370 = vpop.permute.xlu0 %1369
    %1372 = vset.pattern.permute.xlu0 1
    %1373 = vperm.xlu0 %1372, %v88
    %v1374 = vpop.permute.xlu0 %1373
    %1376 = vset.pattern.permute.xlu0 1
    %1377 = vperm.xlu0 %1376, %v89
    %v1378 = vpop.permute.xlu0 %1377
    %1380 = vset.pattern.permute.xlu0 1
    %1381 = vperm.xlu0 %1380, %v90
    %v1382 = vpop.permute.xlu0 %1381
    %1384 = vset.pattern.permute.xlu0 1
    %1385 = vperm.xlu0 %1384, %v91
    %v1386 = vpop.permute.xlu0 %1385
    %1388 = vset.pattern.permute.xlu0 1
    %1389 = vperm.xlu0 %1388, %v92
    %v1390 = vpop.permute.xlu0 %1389
    %1392 = vset.pattern.permute.xlu0 1
    %1393 = vperm.xlu0 %1392, %v93
    %v1394 = vpop.permute.xlu0 %1393
    %1396 = vset.pattern.permute.xlu0 1
    %1397 = vperm.xlu0 %1396, %v94
    %v1398 = vpop.permute.xlu0 %1397
    %1400 = vset.pattern.permute.xlu0 1
    %1401 = vperm.xlu0 %1400, %v95
    %v1402 = vpop.permute.xlu0 %1401
    %1404 = vset.pattern.permute.xlu0 1
    %1405 = vperm.xlu0 %1404, %v96
    %v1406 = vpop.permute.xlu0 %1405
    %1408 = vset.pattern.permute.xlu0 1
    %1409 = vperm.xlu0 %1408, %v97
    %v1410 = vpop.permute.xlu0 %1409
    %1412 = vset.pattern.permute.xlu0 1
    %1413 = vperm.xlu0 %1412, %v98
    %v1414 = vpop.permute.xlu0 %1413
    %1416 = vset.pattern.permute.xlu0 1
    %1417 = vperm.xlu0 %1416, %v99
    %v1418 = vpop.permute.xlu0 %1417
    %1420 = vset.pattern.permute.xlu0 1
    %1421 = vperm.xlu0 %1420, %v100
    %v1422 = vpop.permute.xlu0 %1421
    %1424 = vset.pattern.permute.xlu0 1
    %1425 = vperm.xlu0 %1424, %v101
    %v1426 = vpop.permute.xlu0 %1425
    %1428 = vset.pattern.permute.xlu0 1
    %1429 = vperm.xlu0 %1428, %v102
    %v1430 = vpop.permute.xlu0 %1429
    %1432 = vset.pattern.permute.xlu0 1
    %1433 = vperm.xlu0 %1432, %v103
    %v1434 = vpop.permute.xlu0 %1433
    %1436 = vset.pattern.permute.xlu0 1
    %1437 = vperm.xlu0 %1436, %v104
    %v1438 = vpop.permute.xlu0 %1437
    %1440 = vset.pattern.permute.xlu0 1
    %1441 = vperm.xlu0 %1440, %v105
    %v1442 = vpop.permute.xlu0 %1441
    %1444 = vset.pattern.permute.xlu0 1
    %1445 = vperm.xlu0 %1444, %v106
    %v1446 = vpop.permute.xlu0 %1445
    %1448 = vset.pattern.permute.xlu0 1
    %1449 = vperm.xlu0 %1448, %v107
    %v1450 = vpop.permute.xlu0 %1449
    %1452 = vset.pattern.permute.xlu0 1
    %1453 = vperm.xlu0 %1452, %v108
    %v1454 = vpop.permute.xlu0 %1453
    %1456 = vset.pattern.permute.xlu0 1
    %1457 = vperm.xlu0 %1456, %v109
    %v1458 = vpop.permute.xlu0 %1457
    %1460 = vset.pattern.permute.xlu0 1
    %1461 = vperm.xlu0 %1460, %v110
    %v1462 = vpop.permute.xlu0 %1461
    %1464 = vset.pattern.permute.xlu0 1
    %1465 = vperm.xlu0 %1464, %v111
    %v1466 = vpop.permute.xlu0 %1465
    %1468 = vset.pattern.permute.xlu0 1
    %1469 = vperm.xlu0 %1468, %v112
    %v1470 = vpop.permute.xlu0 %1469
    %1472 = vset.pattern.permute.xlu0 1
    %1473 = vperm.xlu0 %1472, %v113
    %v1474 = vpop.permute.xlu0 %1473
    %1476 = vset.pattern.permute.xlu0 1
    %1477 = vperm.xlu0 %1476, %v114
    %v1478 = vpop.permute.xlu0 %1477
    %1480 = vset.pattern.permute.xlu0 1
    %1481 = vperm.xlu0 %1480, %v115
    %v1482 = vpop.permute.xlu0 %1481
    %1484 = vset.pattern.permute.xlu0 1
    %1485 = vperm.xlu0 %1484, %v116
    %v1486 = vpop.permute.xlu0 %1485
    %1488 = vset.pattern.permute.xlu0 1
    %1489 = vperm.xlu0 %1488, %v117
    %v1490 = vpop.permute.xlu0 %1489
    %1492 = vset.pattern.permute.xlu0 1
    %1493 = vperm.xlu0 %1492, %v118
    %v1494 = vpop.permute.xlu0 %1493
    %1496 = vset.pattern.permute.xlu0 1
    %1497 = vperm.xlu0 %1496, %v119
    %v1498 = vpop.permute.xlu0 %1497
    %1500 = vset.pattern.permute.xlu0 1
    %1501 = vperm.xlu0 %1500, %v120
    %v1502 = vpop.permute.xlu0 %1501
    %1504 = vset.pattern.permute.xlu0 1
    %1505 = vperm.xlu0 %1504, %v121
    %v1506 = vpop.permute.xlu0 %1505
    %1508 = vset.pattern.permute.xlu0 1
    %1509 = vperm.xlu0 %1508, %v122
    %v1510 = vpop.permute.xlu0 %1509
    %1512 = vset.pattern.permute.xlu0 1
    %1513 = vperm.xlu0 %1512, %v123
    %v1514 = vpop.permute.xlu0 %1513
    %1516 = vset.pattern.permute.xlu0 1
    %1517 = vperm.xlu0 %1516, %v124
    %v1518 = vpop.permute.xlu0 %1517
    %1520 = vset.pattern.permute.xlu0 1
    %1521 = vperm.xlu0 %1520, %v125
    %v1522 = vpop.permute.xlu0 %1521
    %1524 = vset.pattern.permute.xlu0 1
    %1525 = vperm.xlu0 %1524, %v126
    %v1526 = vpop.permute.xlu0 %1525
    %1528 = vset.pattern.permute.xlu0 1
    %1529 = vperm.xlu0 %1528, %v127
    %v1530 = vpop.permute.xlu0 %1529
    %1532 = vset.pattern.permute.xlu0 1
    %1533 = vperm.xlu0 %1532, %v128
    %v1534 = vpop.permute.xlu0 %1533
    %1536 = vset.pattern.permute.xlu0 1
    %1537 = vperm.xlu0 %1536, %v129
    %v1538 = vpop.permute.xlu0 %1537
    %v1668 = vunpack.c.l.b16 %v1156
    %v1669 = vunpack.c.h.b16 %v1156
    %v1670 = vunpack.c.l.b16 %v1157
    %v1671 = vunpack.c.h.b16 %v1157
    %v1672 = vunpack.c.l.b16 %v1158
    %v1673 = vunpack.c.h.b16 %v1158
    %v1674 = vunpack.c.l.b16 %v1159
    %v1675 = vunpack.c.h.b16 %v1159
    %v1676 = vunpack.c.l.b16 %v1160
    %v1677 = vunpack.c.h.b16 %v1160
    %v1678 = vunpack.c.l.b16 %v1161
    %v1679 = vunpack.c.h.b16 %v1161
    %v1680 = vunpack.c.l.b16 %v1162
    %v1681 = vunpack.c.h.b16 %v1162
    %v1682 = vunpack.c.l.b16 %v1163
    %v1683 = vunpack.c.h.b16 %v1163
    %v1684 = vunpack.c.l.b16 %v1164
    %v1685 = vunpack.c.h.b16 %v1164
    %v1686 = vunpack.c.l.b16 %v1165
    %v1687 = vunpack.c.h.b16 %v1165
    %v1688 = vunpack.c.l.b16 %v1166
    %v1689 = vunpack.c.h.b16 %v1166
    %v1690 = vunpack.c.l.b16 %v1167
    %v1691 = vunpack.c.h.b16 %v1167
    %v1692 = vunpack.c.l.b16 %v1168
    %v1693 = vunpack.c.h.b16 %v1168
    %v1694 = vunpack.c.l.b16 %v1169
    %v1695 = vunpack.c.h.b16 %v1169
    %v1696 = vunpack.c.l.b16 %v1170
    %v1697 = vunpack.c.h.b16 %v1170
    %v1698 = vunpack.c.l.b16 %v1171
    %v1699 = vunpack.c.h.b16 %v1171
    %v1700 = vunpack.c.l.b16 %v1172
    %v1701 = vunpack.c.h.b16 %v1172
    %v1702 = vunpack.c.l.b16 %v1173
    %v1703 = vunpack.c.h.b16 %v1173
    %v1704 = vunpack.c.l.b16 %v1174
    %v1705 = vunpack.c.h.b16 %v1174
    %v1706 = vunpack.c.l.b16 %v1175
    %v1707 = vunpack.c.h.b16 %v1175
    %v1708 = vunpack.c.l.b16 %v1176
    %v1709 = vunpack.c.h.b16 %v1176
    %v1710 = vunpack.c.l.b16 %v1177
    %v1711 = vunpack.c.h.b16 %v1177
    %v1712 = vunpack.c.l.b16 %v1178
    %v1713 = vunpack.c.h.b16 %v1178
    %v1714 = vunpack.c.l.b16 %v1179
    %v1715 = vunpack.c.h.b16 %v1179
    %v1716 = vunpack.c.l.b16 %v1180
    %v1717 = vunpack.c.h.b16 %v1180
    %v1718 = vunpack.c.l.b16 %v1181
    %v1719 = vunpack.c.h.b16 %v1181
    %v1720 = vunpack.c.l.b16 %v1182
    %v1721 = vunpack.c.h.b16 %v1182
    %v1722 = vunpack.c.l.b16 %v1183
    %v1723 = vunpack.c.h.b16 %v1183
    %v1724 = vunpack.c.l.b16 %v1184
    %v1725 = vunpack.c.h.b16 %v1184
    %v1726 = vunpack.c.l.b16 %v1185
    %v1727 = vunpack.c.h.b16 %v1185
    %v1728 = vunpack.c.l.b16 %v1186
    %v1729 = vunpack.c.h.b16 %v1186
    %v1730 = vunpack.c.l.b16 %v1187
    %v1731 = vunpack.c.h.b16 %v1187
    %v1732 = vunpack.c.l.b16 %v1188
    %v1733 = vunpack.c.h.b16 %v1188
    %v1734 = vunpack.c.l.b16 %v1189
    %v1735 = vunpack.c.h.b16 %v1189
    %v1736 = vunpack.c.l.b16 %v1190
    %v1737 = vunpack.c.h.b16 %v1190
    %v1738 = vunpack.c.l.b16 %v1191
    %v1739 = vunpack.c.h.b16 %v1191
    %v1740 = vunpack.c.l.b16 %v1192
    %v1741 = vunpack.c.h.b16 %v1192
    %v1742 = vunpack.c.l.b16 %v1193
    %v1743 = vunpack.c.h.b16 %v1193
    %v1744 = vunpack.c.l.b16 %v1194
    %v1745 = vunpack.c.h.b16 %v1194
    %v1746 = vunpack.c.l.b16 %v1195
    %v1747 = vunpack.c.h.b16 %v1195
    %v1748 = vunpack.c.l.b16 %v1196
    %v1749 = vunpack.c.h.b16 %v1196
    %v1750 = vunpack.c.l.b16 %v1197
    %v1751 = vunpack.c.h.b16 %v1197
    %v1752 = vunpack.c.l.b16 %v1198
    %v1753 = vunpack.c.h.b16 %v1198
    %v1754 = vunpack.c.l.b16 %v1199
    %v1755 = vunpack.c.h.b16 %v1199
    %v1756 = vunpack.c.l.b16 %v1200
    %v1757 = vunpack.c.h.b16 %v1200
    %v1758 = vunpack.c.l.b16 %v1201
    %v1759 = vunpack.c.h.b16 %v1201
    %v1760 = vunpack.c.l.b16 %v1202
    %v1761 = vunpack.c.h.b16 %v1202
    %v1762 = vunpack.c.l.b16 %v1203
    %v1763 = vunpack.c.h.b16 %v1203
    %v1764 = vunpack.c.l.b16 %v1204
    %v1765 = vunpack.c.h.b16 %v1204
    %v1766 = vunpack.c.l.b16 %v1205
    %v1767 = vunpack.c.h.b16 %v1205
    %v1768 = vunpack.c.l.b16 %v1206
    %v1769 = vunpack.c.h.b16 %v1206
    %v1770 = vunpack.c.l.b16 %v1207
    %v1771 = vunpack.c.h.b16 %v1207
    %v1772 = vunpack.c.l.b16 %v1208
    %v1773 = vunpack.c.h.b16 %v1208
    %v1774 = vunpack.c.l.b16 %v1209
    %v1775 = vunpack.c.h.b16 %v1209
    %v1776 = vunpack.c.l.b16 %v1210
    %v1777 = vunpack.c.h.b16 %v1210
    %v1778 = vunpack.c.l.b16 %v1211
    %v1779 = vunpack.c.h.b16 %v1211
    %v1780 = vunpack.c.l.b16 %v1212
    %v1781 = vunpack.c.h.b16 %v1212
    %v1782 = vunpack.c.l.b16 %v1213
    %v1783 = vunpack.c.h.b16 %v1213
    %v1784 = vunpack.c.l.b16 %v1214
    %v1785 = vunpack.c.h.b16 %v1214
    %v1786 = vunpack.c.l.b16 %v1215
    %v1787 = vunpack.c.h.b16 %v1215
    %v1788 = vunpack.c.l.b16 %v1216
    %v1789 = vunpack.c.h.b16 %v1216
    %v1790 = vunpack.c.l.b16 %v1217
    %v1791 = vunpack.c.h.b16 %v1217
    %v1792 = vunpack.c.l.b16 %v1218
    %v1793 = vunpack.c.h.b16 %v1218
    %v1794 = vunpack.c.l.b16 %v1219
    %v1795 = vunpack.c.h.b16 %v1219
    %v1796 = vunpack.c.l.b16 %v1220
    %v1797 = vunpack.c.h.b16 %v1220
    %v1798 = vunpack.c.l.b16 %v1221
    %v1799 = vunpack.c.h.b16 %v1221
    %v1800 = vunpack.c.l.b16 %v1222
    %v1801 = vunpack.c.h.b16 %v1222
    %v1802 = vunpack.c.l.b16 %v1223
    %v1803 = vunpack.c.h.b16 %v1223
    %v1804 = vunpack.c.l.b16 %v1224
    %v1805 = vunpack.c.h.b16 %v1224
    %v1806 = vunpack.c.l.b16 %v1225
    %v1807 = vunpack.c.h.b16 %v1225
    %v1808 = vunpack.c.l.b16 %v1226
    %v1809 = vunpack.c.h.b16 %v1226
    %v1810 = vunpack.c.l.b16 %v1227
    %v1811 = vunpack.c.h.b16 %v1227
    %v1812 = vunpack.c.l.b16 %v1228
    %v1813 = vunpack.c.h.b16 %v1228
    %v1814 = vunpack.c.l.b16 %v1229
    %v1815 = vunpack.c.h.b16 %v1229
    %v1816 = vunpack.c.l.b16 %v1230
    %v1817 = vunpack.c.h.b16 %v1230
    %v1818 = vunpack.c.l.b16 %v1231
    %v1819 = vunpack.c.h.b16 %v1231
    %v1820 = vunpack.c.l.b16 %v1232
    %v1821 = vunpack.c.h.b16 %v1232
    %v1822 = vunpack.c.l.b16 %v1233
    %v1823 = vunpack.c.h.b16 %v1233
    %v1824 = vunpack.c.l.b16 %v1234
    %v1825 = vunpack.c.h.b16 %v1234
    %v1826 = vunpack.c.l.b16 %v1235
    %v1827 = vunpack.c.h.b16 %v1235
    %v1828 = vunpack.c.l.b16 %v1236
    %v1829 = vunpack.c.h.b16 %v1236
    %v1830 = vunpack.c.l.b16 %v1237
    %v1831 = vunpack.c.h.b16 %v1237
    %v1832 = vunpack.c.l.b16 %v1238
    %v1833 = vunpack.c.h.b16 %v1238
    %v1834 = vunpack.c.l.b16 %v1239
    %v1835 = vunpack.c.h.b16 %v1239
    %v1836 = vunpack.c.l.b16 %v1240
    %v1837 = vunpack.c.h.b16 %v1240
    %v1838 = vunpack.c.l.b16 %v1241
    %v1839 = vunpack.c.h.b16 %v1241
    %v1840 = vunpack.c.l.b16 %v1242
    %v1841 = vunpack.c.h.b16 %v1242
    %v1842 = vunpack.c.l.b16 %v1243
    %v1843 = vunpack.c.h.b16 %v1243
    %v1844 = vunpack.c.l.b16 %v1244
    %v1845 = vunpack.c.h.b16 %v1244
    %v1846 = vunpack.c.l.b16 %v1245
    %v1847 = vunpack.c.h.b16 %v1245
    %v1848 = vunpack.c.l.b16 %v1246
    %v1849 = vunpack.c.h.b16 %v1246
    %v1850 = vunpack.c.l.b16 %v1247
    %v1851 = vunpack.c.h.b16 %v1247
    %v1852 = vunpack.c.l.b16 %v1248
    %v1853 = vunpack.c.h.b16 %v1248
    %v1854 = vunpack.c.l.b16 %v1249
    %v1855 = vunpack.c.h.b16 %v1249
    %v1856 = vunpack.c.l.b16 %v1250
    %v1857 = vunpack.c.h.b16 %v1250
    %v1858 = vunpack.c.l.b16 %v1251
    %v1859 = vunpack.c.h.b16 %v1251
    %v1860 = vunpack.c.l.b16 %v1252
    %v1861 = vunpack.c.h.b16 %v1252
    %v1862 = vunpack.c.l.b16 %v1253
    %v1863 = vunpack.c.h.b16 %v1253
    %v1864 = vunpack.c.l.b16 %v1254
    %v1865 = vunpack.c.h.b16 %v1254
    %v1866 = vunpack.c.l.b16 %v1255
    %v1867 = vunpack.c.h.b16 %v1255
    %v1868 = vunpack.c.l.b16 %v1256
    %v1869 = vunpack.c.h.b16 %v1256
    %v1870 = vunpack.c.l.b16 %v1257
    %v1871 = vunpack.c.h.b16 %v1257
    %v1872 = vunpack.c.l.b16 %v1258
    %v1873 = vunpack.c.h.b16 %v1258
    %v1874 = vunpack.c.l.b16 %v1259
    %v1875 = vunpack.c.h.b16 %v1259
    %v1876 = vunpack.c.l.b16 %v1260
    %v1877 = vunpack.c.h.b16 %v1260
    %v1878 = vunpack.c.l.b16 %v1261
    %v1879 = vunpack.c.h.b16 %v1261
    %v1880 = vunpack.c.l.b16 %v1262
    %v1881 = vunpack.c.h.b16 %v1262
    %v1882 = vunpack.c.l.b16 %v1263
    %v1883 = vunpack.c.h.b16 %v1263
    %v1884 = vunpack.c.l.b16 %v1264
    %v1885 = vunpack.c.h.b16 %v1264
    %v1886 = vunpack.c.l.b16 %v1265
    %v1887 = vunpack.c.h.b16 %v1265
    %v1888 = vunpack.c.l.b16 %v1266
    %v1889 = vunpack.c.h.b16 %v1266
    %v1890 = vunpack.c.l.b16 %v1267
    %v1891 = vunpack.c.h.b16 %v1267
    %v1892 = vunpack.c.l.b16 %v1268
    %v1893 = vunpack.c.h.b16 %v1268
    %v1894 = vunpack.c.l.b16 %v1269
    %v1895 = vunpack.c.h.b16 %v1269
    %v1896 = vunpack.c.l.b16 %v1270
    %v1897 = vunpack.c.h.b16 %v1270
    %v1898 = vunpack.c.l.b16 %v1271
    %v1899 = vunpack.c.h.b16 %v1271
    %v1900 = vunpack.c.l.b16 %v1272
    %v1901 = vunpack.c.h.b16 %v1272
    %v1902 = vunpack.c.l.b16 %v1273
    %v1903 = vunpack.c.h.b16 %v1273
    %v1904 = vunpack.c.l.b16 %v1274
    %v1905 = vunpack.c.h.b16 %v1274
    %v1906 = vunpack.c.l.b16 %v1275
    %v1907 = vunpack.c.h.b16 %v1275
    %v1908 = vunpack.c.l.b16 %v1276
    %v1909 = vunpack.c.h.b16 %v1276
    %v1910 = vunpack.c.l.b16 %v1277
    %v1911 = vunpack.c.h.b16 %v1277
    %v1912 = vunpack.c.l.b16 %v1278
    %v1913 = vunpack.c.h.b16 %v1278
    %v1914 = vunpack.c.l.b16 %v1279
    %v1915 = vunpack.c.h.b16 %v1279
    %v1916 = vunpack.c.l.b16 %v1280
    %v1917 = vunpack.c.h.b16 %v1280
    %v1918 = vunpack.c.l.b16 %v1281
    %v1919 = vunpack.c.h.b16 %v1281
    %v1920 = vunpack.c.l.b16 %v1282
    %v1921 = vunpack.c.h.b16 %v1282
    %v1922 = vunpack.c.l.b16 %v1283
    %v1923 = vunpack.c.h.b16 %v1283
    %v1924 = vpack.c.b16 %v1672, %v1668
    %v1925 = vpack.c.b16 %v1673, %v1669
    %v1926 = vpack.c.b16 %v1674, %v1670
    %v1927 = vpack.c.b16 %v1675, %v1671
    %v1928 = vpack.c.b16 %v1680, %v1676
    %v1929 = vpack.c.b16 %v1681, %v1677
    %v1930 = vpack.c.b16 %v1682, %v1678
    %v1931 = vpack.c.b16 %v1683, %v1679
    %v1932 = vpack.c.b16 %v1688, %v1684
    %v1933 = vpack.c.b16 %v1689, %v1685
    %v1934 = vpack.c.b16 %v1690, %v1686
    %v1935 = vpack.c.b16 %v1691, %v1687
    %v1936 = vpack.c.b16 %v1696, %v1692
    %v1937 = vpack.c.b16 %v1697, %v1693
    %v1938 = vpack.c.b16 %v1698, %v1694
    %v1939 = vpack.c.b16 %v1699, %v1695
    %v1940 = vpack.c.b16 %v1704, %v1700
    %v1941 = vpack.c.b16 %v1705, %v1701
    %v1942 = vpack.c.b16 %v1706, %v1702
    %v1943 = vpack.c.b16 %v1707, %v1703
    %v1944 = vpack.c.b16 %v1712, %v1708
    %v1945 = vpack.c.b16 %v1713, %v1709
    %v1946 = vpack.c.b16 %v1714, %v1710
    %v1947 = vpack.c.b16 %v1715, %v1711
    %v1948 = vpack.c.b16 %v1720, %v1716
    %v1949 = vpack.c.b16 %v1721, %v1717
    %v1950 = vpack.c.b16 %v1722, %v1718
    %v1951 = vpack.c.b16 %v1723, %v1719
    %v1952 = vpack.c.b16 %v1728, %v1724
    %v1953 = vpack.c.b16 %v1729, %v1725
    %v1954 = vpack.c.b16 %v1730, %v1726
    %v1955 = vpack.c.b16 %v1731, %v1727
    %v1956 = vpack.c.b16 %v1736, %v1732
    %v1957 = vpack.c.b16 %v1737, %v1733
    %v1958 = vpack.c.b16 %v1738, %v1734
    %v1959 = vpack.c.b16 %v1739, %v1735
    %v1960 = vpack.c.b16 %v1744, %v1740
    %v1961 = vpack.c.b16 %v1745, %v1741
    %v1962 = vpack.c.b16 %v1746, %v1742
    %v1963 = vpack.c.b16 %v1747, %v1743
    %v1964 = vpack.c.b16 %v1752, %v1748
    %v1965 = vpack.c.b16 %v1753, %v1749
    %v1966 = vpack.c.b16 %v1754, %v1750
    %v1967 = vpack.c.b16 %v1755, %v1751
    %v1968 = vpack.c.b16 %v1760, %v1756
    %v1969 = vpack.c.b16 %v1761, %v1757
    %v1970 = vpack.c.b16 %v1762, %v1758
    %v1971 = vpack.c.b16 %v1763, %v1759
    %v1972 = vpack.c.b16 %v1768, %v1764
    %v1973 = vpack.c.b16 %v1769, %v1765
    %v1974 = vpack.c.b16 %v1770, %v1766
    %v1975 = vpack.c.b16 %v1771, %v1767
    %v1976 = vpack.c.b16 %v1776, %v1772
    %v1977 = vpack.c.b16 %v1777, %v1773
    %v1978 = vpack.c.b16 %v1778, %v1774
    %v1979 = vpack.c.b16 %v1779, %v1775
    %v1980 = vpack.c.b16 %v1784, %v1780
    %v1981 = vpack.c.b16 %v1785, %v1781
    %v1982 = vpack.c.b16 %v1786, %v1782
    %v1983 = vpack.c.b16 %v1787, %v1783
    %v1984 = vpack.c.b16 %v1792, %v1788
    %v1985 = vpack.c.b16 %v1793, %v1789
    %v1986 = vpack.c.b16 %v1794, %v1790
    %v1987 = vpack.c.b16 %v1795, %v1791
    %v1988 = vpack.c.b16 %v1800, %v1796
    %v1989 = vpack.c.b16 %v1801, %v1797
    %v1990 = vpack.c.b16 %v1802, %v1798
    %v1991 = vpack.c.b16 %v1803, %v1799
    %v1992 = vpack.c.b16 %v1808, %v1804
    %v1993 = vpack.c.b16 %v1809, %v1805
    %v1994 = vpack.c.b16 %v1810, %v1806
    %v1995 = vpack.c.b16 %v1811, %v1807
    %v1996 = vpack.c.b16 %v1816, %v1812
    %v1997 = vpack.c.b16 %v1817, %v1813
    %v1998 = vpack.c.b16 %v1818, %v1814
    %v1999 = vpack.c.b16 %v1819, %v1815
    %v2000 = vpack.c.b16 %v1824, %v1820
    %v2001 = vpack.c.b16 %v1825, %v1821
    %v2002 = vpack.c.b16 %v1826, %v1822
    %v2003 = vpack.c.b16 %v1827, %v1823
    %v2004 = vpack.c.b16 %v1832, %v1828
    %v2005 = vpack.c.b16 %v1833, %v1829
    %v2006 = vpack.c.b16 %v1834, %v1830
    %v2007 = vpack.c.b16 %v1835, %v1831
    %v2008 = vpack.c.b16 %v1840, %v1836
    %v2009 = vpack.c.b16 %v1841, %v1837
    %v2010 = vpack.c.b16 %v1842, %v1838
    %v2011 = vpack.c.b16 %v1843, %v1839
    %v2012 = vpack.c.b16 %v1848, %v1844
    %v2013 = vpack.c.b16 %v1849, %v1845
    %v2014 = vpack.c.b16 %v1850, %v1846
    %v2015 = vpack.c.b16 %v1851, %v1847
    %v2016 = vpack.c.b16 %v1856, %v1852
    %v2017 = vpack.c.b16 %v1857, %v1853
    %v2018 = vpack.c.b16 %v1858, %v1854
    %v2019 = vpack.c.b16 %v1859, %v1855
    %v2020 = vpack.c.b16 %v1864, %v1860
    %v2021 = vpack.c.b16 %v1865, %v1861
    %v2022 = vpack.c.b16 %v1866, %v1862
    %v2023 = vpack.c.b16 %v1867, %v1863
    %v2024 = vpack.c.b16 %v1872, %v1868
    %v2025 = vpack.c.b16 %v1873, %v1869
    %v2026 = vpack.c.b16 %v1874, %v1870
    %v2027 = vpack.c.b16 %v1875, %v1871
    %v2028 = vpack.c.b16 %v1880, %v1876
    %v2029 = vpack.c.b16 %v1881, %v1877
    %v2030 = vpack.c.b16 %v1882, %v1878
    %v2031 = vpack.c.b16 %v1883, %v1879
    %v2032 = vpack.c.b16 %v1888, %v1884
    %v2033 = vpack.c.b16 %v1889, %v1885
    %v2034 = vpack.c.b16 %v1890, %v1886
    %v2035 = vpack.c.b16 %v1891, %v1887
    %v2036 = vpack.c.b16 %v1896, %v1892
    %v2037 = vpack.c.b16 %v1897, %v1893
    %v2038 = vpack.c.b16 %v1898, %v1894
    %v2039 = vpack.c.b16 %v1899, %v1895
    %v2040 = vpack.c.b16 %v1904, %v1900
    %v2041 = vpack.c.b16 %v1905, %v1901
    %v2042 = vpack.c.b16 %v1906, %v1902
    %v2043 = vpack.c.b16 %v1907, %v1903
    %v2044 = vpack.c.b16 %v1912, %v1908
    %v2045 = vpack.c.b16 %v1913, %v1909
    %v2046 = vpack.c.b16 %v1914, %v1910
    %v2047 = vpack.c.b16 %v1915, %v1911
    %v2048 = vpack.c.b16 %v1920, %v1916
    %v2049 = vpack.c.b16 %v1921, %v1917
    %v2050 = vpack.c.b16 %v1922, %v1918
    %v2051 = vpack.c.b16 %v1923, %v1919
    %2180 = vmatprep.subr.bf16.mxu0 0
    %2181 = vmatpush1.bf16.msra.mxu0 %v1131
    %2182 = vmatprep.subr.bf16.mxu0 0
    %2183 = vmatpush1.bf16.msra.mxu0 %v1130
    %2184 = vmatprep.subr.bf16.mxu0 0
    %2185 = vmatpush1.bf16.msra.mxu0 %v1129
    %2186 = vmatprep.subr.bf16.mxu0 0
    %2187 = vmatpush1.bf16.msra.mxu0 %v1128
    %2188 = vmatprep.subr.bf16.mxu0 0
    %2189 = vmatpush1.bf16.msra.mxu0 %v1127
    %2190 = vmatprep.subr.bf16.mxu0 0
    %2191 = vmatpush1.bf16.msra.mxu0 %v1126
    %2192 = vmatprep.subr.bf16.mxu0 0
    %2193 = vmatpush1.bf16.msra.mxu0 %v1125
    %2194 = vmatprep.subr.bf16.mxu0 0
    %2195 = vmatpush1.bf16.msra.mxu0 %v1124
    %2196 = vmatprep.subr.bf16.mxu0 0
    %2197 = vmatpush2.bf16.msra.mxu0 %v1139
    %2198 = vmatprep.subr.bf16.mxu0 0
    %2199 = vmatpush2.bf16.msra.mxu0 %v1138
    %2200 = vmatprep.subr.bf16.mxu0 0
    %2201 = vmatpush2.bf16.msra.mxu0 %v1137
    %2202 = vmatprep.subr.bf16.mxu0 0
    %2203 = vmatpush2.bf16.msra.mxu0 %v1136
    %2204 = vmatprep.subr.bf16.mxu0 0
    %2205 = vmatpush2.bf16.msra.mxu0 %v1135
    %2206 = vmatprep.subr.bf16.mxu0 0
    %2207 = vmatpush2.bf16.msra.mxu0 %v1134
    %2208 = vmatprep.subr.bf16.mxu0 0
    %2209 = vmatpush2.bf16.msra.mxu0 %v1133
    %2210 = vmatprep.subr.bf16.mxu0 0
    %2211 = vmatpush2.bf16.msra.mxu0 %v1132
    %2212 = vmatprep.mubr.bf16.mxu0 %v1925
    %2213 = vmatmul.mubr.bf16.gmra.mxu0 %v1924
    %v2214 = vpop.f32.mrf.mxu0
    %v2215 = vadd.f32 %v1286, %v2214
    %v2216 = vpop.f32.mrf.mxu0
    %v2217 = vpop.f32.mrf.mxu0
    %v2218 = vadd.f32 %v1290, %v2217
    %v2219 = vpop.f32.mrf.mxu0
    %2220 = vmatprep.mubr.bf16.mxu0 %v1929
    %2221 = vmatmul.mubr.bf16.gmra.mxu0 %v1928
    %v2222 = vpop.f32.mrf.mxu0
    %v2223 = vadd.f32 %v1294, %v2222
    %v2224 = vpop.f32.mrf.mxu0
    %v2225 = vpop.f32.mrf.mxu0
    %v2226 = vadd.f32 %v1298, %v2225
    %v2227 = vpop.f32.mrf.mxu0
    %2228 = vmatprep.mubr.bf16.mxu0 %v1933
    %2229 = vmatmul.mubr.bf16.gmra.mxu0 %v1932
    %v2230 = vpop.f32.mrf.mxu0
    %v2231 = vadd.f32 %v1302, %v2230
    %v2232 = vpop.f32.mrf.mxu0
    %v2233 = vpop.f32.mrf.mxu0
    %v2234 = vadd.f32 %v1306, %v2233
    %v2235 = vpop.f32.mrf.mxu0
    %2236 = vmatprep.mubr.bf16.mxu0 %v1937
    %2237 = vmatmul.mubr.bf16.gmra.mxu0 %v1936
    %v2238 = vpop.f32.mrf.mxu0
    %v2239 = vadd.f32 %v1310, %v2238
    %v2240 = vpop.f32.mrf.mxu0
    %v2241 = vpop.f32.mrf.mxu0
    %v2242 = vadd.f32 %v1314, %v2241
    %v2243 = vpop.f32.mrf.mxu0
    %2244 = vmatprep.mubr.bf16.mxu0 %v1941
    %2245 = vmatmul.mubr.bf16.gmra.mxu0 %v1940
    %v2246 = vpop.f32.mrf.mxu0
    %v2247 = vadd.f32 %v1318, %v2246
    %v2248 = vpop.f32.mrf.mxu0
    %v2249 = vpop.f32.mrf.mxu0
    %v2250 = vadd.f32 %v1322, %v2249
    %v2251 = vpop.f32.mrf.mxu0
    %2252 = vmatprep.mubr.bf16.mxu0 %v1945
    %2253 = vmatmul.mubr.bf16.gmra.mxu0 %v1944
    %v2254 = vpop.f32.mrf.mxu0
    %v2255 = vadd.f32 %v1326, %v2254
    %v2256 = vpop.f32.mrf.mxu0
    %v2257 = vpop.f32.mrf.mxu0
    %v2258 = vadd.f32 %v1330, %v2257
    %v2259 = vpop.f32.mrf.mxu0
    %2260 = vmatprep.mubr.bf16.mxu0 %v1949
    %2261 = vmatmul.mubr.bf16.gmra.mxu0 %v1948
    %v2262 = vpop.f32.mrf.mxu0
    %v2263 = vadd.f32 %v1334, %v2262
    %v2264 = vpop.f32.mrf.mxu0
    %v2265 = vpop.f32.mrf.mxu0
    %v2266 = vadd.f32 %v1338, %v2265
    %v2267 = vpop.f32.mrf.mxu0
    %2268 = vmatprep.mubr.bf16.mxu0 %v1953
    %2269 = vmatmul.mubr.bf16.gmra.mxu0 %v1952
    %v2270 = vpop.f32.mrf.mxu0
    %v2271 = vadd.f32 %v1342, %v2270
    %v2272 = vpop.f32.mrf.mxu0
    %v2273 = vpop.f32.mrf.mxu0
    %v2274 = vadd.f32 %v1346, %v2273
    %v2275 = vpop.f32.mrf.mxu0
    %2276 = vmatprep.mubr.bf16.mxu0 %v1957
    %2277 = vmatmul.mubr.bf16.gmra.mxu0 %v1956
    %v2278 = vpop.f32.mrf.mxu0
    %v2279 = vadd.f32 %v1350, %v2278
    %v2280 = vpop.f32.mrf.mxu0
    %v2281 = vpop.f32.mrf.mxu0
    %v2282 = vadd.f32 %v1354, %v2281
    %v2283 = vpop.f32.mrf.mxu0
    %2284 = vmatprep.mubr.bf16.mxu0 %v1961
    %2285 = vmatmul.mubr.bf16.gmra.mxu0 %v1960
    %v2286 = vpop.f32.mrf.mxu0
    %v2287 = vadd.f32 %v1358, %v2286
    %v2288 = vpop.f32.mrf.mxu0
    %v2289 = vpop.f32.mrf.mxu0
    %v2290 = vadd.f32 %v1362, %v2289
    %v2291 = vpop.f32.mrf.mxu0
    %2292 = vmatprep.mubr.bf16.mxu0 %v1965
    %2293 = vmatmul.mubr.bf16.gmra.mxu0 %v1964
    %v2294 = vpop.f32.mrf.mxu0
    %v2295 = vadd.f32 %v1366, %v2294
    %v2296 = vpop.f32.mrf.mxu0
    %v2297 = vpop.f32.mrf.mxu0
    %v2298 = vadd.f32 %v1370, %v2297
    %v2299 = vpop.f32.mrf.mxu0
    %2300 = vmatprep.mubr.bf16.mxu0 %v1969
    %2301 = vmatmul.mubr.bf16.gmra.mxu0 %v1968
    %v2302 = vpop.f32.mrf.mxu0
    %v2303 = vadd.f32 %v1374, %v2302
    %v2304 = vpop.f32.mrf.mxu0
    %v2305 = vpop.f32.mrf.mxu0
    %v2306 = vadd.f32 %v1378, %v2305
    %v2307 = vpop.f32.mrf.mxu0
    %2308 = vmatprep.mubr.bf16.mxu0 %v1973
    %2309 = vmatmul.mubr.bf16.gmra.mxu0 %v1972
    %v2310 = vpop.f32.mrf.mxu0
    %v2311 = vadd.f32 %v1382, %v2310
    %v2312 = vpop.f32.mrf.mxu0
    %v2313 = vpop.f32.mrf.mxu0
    %v2314 = vadd.f32 %v1386, %v2313
    %v2315 = vpop.f32.mrf.mxu0
    %2316 = vmatprep.mubr.bf16.mxu0 %v1977
    %2317 = vmatmul.mubr.bf16.gmra.mxu0 %v1976
    %v2318 = vpop.f32.mrf.mxu0
    %v2319 = vadd.f32 %v1390, %v2318
    %v2320 = vpop.f32.mrf.mxu0
    %v2321 = vpop.f32.mrf.mxu0
    %v2322 = vadd.f32 %v1394, %v2321
    %v2323 = vpop.f32.mrf.mxu0
    %2324 = vmatprep.mubr.bf16.mxu0 %v1981
    %2325 = vmatmul.mubr.bf16.gmra.mxu0 %v1980
    %v2326 = vpop.f32.mrf.mxu0
    %v2327 = vadd.f32 %v1398, %v2326
    %v2328 = vpop.f32.mrf.mxu0
    %v2329 = vpop.f32.mrf.mxu0
    %v2330 = vadd.f32 %v1402, %v2329
    %v2331 = vpop.f32.mrf.mxu0
    %2332 = vmatprep.mubr.bf16.mxu0 %v1985
    %2333 = vmatmul.mubr.bf16.gmra.mxu0 %v1984
    %v2334 = vpop.f32.mrf.mxu0
    %v2335 = vadd.f32 %v1406, %v2334
    %v2336 = vpop.f32.mrf.mxu0
    %v2337 = vpop.f32.mrf.mxu0
    %v2338 = vadd.f32 %v1410, %v2337
    %v2339 = vpop.f32.mrf.mxu0
    %2340 = vmatprep.mubr.bf16.mxu0 %v1989
    %2341 = vmatmul.mubr.bf16.gmra.mxu0 %v1988
    %v2342 = vpop.f32.mrf.mxu0
    %v2343 = vadd.f32 %v1414, %v2342
    %v2344 = vpop.f32.mrf.mxu0
    %v2345 = vpop.f32.mrf.mxu0
    %v2346 = vadd.f32 %v1418, %v2345
    %v2347 = vpop.f32.mrf.mxu0
    %2348 = vmatprep.mubr.bf16.mxu0 %v1993
    %2349 = vmatmul.mubr.bf16.gmra.mxu0 %v1992
    %v2350 = vpop.f32.mrf.mxu0
    %v2351 = vadd.f32 %v1422, %v2350
    %v2352 = vpop.f32.mrf.mxu0
    %v2353 = vpop.f32.mrf.mxu0
    %v2354 = vadd.f32 %v1426, %v2353
    %v2355 = vpop.f32.mrf.mxu0
    %2356 = vmatprep.mubr.bf16.mxu0 %v1997
    %2357 = vmatmul.mubr.bf16.gmra.mxu0 %v1996
    %v2358 = vpop.f32.mrf.mxu0
    %v2359 = vadd.f32 %v1430, %v2358
    %v2360 = vpop.f32.mrf.mxu0
    %v2361 = vpop.f32.mrf.mxu0
    %v2362 = vadd.f32 %v1434, %v2361
    %v2363 = vpop.f32.mrf.mxu0
    %2364 = vmatprep.mubr.bf16.mxu0 %v2001
    %2365 = vmatmul.mubr.bf16.gmra.mxu0 %v2000
    %v2366 = vpop.f32.mrf.mxu0
    %v2367 = vadd.f32 %v1438, %v2366
    %v2368 = vpop.f32.mrf.mxu0
    %v2369 = vpop.f32.mrf.mxu0
    %v2370 = vadd.f32 %v1442, %v2369
    %v2371 = vpop.f32.mrf.mxu0
    %2372 = vmatprep.mubr.bf16.mxu0 %v2005
    %2373 = vmatmul.mubr.bf16.gmra.mxu0 %v2004
    %v2374 = vpop.f32.mrf.mxu0
    %v2375 = vadd.f32 %v1446, %v2374
    %v2376 = vpop.f32.mrf.mxu0
    %v2377 = vpop.f32.mrf.mxu0
    %v2378 = vadd.f32 %v1450, %v2377
    %v2379 = vpop.f32.mrf.mxu0
    %2380 = vmatprep.mubr.bf16.mxu0 %v2009
    %2381 = vmatmul.mubr.bf16.gmra.mxu0 %v2008
    %v2382 = vpop.f32.mrf.mxu0
    %v2383 = vadd.f32 %v1454, %v2382
    %v2384 = vpop.f32.mrf.mxu0
    %v2385 = vpop.f32.mrf.mxu0
    %v2386 = vadd.f32 %v1458, %v2385
    %v2387 = vpop.f32.mrf.mxu0
    %2388 = vmatprep.mubr.bf16.mxu0 %v2013
    %2389 = vmatmul.mubr.bf16.gmra.mxu0 %v2012
    %v2390 = vpop.f32.mrf.mxu0
    %v2391 = vadd.f32 %v1462, %v2390
    %v2392 = vpop.f32.mrf.mxu0
    %v2393 = vpop.f32.mrf.mxu0
    %v2394 = vadd.f32 %v1466, %v2393
    %v2395 = vpop.f32.mrf.mxu0
    %2396 = vmatprep.mubr.bf16.mxu0 %v2017
    %2397 = vmatmul.mubr.bf16.gmra.mxu0 %v2016
    %v2398 = vpop.f32.mrf.mxu0
    %v2399 = vadd.f32 %v1470, %v2398
    %v2400 = vpop.f32.mrf.mxu0
    %v2401 = vpop.f32.mrf.mxu0
    %v2402 = vadd.f32 %v1474, %v2401
    %v2403 = vpop.f32.mrf.mxu0
    %2404 = vmatprep.mubr.bf16.mxu0 %v2021
    %2405 = vmatmul.mubr.bf16.gmra.mxu0 %v2020
    %v2406 = vpop.f32.mrf.mxu0
    %v2407 = vadd.f32 %v1478, %v2406
    %v2408 = vpop.f32.mrf.mxu0
    %v2409 = vpop.f32.mrf.mxu0
    %v2410 = vadd.f32 %v1482, %v2409
    %v2411 = vpop.f32.mrf.mxu0
    %2412 = vmatprep.mubr.bf16.mxu0 %v2025
    %2413 = vmatmul.mubr.bf16.gmra.mxu0 %v2024
    %v2414 = vpop.f32.mrf.mxu0
    %v2415 = vadd.f32 %v1486, %v2414
    %v2416 = vpop.f32.mrf.mxu0
    %v2417 = vpop.f32.mrf.mxu0
    %v2418 = vadd.f32 %v1490, %v2417
    %v2419 = vpop.f32.mrf.mxu0
    %2420 = vmatprep.mubr.bf16.mxu0 %v2029
    %2421 = vmatmul.mubr.bf16.gmra.mxu0 %v2028
    %v2422 = vpop.f32.mrf.mxu0
    %v2423 = vadd.f32 %v1494, %v2422
    %v2424 = vpop.f32.mrf.mxu0
    %v2425 = vpop.f32.mrf.mxu0
    %v2426 = vadd.f32 %v1498, %v2425
    %v2427 = vpop.f32.mrf.mxu0
    %2428 = vmatprep.mubr.bf16.mxu0 %v2033
    %2429 = vmatmul.mubr.bf16.gmra.mxu0 %v2032
    %v2430 = vpop.f32.mrf.mxu0
    %v2431 = vadd.f32 %v1502, %v2430
    %v2432 = vpop.f32.mrf.mxu0
    %v2433 = vpop.f32.mrf.mxu0
    %v2434 = vadd.f32 %v1506, %v2433
    %v2435 = vpop.f32.mrf.mxu0
    %2436 = vmatprep.mubr.bf16.mxu0 %v2037
    %2437 = vmatmul.mubr.bf16.gmra.mxu0 %v2036
    %v2438 = vpop.f32.mrf.mxu0
    %v2439 = vadd.f32 %v1510, %v2438
    %v2440 = vpop.f32.mrf.mxu0
    %v2441 = vpop.f32.mrf.mxu0
    %v2442 = vadd.f32 %v1514, %v2441
    %v2443 = vpop.f32.mrf.mxu0
    %2444 = vmatprep.mubr.bf16.mxu0 %v2041
    %2445 = vmatmul.mubr.bf16.gmra.mxu0 %v2040
    %v2446 = vpop.f32.mrf.mxu0
    %v2447 = vadd.f32 %v1518, %v2446
    %v2448 = vpop.f32.mrf.mxu0
    %v2449 = vpop.f32.mrf.mxu0
    %v2450 = vadd.f32 %v1522, %v2449
    %v2451 = vpop.f32.mrf.mxu0
    %2452 = vmatprep.mubr.bf16.mxu0 %v2045
    %2453 = vmatmul.mubr.bf16.gmra.mxu0 %v2044
    %v2454 = vpop.f32.mrf.mxu0
    %v2455 = vadd.f32 %v1526, %v2454
    %v2456 = vpop.f32.mrf.mxu0
    %v2457 = vpop.f32.mrf.mxu0
    %v2458 = vadd.f32 %v1530, %v2457
    %v2459 = vpop.f32.mrf.mxu0
    %2460 = vmatprep.mubr.bf16.mxu0 %v2049
    %2461 = vmatmul.mubr.bf16.gmra.mxu0 %v2048
    %v2462 = vpop.f32.mrf.mxu0
    %v2463 = vadd.f32 %v1534, %v2462
    %v2464 = vpop.f32.mrf.mxu0
    %v2465 = vpop.f32.mrf.mxu0
    %v2466 = vadd.f32 %v1538, %v2465
    %v2467 = vpop.f32.mrf.mxu0
    %2468 = vdwg.mxu0
    %2469 = vmatprep.subr.bf16.mxu0 0
    %2470 = vmatpush1.bf16.msra.mxu0 %v1147
    %2471 = vmatprep.subr.bf16.mxu0 0
    %2472 = vmatpush1.bf16.msra.mxu0 %v1146
    %2473 = vmatprep.subr.bf16.mxu0 0
    %2474 = vmatpush1.bf16.msra.mxu0 %v1145
    %2475 = vmatprep.subr.bf16.mxu0 0
    %2476 = vmatpush1.bf16.msra.mxu0 %v1144
    %2477 = vmatprep.subr.bf16.mxu0 0
    %2478 = vmatpush1.bf16.msra.mxu0 %v1143
    %2479 = vmatprep.subr.bf16.mxu0 0
    %2480 = vmatpush1.bf16.msra.mxu0 %v1142
    %2481 = vmatprep.subr.bf16.mxu0 0
    %2482 = vmatpush1.bf16.msra.mxu0 %v1141
    %2483 = vmatprep.subr.bf16.mxu0 0
    %2484 = vmatpush1.bf16.msra.mxu0 %v1140
    %2485 = vmatprep.subr.bf16.mxu0 0
    %2486 = vmatpush2.bf16.msra.mxu0 %v1155
    %2487 = vmatprep.subr.bf16.mxu0 0
    %2488 = vmatpush2.bf16.msra.mxu0 %v1154
    %2489 = vmatprep.subr.bf16.mxu0 0
    %2490 = vmatpush2.bf16.msra.mxu0 %v1153
    %2491 = vmatprep.subr.bf16.mxu0 0
    %2492 = vmatpush2.bf16.msra.mxu0 %v1152
    %2493 = vmatprep.subr.bf16.mxu0 0
    %2494 = vmatpush2.bf16.msra.mxu0 %v1151
    %2495 = vmatprep.subr.bf16.mxu0 0
    %2496 = vmatpush2.bf16.msra.mxu0 %v1150
    %2497 = vmatprep.subr.bf16.mxu0 0
    %2498 = vmatpush2.bf16.msra.mxu0 %v1149
    %2499 = vmatprep.subr.bf16.mxu0 0
    %2500 = vmatpush2.bf16.msra.mxu0 %v1148
    %2501 = vmatprep.mubr.bf16.mxu0 %v1927
    %2502 = vmatmul.mubr.bf16.gmra.mxu0 %v1926
    %v2503 = vpop.f32.mrf.mxu0
    %v2504 = vadd.f32 %v2215, %v2503
    %v2505 = vpop.f32.mrf.mxu0
    %v2506 = vpop.f32.mrf.mxu0
    %v2507 = vadd.f32 %v2218, %v2506
    %v2508 = vpop.f32.mrf.mxu0
    %2509 = vmatprep.mubr.bf16.mxu0 %v1931
    %2510 = vmatmul.mubr.bf16.gmra.mxu0 %v1930
    %v2511 = vpop.f32.mrf.mxu0
    %v2512 = vadd.f32 %v2223, %v2511
    %v2513 = vpop.f32.mrf.mxu0
    %v2514 = vpop.f32.mrf.mxu0
    %v2515 = vadd.f32 %v2226, %v2514
    %v2516 = vpop.f32.mrf.mxu0
    %2517 = vmatprep.mubr.bf16.mxu0 %v1935
    %2518 = vmatmul.mubr.bf16.gmra.mxu0 %v1934
    %v2519 = vpop.f32.mrf.mxu0
    %v2520 = vadd.f32 %v2231, %v2519
    %v2521 = vpop.f32.mrf.mxu0
    %v2522 = vpop.f32.mrf.mxu0
    %v2523 = vadd.f32 %v2234, %v2522
    %v2524 = vpop.f32.mrf.mxu0
    %2525 = vmatprep.mubr.bf16.mxu0 %v1939
    %2526 = vmatmul.mubr.bf16.gmra.mxu0 %v1938
    %v2527 = vpop.f32.mrf.mxu0
    %v2528 = vadd.f32 %v2239, %v2527
    %v2529 = vpop.f32.mrf.mxu0
    %v2530 = vpop.f32.mrf.mxu0
    %v2531 = vadd.f32 %v2242, %v2530
    %v2532 = vpop.f32.mrf.mxu0
    %2533 = vmatprep.mubr.bf16.mxu0 %v1943
    %2534 = vmatmul.mubr.bf16.gmra.mxu0 %v1942
    %v2535 = vpop.f32.mrf.mxu0
    %v2536 = vadd.f32 %v2247, %v2535
    %v2537 = vpop.f32.mrf.mxu0
    %v2538 = vpop.f32.mrf.mxu0
    %v2539 = vadd.f32 %v2250, %v2538
    %v2540 = vpop.f32.mrf.mxu0
    %2541 = vmatprep.mubr.bf16.mxu0 %v1947
    %2542 = vmatmul.mubr.bf16.gmra.mxu0 %v1946
    %v2543 = vpop.f32.mrf.mxu0
    %v2544 = vadd.f32 %v2255, %v2543
    %v2545 = vpop.f32.mrf.mxu0
    %v2546 = vpop.f32.mrf.mxu0
    %v2547 = vadd.f32 %v2258, %v2546
    %v2548 = vpop.f32.mrf.mxu0
    %2549 = vmatprep.mubr.bf16.mxu0 %v1951
    %2550 = vmatmul.mubr.bf16.gmra.mxu0 %v1950
    %v2551 = vpop.f32.mrf.mxu0
    %v2552 = vadd.f32 %v2263, %v2551
    %v2553 = vpop.f32.mrf.mxu0
    %v2554 = vpop.f32.mrf.mxu0
    %v2555 = vadd.f32 %v2266, %v2554
    %v2556 = vpop.f32.mrf.mxu0
    %2557 = vmatprep.mubr.bf16.mxu0 %v1955
    %2558 = vmatmul.mubr.bf16.gmra.mxu0 %v1954
    %v2559 = vpop.f32.mrf.mxu0
    %v2560 = vadd.f32 %v2271, %v2559
    %v2561 = vpop.f32.mrf.mxu0
    %v2562 = vpop.f32.mrf.mxu0
    %v2563 = vadd.f32 %v2274, %v2562
    %v2564 = vpop.f32.mrf.mxu0
    %2565 = vmatprep.mubr.bf16.mxu0 %v1959
    %2566 = vmatmul.mubr.bf16.gmra.mxu0 %v1958
    %v2567 = vpop.f32.mrf.mxu0
    %v2568 = vadd.f32 %v2279, %v2567
    %v2569 = vpop.f32.mrf.mxu0
    %v2570 = vpop.f32.mrf.mxu0
    %v2571 = vadd.f32 %v2282, %v2570
    %v2572 = vpop.f32.mrf.mxu0
    %2573 = vmatprep.mubr.bf16.mxu0 %v1963
    %2574 = vmatmul.mubr.bf16.gmra.mxu0 %v1962
    %v2575 = vpop.f32.mrf.mxu0
    %v2576 = vadd.f32 %v2287, %v2575
    %v2577 = vpop.f32.mrf.mxu0
    %v2578 = vpop.f32.mrf.mxu0
    %v2579 = vadd.f32 %v2290, %v2578
    %v2580 = vpop.f32.mrf.mxu0
    %2581 = vmatprep.mubr.bf16.mxu0 %v1967
    %2582 = vmatmul.mubr.bf16.gmra.mxu0 %v1966
    %v2583 = vpop.f32.mrf.mxu0
    %v2584 = vadd.f32 %v2295, %v2583
    %v2585 = vpop.f32.mrf.mxu0
    %v2586 = vpop.f32.mrf.mxu0
    %v2587 = vadd.f32 %v2298, %v2586
    %v2588 = vpop.f32.mrf.mxu0
    %2589 = vmatprep.mubr.bf16.mxu0 %v1971
    %2590 = vmatmul.mubr.bf16.gmra.mxu0 %v1970
    %v2591 = vpop.f32.mrf.mxu0
    %v2592 = vadd.f32 %v2303, %v2591
    %v2593 = vpop.f32.mrf.mxu0
    %v2594 = vpop.f32.mrf.mxu0
    %v2595 = vadd.f32 %v2306, %v2594
    %v2596 = vpop.f32.mrf.mxu0
    %2597 = vmatprep.mubr.bf16.mxu0 %v1975
    %2598 = vmatmul.mubr.bf16.gmra.mxu0 %v1974
    %v2599 = vpop.f32.mrf.mxu0
    %v2600 = vadd.f32 %v2311, %v2599
    %v2601 = vpop.f32.mrf.mxu0
    %v2602 = vpop.f32.mrf.mxu0
    %v2603 = vadd.f32 %v2314, %v2602
    %v2604 = vpop.f32.mrf.mxu0
    %2605 = vmatprep.mubr.bf16.mxu0 %v1979
    %2606 = vmatmul.mubr.bf16.gmra.mxu0 %v1978
    %v2607 = vpop.f32.mrf.mxu0
    %v2608 = vadd.f32 %v2319, %v2607
    %v2609 = vpop.f32.mrf.mxu0
    %v2610 = vpop.f32.mrf.mxu0
    %v2611 = vadd.f32 %v2322, %v2610
    %v2612 = vpop.f32.mrf.mxu0
    %2613 = vmatprep.mubr.bf16.mxu0 %v1983
    %2614 = vmatmul.mubr.bf16.gmra.mxu0 %v1982
    %v2615 = vpop.f32.mrf.mxu0
    %v2616 = vadd.f32 %v2327, %v2615
    %v2617 = vpop.f32.mrf.mxu0
    %v2618 = vpop.f32.mrf.mxu0
    %v2619 = vadd.f32 %v2330, %v2618
    %v2620 = vpop.f32.mrf.mxu0
    %2621 = vmatprep.mubr.bf16.mxu0 %v1987
    %2622 = vmatmul.mubr.bf16.gmra.mxu0 %v1986
    %v2623 = vpop.f32.mrf.mxu0
    %v2624 = vadd.f32 %v2335, %v2623
    %v2625 = vpop.f32.mrf.mxu0
    %v2626 = vpop.f32.mrf.mxu0
    %v2627 = vadd.f32 %v2338, %v2626
    %v2628 = vpop.f32.mrf.mxu0
    %2629 = vmatprep.mubr.bf16.mxu0 %v1991
    %2630 = vmatmul.mubr.bf16.gmra.mxu0 %v1990
    %v2631 = vpop.f32.mrf.mxu0
    %v2632 = vadd.f32 %v2343, %v2631
    %v2633 = vpop.f32.mrf.mxu0
    %v2634 = vpop.f32.mrf.mxu0
    %v2635 = vadd.f32 %v2346, %v2634
    %v2636 = vpop.f32.mrf.mxu0
    %2637 = vmatprep.mubr.bf16.mxu0 %v1995
    %2638 = vmatmul.mubr.bf16.gmra.mxu0 %v1994
    %v2639 = vpop.f32.mrf.mxu0
    %v2640 = vadd.f32 %v2351, %v2639
    %v2641 = vpop.f32.mrf.mxu0
    %v2642 = vpop.f32.mrf.mxu0
    %v2643 = vadd.f32 %v2354, %v2642
    %v2644 = vpop.f32.mrf.mxu0
    %2645 = vmatprep.mubr.bf16.mxu0 %v1999
    %2646 = vmatmul.mubr.bf16.gmra.mxu0 %v1998
    %v2647 = vpop.f32.mrf.mxu0
    %v2648 = vadd.f32 %v2359, %v2647
    %v2649 = vpop.f32.mrf.mxu0
    %v2650 = vpop.f32.mrf.mxu0
    %v2651 = vadd.f32 %v2362, %v2650
    %v2652 = vpop.f32.mrf.mxu0
    %2653 = vmatprep.mubr.bf16.mxu0 %v2003
    %2654 = vmatmul.mubr.bf16.gmra.mxu0 %v2002
    %v2655 = vpop.f32.mrf.mxu0
    %v2656 = vadd.f32 %v2367, %v2655
    %v2657 = vpop.f32.mrf.mxu0
    %v2658 = vpop.f32.mrf.mxu0
    %v2659 = vadd.f32 %v2370, %v2658
    %v2660 = vpop.f32.mrf.mxu0
    %2661 = vmatprep.mubr.bf16.mxu0 %v2007
    %2662 = vmatmul.mubr.bf16.gmra.mxu0 %v2006
    %v2663 = vpop.f32.mrf.mxu0
    %v2664 = vadd.f32 %v2375, %v2663
    %v2665 = vpop.f32.mrf.mxu0
    %v2666 = vpop.f32.mrf.mxu0
    %v2667 = vadd.f32 %v2378, %v2666
    %v2668 = vpop.f32.mrf.mxu0
    %2669 = vmatprep.mubr.bf16.mxu0 %v2011
    %2670 = vmatmul.mubr.bf16.gmra.mxu0 %v2010
    %v2671 = vpop.f32.mrf.mxu0
    %v2672 = vadd.f32 %v2383, %v2671
    %v2673 = vpop.f32.mrf.mxu0
    %v2674 = vpop.f32.mrf.mxu0
    %v2675 = vadd.f32 %v2386, %v2674
    %v2676 = vpop.f32.mrf.mxu0
    %2677 = vmatprep.mubr.bf16.mxu0 %v2015
    %2678 = vmatmul.mubr.bf16.gmra.mxu0 %v2014
    %v2679 = vpop.f32.mrf.mxu0
    %v2680 = vadd.f32 %v2391, %v2679
    %v2681 = vpop.f32.mrf.mxu0
    %v2682 = vpop.f32.mrf.mxu0
    %v2683 = vadd.f32 %v2394, %v2682
    %v2684 = vpop.f32.mrf.mxu0
    %2685 = vmatprep.mubr.bf16.mxu0 %v2019
    %2686 = vmatmul.mubr.bf16.gmra.mxu0 %v2018
    %v2687 = vpop.f32.mrf.mxu0
    %v2688 = vadd.f32 %v2399, %v2687
    %v2689 = vpop.f32.mrf.mxu0
    %v2690 = vpop.f32.mrf.mxu0
    %v2691 = vadd.f32 %v2402, %v2690
    %v2692 = vpop.f32.mrf.mxu0
    %2693 = vmatprep.mubr.bf16.mxu0 %v2023
    %2694 = vmatmul.mubr.bf16.gmra.mxu0 %v2022
    %v2695 = vpop.f32.mrf.mxu0
    %v2696 = vadd.f32 %v2407, %v2695
    %v2697 = vpop.f32.mrf.mxu0
    %v2698 = vpop.f32.mrf.mxu0
    %v2699 = vadd.f32 %v2410, %v2698
    %v2700 = vpop.f32.mrf.mxu0
    %2701 = vmatprep.mubr.bf16.mxu0 %v2027
    %2702 = vmatmul.mubr.bf16.gmra.mxu0 %v2026
    %v2703 = vpop.f32.mrf.mxu0
    %v2704 = vadd.f32 %v2415, %v2703
    %v2705 = vpop.f32.mrf.mxu0
    %v2706 = vpop.f32.mrf.mxu0
    %v2707 = vadd.f32 %v2418, %v2706
    %v2708 = vpop.f32.mrf.mxu0
    %2709 = vmatprep.mubr.bf16.mxu0 %v2031
    %2710 = vmatmul.mubr.bf16.gmra.mxu0 %v2030
    %v2711 = vpop.f32.mrf.mxu0
    %v2712 = vadd.f32 %v2423, %v2711
    %v2713 = vpop.f32.mrf.mxu0
    %v2714 = vpop.f32.mrf.mxu0
    %v2715 = vadd.f32 %v2426, %v2714
    %v2716 = vpop.f32.mrf.mxu0
    %2717 = vmatprep.mubr.bf16.mxu0 %v2035
    %2718 = vmatmul.mubr.bf16.gmra.mxu0 %v2034
    %v2719 = vpop.f32.mrf.mxu0
    %v2720 = vadd.f32 %v2431, %v2719
    %v2721 = vpop.f32.mrf.mxu0
    %v2722 = vpop.f32.mrf.mxu0
    %v2723 = vadd.f32 %v2434, %v2722
    %v2724 = vpop.f32.mrf.mxu0
    %2725 = vmatprep.mubr.bf16.mxu0 %v2039
    %2726 = vmatmul.mubr.bf16.gmra.mxu0 %v2038
    %v2727 = vpop.f32.mrf.mxu0
    %v2728 = vadd.f32 %v2439, %v2727
    %v2729 = vpop.f32.mrf.mxu0
    %v2730 = vpop.f32.mrf.mxu0
    %v2731 = vadd.f32 %v2442, %v2730
    %v2732 = vpop.f32.mrf.mxu0
    %2733 = vmatprep.mubr.bf16.mxu0 %v2043
    %2734 = vmatmul.mubr.bf16.gmra.mxu0 %v2042
    %v2735 = vpop.f32.mrf.mxu0
    %v2736 = vadd.f32 %v2447, %v2735
    %v2737 = vpop.f32.mrf.mxu0
    %v2738 = vpop.f32.mrf.mxu0
    %v2739 = vadd.f32 %v2450, %v2738
    %v2740 = vpop.f32.mrf.mxu0
    %2741 = vmatprep.mubr.bf16.mxu0 %v2047
    %2742 = vmatmul.mubr.bf16.gmra.mxu0 %v2046
    %v2743 = vpop.f32.mrf.mxu0
    %v2744 = vadd.f32 %v2455, %v2743
    %v2745 = vpop.f32.mrf.mxu0
    %v2746 = vpop.f32.mrf.mxu0
    %v2747 = vadd.f32 %v2458, %v2746
    %v2748 = vpop.f32.mrf.mxu0
    %2749 = vmatprep.mubr.bf16.mxu0 %v2051
    %2750 = vmatmul.mubr.bf16.gmra.mxu0 %v2050
    %v2751 = vpop.f32.mrf.mxu0
    %v2752 = vadd.f32 %v2463, %v2751
    %v2753 = vpop.f32.mrf.mxu0
    %v2754 = vpop.f32.mrf.mxu0
    %v2755 = vadd.f32 %v2466, %v2754
    %v2756 = vpop.f32.mrf.mxu0
    %2757 = vdwg.mxu0
    %v2758 = vmax.f32 %v2504, 0.0
    %v2759 = vmax.f32 %v2507, 0.0
    %v2760 = vmax.f32 %v2512, 0.0
    %v2761 = vmax.f32 %v2515, 0.0
    %v2762 = vmax.f32 %v2520, 0.0
    %v2763 = vmax.f32 %v2523, 0.0
    %v2764 = vmax.f32 %v2528, 0.0
    %v2765 = vmax.f32 %v2531, 0.0
    %v2766 = vmax.f32 %v2536, 0.0
    %v2767 = vmax.f32 %v2539, 0.0
    %v2768 = vmax.f32 %v2544, 0.0
    %v2769 = vmax.f32 %v2547, 0.0
    %v2770 = vmax.f32 %v2552, 0.0
    %v2771 = vmax.f32 %v2555, 0.0
    %v2772 = vmax.f32 %v2560, 0.0
    %v2773 = vmax.f32 %v2563, 0.0
    %v2774 = vmax.f32 %v2568, 0.0
    %v2775 = vmax.f32 %v2571, 0.0
    %v2776 = vmax.f32 %v2576, 0.0
    %v2777 = vmax.f32 %v2579, 0.0
    %v2778 = vmax.f32 %v2584, 0.0
    %v2779 = vmax.f32 %v2587, 0.0
    %v2780 = vmax.f32 %v2592, 0.0
    %v2781 = vmax.f32 %v2595, 0.0
    %v2782 = vmax.f32 %v2600, 0.0
    %v2783 = vmax.f32 %v2603, 0.0
    %v2784 = vmax.f32 %v2608, 0.0
    %v2785 = vmax.f32 %v2611, 0.0
    %v2786 = vmax.f32 %v2616, 0.0
    %v2787 = vmax.f32 %v2619, 0.0
    %v2788 = vmax.f32 %v2624, 0.0
    %v2789 = vmax.f32 %v2627, 0.0
    %v2790 = vmax.f32 %v2632, 0.0
    %v2791 = vmax.f32 %v2635, 0.0
    %v2792 = vmax.f32 %v2640, 0.0
    %v2793 = vmax.f32 %v2643, 0.0
    %v2794 = vmax.f32 %v2648, 0.0
    %v2795 = vmax.f32 %v2651, 0.0
    %v2796 = vmax.f32 %v2656, 0.0
    %v2797 = vmax.f32 %v2659, 0.0
    %v2798 = vmax.f32 %v2664, 0.0
    %v2799 = vmax.f32 %v2667, 0.0
    %v2800 = vmax.f32 %v2672, 0.0
    %v2801 = vmax.f32 %v2675, 0.0
    %v2802 = vmax.f32 %v2680, 0.0
    %v2803 = vmax.f32 %v2683, 0.0
    %v2804 = vmax.f32 %v2688, 0.0
    %v2805 = vmax.f32 %v2691, 0.0
    %v2806 = vmax.f32 %v2696, 0.0
    %v2807 = vmax.f32 %v2699, 0.0
    %v2808 = vmax.f32 %v2704, 0.0
    %v2809 = vmax.f32 %v2707, 0.0
    %v2810 = vmax.f32 %v2712, 0.0
    %v2811 = vmax.f32 %v2715, 0.0
    %v2812 = vmax.f32 %v2720, 0.0
    %v2813 = vmax.f32 %v2723, 0.0
    %v2814 = vmax.f32 %v2728, 0.0
    %v2815 = vmax.f32 %v2731, 0.0
    %v2816 = vmax.f32 %v2736, 0.0
    %v2817 = vmax.f32 %v2739, 0.0
    %v2818 = vmax.f32 %v2744, 0.0
    %v2819 = vmax.f32 %v2747, 0.0
    %v2820 = vmax.f32 %v2752, 0.0
    %v2821 = vmax.f32 %v2755, 0.0
    %v2822 = vpack.c.bf16 %v2759, %v2758
    %v2823 = vpack.c.bf16 %v2761, %v2760
    %v2824 = vpack.c.bf16 %v2763, %v2762
    %v2825 = vpack.c.bf16 %v2765, %v2764
    %v2826 = vpack.c.bf16 %v2767, %v2766
    %v2827 = vpack.c.bf16 %v2769, %v2768
    %v2828 = vpack.c.bf16 %v2771, %v2770
    %v2829 = vpack.c.bf16 %v2773, %v2772
    %v2830 = vpack.c.bf16 %v2775, %v2774
    %v2831 = vpack.c.bf16 %v2777, %v2776
    %v2832 = vpack.c.bf16 %v2779, %v2778
    %v2833 = vpack.c.bf16 %v2781, %v2780
    %v2834 = vpack.c.bf16 %v2783, %v2782
    %v2835 = vpack.c.bf16 %v2785, %v2784
    %v2836 = vpack.c.bf16 %v2787, %v2786
    %v2837 = vpack.c.bf16 %v2789, %v2788
    %v2838 = vpack.c.bf16 %v2791, %v2790
    %v2839 = vpack.c.bf16 %v2793, %v2792
    %v2840 = vpack.c.bf16 %v2795, %v2794
    %v2841 = vpack.c.bf16 %v2797, %v2796
    %v2842 = vpack.c.bf16 %v2799, %v2798
    %v2843 = vpack.c.bf16 %v2801, %v2800
    %v2844 = vpack.c.bf16 %v2803, %v2802
    %v2845 = vpack.c.bf16 %v2805, %v2804
    %v2846 = vpack.c.bf16 %v2807, %v2806
    %v2847 = vpack.c.bf16 %v2809, %v2808
    %v2848 = vpack.c.bf16 %v2811, %v2810
    %v2849 = vpack.c.bf16 %v2813, %v2812
    %v2850 = vpack.c.bf16 %v2815, %v2814
    %v2851 = vpack.c.bf16 %v2817, %v2816
    %v2852 = vpack.c.bf16 %v2819, %v2818
    %v2853 = vpack.c.bf16 %v2821, %v2820
    %v2854 = vld [vmem:[#allocation5] sm:$0xff]
    %v2855 = vld [vmem:[#allocation5 + $0x8] sm:$0xff]
    %v2856 = vld [vmem:[#allocation5 + $0x10] sm:$0xff]
    %v2857 = vld [vmem:[#allocation5 + $0x18] sm:$0xff]
    %v2858 = vld [vmem:[#allocation5 + $0x20] sm:$0xff]
    %v2859 = vld [vmem:[#allocation5 + $0x28] sm:$0xff]
    %v2860 = vld [vmem:[#allocation5 + $0x30] sm:$0xff]
    %v2861 = vld [vmem:[#allocation5 + $0x38] sm:$0xff]
    %v2862 = vld [vmem:[#allocation5 + $0x40] sm:$0xff]
    %v2863 = vld [vmem:[#allocation5 + $0x48] sm:$0xff]
    %v2864 = vld [vmem:[#allocation5 + $0x50] sm:$0xff]
    %v2865 = vld [vmem:[#allocation5 + $0x58] sm:$0xff]
    %v2866 = vld [vmem:[#allocation5 + $0x60] sm:$0xff]
    %v2867 = vld [vmem:[#allocation5 + $0x68] sm:$0xff]
    %v2868 = vld [vmem:[#allocation5 + $0x70] sm:$0xff]
    %v2869 = vld [vmem:[#allocation5 + $0x78] sm:$0xff]
    %v2870 = vld [vmem:[#allocation5 + $0x80] sm:$0xff]
    %v2871 = vld [vmem:[#allocation5 + $0x88] sm:$0xff]
    %v2872 = vld [vmem:[#allocation5 + $0x90] sm:$0xff]
    %v2873 = vld [vmem:[#allocation5 + $0x98] sm:$0xff]
    %v2874 = vld [vmem:[#allocation5 + $0xa0] sm:$0xff]
    %v2875 = vld [vmem:[#allocation5 + $0xa8] sm:$0xff]
    %v2876 = vld [vmem:[#allocation5 + $0xb0] sm:$0xff]
    %v2877 = vld [vmem:[#allocation5 + $0xb8] sm:$0xff]
    %v2878 = vld [vmem:[#allocation5 + $0xc0] sm:$0xff]
    %v2879 = vld [vmem:[#allocation5 + $0xc8] sm:$0xff]
    %v2880 = vld [vmem:[#allocation5 + $0xd0] sm:$0xff]
    %v2881 = vld [vmem:[#allocation5 + $0xd8] sm:$0xff]
    %v2882 = vld [vmem:[#allocation5 + $0xe0] sm:$0xff]
    %v2883 = vld [vmem:[#allocation5 + $0xe8] sm:$0xff]
    %v2884 = vld [vmem:[#allocation5 + $0xf0] sm:$0xff]
    %v2885 = vld [vmem:[#allocation5 + $0xf8] sm:$0xff]
    %v2886 = vld [vmem:[#allocation5 + $0x100] sm:$0xff]
    %v2887 = vld [vmem:[#allocation5 + $0x108] sm:$0xff]
    %v2888 = vld [vmem:[#allocation5 + $0x110] sm:$0xff]
    %v2889 = vld [vmem:[#allocation5 + $0x118] sm:$0xff]
    %v2890 = vld [vmem:[#allocation5 + $0x120] sm:$0xff]
    %v2891 = vld [vmem:[#allocation5 + $0x128] sm:$0xff]
    %v2892 = vld [vmem:[#allocation5 + $0x130] sm:$0xff]
    %v2893 = vld [vmem:[#allocation5 + $0x138] sm:$0xff]
    %v2894 = vld [vmem:[#allocation5 + $0x140] sm:$0xff]
    %v2895 = vld [vmem:[#allocation5 + $0x148] sm:$0xff]
    %v2896 = vld [vmem:[#allocation5 + $0x150] sm:$0xff]
    %v2897 = vld [vmem:[#allocation5 + $0x158] sm:$0xff]
    %v2898 = vld [vmem:[#allocation5 + $0x160] sm:$0xff]
    %v2899 = vld [vmem:[#allocation5 + $0x168] sm:$0xff]
    %v2900 = vld [vmem:[#allocation5 + $0x170] sm:$0xff]
    %v2901 = vld [vmem:[#allocation5 + $0x178] sm:$0xff]
    %v2902 = vld [vmem:[#allocation5 + $0x180] sm:$0xff]
    %v2903 = vld [vmem:[#allocation5 + $0x188] sm:$0xff]
    %v2904 = vld [vmem:[#allocation5 + $0x190] sm:$0xff]
    %v2905 = vld [vmem:[#allocation5 + $0x198] sm:$0xff]
    %v2906 = vld [vmem:[#allocation5 + $0x1a0] sm:$0xff]
    %v2907 = vld [vmem:[#allocation5 + $0x1a8] sm:$0xff]
    %v2908 = vld [vmem:[#allocation5 + $0x1b0] sm:$0xff]
    %v2909 = vld [vmem:[#allocation5 + $0x1b8] sm:$0xff]
    %v2910 = vld [vmem:[#allocation5 + $0x1c0] sm:$0xff]
    %v2911 = vld [vmem:[#allocation5 + $0x1c8] sm:$0xff]
    %v2912 = vld [vmem:[#allocation5 + $0x1d0] sm:$0xff]
    %v2913 = vld [vmem:[#allocation5 + $0x1d8] sm:$0xff]
    %v2914 = vld [vmem:[#allocation5 + $0x1e0] sm:$0xff]
    %v2915 = vld [vmem:[#allocation5 + $0x1e8] sm:$0xff]
    %v2916 = vld [vmem:[#allocation5 + $0x1f0] sm:$0xff]
    %v2917 = vld [vmem:[#allocation5 + $0x1f8] sm:$0xff]
    %v2918 = vld [vmem:[#allocation5 + $0x200] sm:$0xff]
    %v2919 = vld [vmem:[#allocation5 + $0x208] sm:$0xff]
    %v2920 = vld [vmem:[#allocation5 + $0x210] sm:$0xff]
    %v2921 = vld [vmem:[#allocation5 + $0x218] sm:$0xff]
    %v2922 = vld [vmem:[#allocation5 + $0x220] sm:$0xff]
    %v2923 = vld [vmem:[#allocation5 + $0x228] sm:$0xff]
    %v2924 = vld [vmem:[#allocation5 + $0x230] sm:$0xff]
    %v2925 = vld [vmem:[#allocation5 + $0x238] sm:$0xff]
    %v2926 = vld [vmem:[#allocation5 + $0x240] sm:$0xff]
    %v2927 = vld [vmem:[#allocation5 + $0x248] sm:$0xff]
    %v2928 = vld [vmem:[#allocation5 + $0x250] sm:$0xff]
    %v2929 = vld [vmem:[#allocation5 + $0x258] sm:$0xff]
    %v2930 = vld [vmem:[#allocation5 + $0x260] sm:$0xff]
    %v2931 = vld [vmem:[#allocation5 + $0x268] sm:$0xff]
    %v2932 = vld [vmem:[#allocation5 + $0x270] sm:$0xff]
    %v2933 = vld [vmem:[#allocation5 + $0x278] sm:$0xff]
    %v2934 = vld [vmem:[#allocation5 + $0x280] sm:$0xff]
    %v2935 = vld [vmem:[#allocation5 + $0x288] sm:$0xff]
    %v2936 = vld [vmem:[#allocation5 + $0x290] sm:$0xff]
    %v2937 = vld [vmem:[#allocation5 + $0x298] sm:$0xff]
    %v2938 = vld [vmem:[#allocation5 + $0x2a0] sm:$0xff]
    %v2939 = vld [vmem:[#allocation5 + $0x2a8] sm:$0xff]
    %v2940 = vld [vmem:[#allocation5 + $0x2b0] sm:$0xff]
    %v2941 = vld [vmem:[#allocation5 + $0x2b8] sm:$0xff]
    %v2942 = vld [vmem:[#allocation5 + $0x2c0] sm:$0xff]
    %v2943 = vld [vmem:[#allocation5 + $0x2c8] sm:$0xff]
    %v2944 = vld [vmem:[#allocation5 + $0x2d0] sm:$0xff]
    %v2945 = vld [vmem:[#allocation5 + $0x2d8] sm:$0xff]
    %v2946 = vld [vmem:[#allocation5 + $0x2e0] sm:$0xff]
    %v2947 = vld [vmem:[#allocation5 + $0x2e8] sm:$0xff]
    %v2948 = vld [vmem:[#allocation5 + $0x2f0] sm:$0xff]
    %v2949 = vld [vmem:[#allocation5 + $0x2f8] sm:$0xff]
    %v2950 = vld [vmem:[#allocation5 + $0x300] sm:$0xff]
    %v2951 = vld [vmem:[#allocation5 + $0x308] sm:$0xff]
    %v2952 = vld [vmem:[#allocation5 + $0x310] sm:$0xff]
    %v2953 = vld [vmem:[#allocation5 + $0x318] sm:$0xff]
    %v2954 = vld [vmem:[#allocation5 + $0x320] sm:$0xff]
    %v2955 = vld [vmem:[#allocation5 + $0x328] sm:$0xff]
    %v2956 = vld [vmem:[#allocation5 + $0x330] sm:$0xff]
    %v2957 = vld [vmem:[#allocation5 + $0x338] sm:$0xff]
    %v2958 = vld [vmem:[#allocation5 + $0x340] sm:$0xff]
    %v2959 = vld [vmem:[#allocation5 + $0x348] sm:$0xff]
    %v2960 = vld [vmem:[#allocation5 + $0x350] sm:$0xff]
    %v2961 = vld [vmem:[#allocation5 + $0x358] sm:$0xff]
    %v2962 = vld [vmem:[#allocation5 + $0x360] sm:$0xff]
    %v2963 = vld [vmem:[#allocation5 + $0x368] sm:$0xff]
    %v2964 = vld [vmem:[#allocation5 + $0x370] sm:$0xff]
    %v2965 = vld [vmem:[#allocation5 + $0x378] sm:$0xff]
    %v2966 = vld [vmem:[#allocation5 + $0x380] sm:$0xff]
    %v2967 = vld [vmem:[#allocation5 + $0x388] sm:$0xff]
    %v2968 = vld [vmem:[#allocation5 + $0x390] sm:$0xff]
    %v2969 = vld [vmem:[#allocation5 + $0x398] sm:$0xff]
    %v2970 = vld [vmem:[#allocation5 + $0x3a0] sm:$0xff]
    %v2971 = vld [vmem:[#allocation5 + $0x3a8] sm:$0xff]
    %v2972 = vld [vmem:[#allocation5 + $0x3b0] sm:$0xff]
    %v2973 = vld [vmem:[#allocation5 + $0x3b8] sm:$0xff]
    %v2974 = vld [vmem:[#allocation5 + $0x3c0] sm:$0xff]
    %v2975 = vld [vmem:[#allocation5 + $0x3c8] sm:$0xff]
    %v2976 = vld [vmem:[#allocation5 + $0x3d0] sm:$0xff]
    %v2977 = vld [vmem:[#allocation5 + $0x3d8] sm:$0xff]
    %v2978 = vld [vmem:[#allocation5 + $0x3e0] sm:$0xff]
    %v2979 = vld [vmem:[#allocation5 + $0x3e8] sm:$0xff]
    %v2980 = vld [vmem:[#allocation5 + $0x3f0] sm:$0xff]
    %v2981 = vld [vmem:[#allocation5 + $0x3f8] sm:$0xff]
    %2982 = vset.pattern.permute.xlu0 2
    %2983 = vperm.xlu0 %2982, %v66
    %v2984 = vpop.permute.xlu0 %2983
    %2986 = vset.pattern.permute.xlu0 2
    %2987 = vperm.xlu0 %2986, %v67
    %v2988 = vpop.permute.xlu0 %2987
    %2990 = vset.pattern.permute.xlu0 2
    %2991 = vperm.xlu0 %2990, %v68
    %v2992 = vpop.permute.xlu0 %2991
    %2994 = vset.pattern.permute.xlu0 2
    %2995 = vperm.xlu0 %2994, %v69
    %v2996 = vpop.permute.xlu0 %2995
    %2998 = vset.pattern.permute.xlu0 2
    %2999 = vperm.xlu0 %2998, %v70
    %v3000 = vpop.permute.xlu0 %2999
    %3002 = vset.pattern.permute.xlu0 2
    %3003 = vperm.xlu0 %3002, %v71
    %v3004 = vpop.permute.xlu0 %3003
    %3006 = vset.pattern.permute.xlu0 2
    %3007 = vperm.xlu0 %3006, %v72
    %v3008 = vpop.permute.xlu0 %3007
    %3010 = vset.pattern.permute.xlu0 2
    %3011 = vperm.xlu0 %3010, %v73
    %v3012 = vpop.permute.xlu0 %3011
    %3014 = vset.pattern.permute.xlu0 2
    %3015 = vperm.xlu0 %3014, %v74
    %v3016 = vpop.permute.xlu0 %3015
    %3018 = vset.pattern.permute.xlu0 2
    %3019 = vperm.xlu0 %3018, %v75
    %v3020 = vpop.permute.xlu0 %3019
    %3022 = vset.pattern.permute.xlu0 2
    %3023 = vperm.xlu0 %3022, %v76
    %v3024 = vpop.permute.xlu0 %3023
    %3026 = vset.pattern.permute.xlu0 2
    %3027 = vperm.xlu0 %3026, %v77
    %v3028 = vpop.permute.xlu0 %3027
    %3030 = vset.pattern.permute.xlu0 2
    %3031 = vperm.xlu0 %3030, %v78
    %v3032 = vpop.permute.xlu0 %3031
    %3034 = vset.pattern.permute.xlu0 2
    %3035 = vperm.xlu0 %3034, %v79
    %v3036 = vpop.permute.xlu0 %3035
    %3038 = vset.pattern.permute.xlu0 2
    %3039 = vperm.xlu0 %3038, %v80
    %v3040 = vpop.permute.xlu0 %3039
    %3042 = vset.pattern.permute.xlu0 2
    %3043 = vperm.xlu0 %3042, %v81
    %v3044 = vpop.permute.xlu0 %3043
    %3046 = vset.pattern.permute.xlu0 2
    %3047 = vperm.xlu0 %3046, %v82
    %v3048 = vpop.permute.xlu0 %3047
    %3050 = vset.pattern.permute.xlu0 2
    %3051 = vperm.xlu0 %3050, %v83
    %v3052 = vpop.permute.xlu0 %3051
    %3054 = vset.pattern.permute.xlu0 2
    %3055 = vperm.xlu0 %3054, %v84
    %v3056 = vpop.permute.xlu0 %3055
    %3058 = vset.pattern.permute.xlu0 2
    %3059 = vperm.xlu0 %3058, %v85
    %v3060 = vpop.permute.xlu0 %3059
    %3062 = vset.pattern.permute.xlu0 2
    %3063 = vperm.xlu0 %3062, %v86
    %v3064 = vpop.permute.xlu0 %3063
    %3066 = vset.pattern.permute.xlu0 2
    %3067 = vperm.xlu0 %3066, %v87
    %v3068 = vpop.permute.xlu0 %3067
    %3070 = vset.pattern.permute.xlu0 2
    %3071 = vperm.xlu0 %3070, %v88
    %v3072 = vpop.permute.xlu0 %3071
    %3074 = vset.pattern.permute.xlu0 2
    %3075 = vperm.xlu0 %3074, %v89
    %v3076 = vpop.permute.xlu0 %3075
    %3078 = vset.pattern.permute.xlu0 2
    %3079 = vperm.xlu0 %3078, %v90
    %v3080 = vpop.permute.xlu0 %3079
    %3082 = vset.pattern.permute.xlu0 2
    %3083 = vperm.xlu0 %3082, %v91
    %v3084 = vpop.permute.xlu0 %3083
    %3086 = vset.pattern.permute.xlu0 2
    %3087 = vperm.xlu0 %3086, %v92
    %v3088 = vpop.permute.xlu0 %3087
    %3090 = vset.pattern.permute.xlu0 2
    %3091 = vperm.xlu0 %3090, %v93
    %v3092 = vpop.permute.xlu0 %3091
    %3094 = vset.pattern.permute.xlu0 2
    %3095 = vperm.xlu0 %3094, %v94
    %v3096 = vpop.permute.xlu0 %3095
    %3098 = vset.pattern.permute.xlu0 2
    %3099 = vperm.xlu0 %3098, %v95
    %v3100 = vpop.permute.xlu0 %3099
    %3102 = vset.pattern.permute.xlu0 2
    %3103 = vperm.xlu0 %3102, %v96
    %v3104 = vpop.permute.xlu0 %3103
    %3106 = vset.pattern.permute.xlu0 2
    %3107 = vperm.xlu0 %3106, %v97
    %v3108 = vpop.permute.xlu0 %3107
    %3110 = vset.pattern.permute.xlu0 2
    %3111 = vperm.xlu0 %3110, %v98
    %v3112 = vpop.permute.xlu0 %3111
    %3114 = vset.pattern.permute.xlu0 2
    %3115 = vperm.xlu0 %3114, %v99
    %v3116 = vpop.permute.xlu0 %3115
    %3118 = vset.pattern.permute.xlu0 2
    %3119 = vperm.xlu0 %3118, %v100
    %v3120 = vpop.permute.xlu0 %3119
    %3122 = vset.pattern.permute.xlu0 2
    %3123 = vperm.xlu0 %3122, %v101
    %v3124 = vpop.permute.xlu0 %3123
    %3126 = vset.pattern.permute.xlu0 2
    %3127 = vperm.xlu0 %3126, %v102
    %v3128 = vpop.permute.xlu0 %3127
    %3130 = vset.pattern.permute.xlu0 2
    %3131 = vperm.xlu0 %3130, %v103
    %v3132 = vpop.permute.xlu0 %3131
    %3134 = vset.pattern.permute.xlu0 2
    %3135 = vperm.xlu0 %3134, %v104
    %v3136 = vpop.permute.xlu0 %3135
    %3138 = vset.pattern.permute.xlu0 2
    %3139 = vperm.xlu0 %3138, %v105
    %v3140 = vpop.permute.xlu0 %3139
    %3142 = vset.pattern.permute.xlu0 2
    %3143 = vperm.xlu0 %3142, %v106
    %v3144 = vpop.permute.xlu0 %3143
    %3146 = vset.pattern.permute.xlu0 2
    %3147 = vperm.xlu0 %3146, %v107
    %v3148 = vpop.permute.xlu0 %3147
    %3150 = vset.pattern.permute.xlu0 2
    %3151 = vperm.xlu0 %3150, %v108
    %v3152 = vpop.permute.xlu0 %3151
    %3154 = vset.pattern.permute.xlu0 2
    %3155 = vperm.xlu0 %3154, %v109
    %v3156 = vpop.permute.xlu0 %3155
    %3158 = vset.pattern.permute.xlu0 2
    %3159 = vperm.xlu0 %3158, %v110
    %v3160 = vpop.permute.xlu0 %3159
    %3162 = vset.pattern.permute.xlu0 2
    %3163 = vperm.xlu0 %3162, %v111
    %v3164 = vpop.permute.xlu0 %3163
    %3166 = vset.pattern.permute.xlu0 2
    %3167 = vperm.xlu0 %3166, %v112
    %v3168 = vpop.permute.xlu0 %3167
    %3170 = vset.pattern.permute.xlu0 2
    %3171 = vperm.xlu0 %3170, %v113
    %v3172 = vpop.permute.xlu0 %3171
    %3174 = vset.pattern.permute.xlu0 2
    %3175 = vperm.xlu0 %3174, %v114
    %v3176 = vpop.permute.xlu0 %3175
    %3178 = vset.pattern.permute.xlu0 2
    %3179 = vperm.xlu0 %3178, %v115
    %v3180 = vpop.permute.xlu0 %3179
    %3182 = vset.pattern.permute.xlu0 2
    %3183 = vperm.xlu0 %3182, %v116
    %v3184 = vpop.permute.xlu0 %3183
    %3186 = vset.pattern.permute.xlu0 2
    %3187 = vperm.xlu0 %3186, %v117
    %v3188 = vpop.permute.xlu0 %3187
    %3190 = vset.pattern.permute.xlu0 2
    %3191 = vperm.xlu0 %3190, %v118
    %v3192 = vpop.permute.xlu0 %3191
    %3194 = vset.pattern.permute.xlu0 2
    %3195 = vperm.xlu0 %3194, %v119
    %v3196 = vpop.permute.xlu0 %3195
    %3198 = vset.pattern.permute.xlu0 2
    %3199 = vperm.xlu0 %3198, %v120
    %v3200 = vpop.permute.xlu0 %3199
    %3202 = vset.pattern.permute.xlu0 2
    %3203 = vperm.xlu0 %3202, %v121
    %v3204 = vpop.permute.xlu0 %3203
    %3206 = vset.pattern.permute.xlu0 2
    %3207 = vperm.xlu0 %3206, %v122
    %v3208 = vpop.permute.xlu0 %3207
    %3210 = vset.pattern.permute.xlu0 2
    %3211 = vperm.xlu0 %3210, %v123
    %v3212 = vpop.permute.xlu0 %3211
    %3214 = vset.pattern.permute.xlu0 2
    %3215 = vperm.xlu0 %3214, %v124
    %v3216 = vpop.permute.xlu0 %3215
    %3218 = vset.pattern.permute.xlu0 2
    %3219 = vperm.xlu0 %3218, %v125
    %v3220 = vpop.permute.xlu0 %3219
    %3222 = vset.pattern.permute.xlu0 2
    %3223 = vperm.xlu0 %3222, %v126
    %v3224 = vpop.permute.xlu0 %3223
    %3226 = vset.pattern.permute.xlu0 2
    %3227 = vperm.xlu0 %3226, %v127
    %v3228 = vpop.permute.xlu0 %3227
    %3230 = vset.pattern.permute.xlu0 2
    %3231 = vperm.xlu0 %3230, %v128
    %v3232 = vpop.permute.xlu0 %3231
    %3234 = vset.pattern.permute.xlu0 2
    %3235 = vperm.xlu0 %3234, %v129
    %v3236 = vpop.permute.xlu0 %3235
    %v3366 = vunpack.c.l.b16 %v2854
    %v3367 = vunpack.c.h.b16 %v2854
    %v3368 = vunpack.c.l.b16 %v2855
    %v3369 = vunpack.c.h.b16 %v2855
    %v3370 = vunpack.c.l.b16 %v2856
    %v3371 = vunpack.c.h.b16 %v2856
    %v3372 = vunpack.c.l.b16 %v2857
    %v3373 = vunpack.c.h.b16 %v2857
    %v3374 = vunpack.c.l.b16 %v2858
    %v3375 = vunpack.c.h.b16 %v2858
    %v3376 = vunpack.c.l.b16 %v2859
    %v3377 = vunpack.c.h.b16 %v2859
    %v3378 = vunpack.c.l.b16 %v2860
    %v3379 = vunpack.c.h.b16 %v2860
    %v3380 = vunpack.c.l.b16 %v2861
    %v3381 = vunpack.c.h.b16 %v2861
    %v3382 = vunpack.c.l.b16 %v2862
    %v3383 = vunpack.c.h.b16 %v2862
    %v3384 = vunpack.c.l.b16 %v2863
    %v3385 = vunpack.c.h.b16 %v2863
    %v3386 = vunpack.c.l.b16 %v2864
    %v3387 = vunpack.c.h.b16 %v2864
    %v3388 = vunpack.c.l.b16 %v2865
    %v3389 = vunpack.c.h.b16 %v2865
    %v3390 = vunpack.c.l.b16 %v2866
    %v3391 = vunpack.c.h.b16 %v2866
    %v3392 = vunpack.c.l.b16 %v2867
    %v3393 = vunpack.c.h.b16 %v2867
    %v3394 = vunpack.c.l.b16 %v2868
    %v3395 = vunpack.c.h.b16 %v2868
    %v3396 = vunpack.c.l.b16 %v2869
    %v3397 = vunpack.c.h.b16 %v2869
    %v3398 = vunpack.c.l.b16 %v2870
    %v3399 = vunpack.c.h.b16 %v2870
    %v3400 = vunpack.c.l.b16 %v2871
    %v3401 = vunpack.c.h.b16 %v2871
    %v3402 = vunpack.c.l.b16 %v2872
    %v3403 = vunpack.c.h.b16 %v2872
    %v3404 = vunpack.c.l.b16 %v2873
    %v3405 = vunpack.c.h.b16 %v2873
    %v3406 = vunpack.c.l.b16 %v2874
    %v3407 = vunpack.c.h.b16 %v2874
    %v3408 = vunpack.c.l.b16 %v2875
    %v3409 = vunpack.c.h.b16 %v2875
    %v3410 = vunpack.c.l.b16 %v2876
    %v3411 = vunpack.c.h.b16 %v2876
    %v3412 = vunpack.c.l.b16 %v2877
    %v3413 = vunpack.c.h.b16 %v2877
    %v3414 = vunpack.c.l.b16 %v2878
    %v3415 = vunpack.c.h.b16 %v2878
    %v3416 = vunpack.c.l.b16 %v2879
    %v3417 = vunpack.c.h.b16 %v2879
    %v3418 = vunpack.c.l.b16 %v2880
    %v3419 = vunpack.c.h.b16 %v2880
    %v3420 = vunpack.c.l.b16 %v2881
    %v3421 = vunpack.c.h.b16 %v2881
    %v3422 = vunpack.c.l.b16 %v2882
    %v3423 = vunpack.c.h.b16 %v2882
    %v3424 = vunpack.c.l.b16 %v2883
    %v3425 = vunpack.c.h.b16 %v2883
    %v3426 = vunpack.c.l.b16 %v2884
    %v3427 = vunpack.c.h.b16 %v2884
    %v3428 = vunpack.c.l.b16 %v2885
    %v3429 = vunpack.c.h.b16 %v2885
    %v3430 = vunpack.c.l.b16 %v2886
    %v3431 = vunpack.c.h.b16 %v2886
    %v3432 = vunpack.c.l.b16 %v2887
    %v3433 = vunpack.c.h.b16 %v2887
    %v3434 = vunpack.c.l.b16 %v2888
    %v3435 = vunpack.c.h.b16 %v2888
    %v3436 = vunpack.c.l.b16 %v2889
    %v3437 = vunpack.c.h.b16 %v2889
    %v3438 = vunpack.c.l.b16 %v2890
    %v3439 = vunpack.c.h.b16 %v2890
    %v3440 = vunpack.c.l.b16 %v2891
    %v3441 = vunpack.c.h.b16 %v2891
    %v3442 = vunpack.c.l.b16 %v2892
    %v3443 = vunpack.c.h.b16 %v2892
    %v3444 = vunpack.c.l.b16 %v2893
    %v3445 = vunpack.c.h.b16 %v2893
    %v3446 = vunpack.c.l.b16 %v2894
    %v3447 = vunpack.c.h.b16 %v2894
    %v3448 = vunpack.c.l.b16 %v2895
    %v3449 = vunpack.c.h.b16 %v2895
    %v3450 = vunpack.c.l.b16 %v2896
    %v3451 = vunpack.c.h.b16 %v2896
    %v3452 = vunpack.c.l.b16 %v2897
    %v3453 = vunpack.c.h.b16 %v2897
    %v3454 = vunpack.c.l.b16 %v2898
    %v3455 = vunpack.c.h.b16 %v2898
    %v3456 = vunpack.c.l.b16 %v2899
    %v3457 = vunpack.c.h.b16 %v2899
    %v3458 = vunpack.c.l.b16 %v2900
    %v3459 = vunpack.c.h.b16 %v2900
    %v3460 = vunpack.c.l.b16 %v2901
    %v3461 = vunpack.c.h.b16 %v2901
    %v3462 = vunpack.c.l.b16 %v2902
    %v3463 = vunpack.c.h.b16 %v2902
    %v3464 = vunpack.c.l.b16 %v2903
    %v3465 = vunpack.c.h.b16 %v2903
    %v3466 = vunpack.c.l.b16 %v2904
    %v3467 = vunpack.c.h.b16 %v2904
    %v3468 = vunpack.c.l.b16 %v2905
    %v3469 = vunpack.c.h.b16 %v2905
    %v3470 = vunpack.c.l.b16 %v2906
    %v3471 = vunpack.c.h.b16 %v2906
    %v3472 = vunpack.c.l.b16 %v2907
    %v3473 = vunpack.c.h.b16 %v2907
    %v3474 = vunpack.c.l.b16 %v2908
    %v3475 = vunpack.c.h.b16 %v2908
    %v3476 = vunpack.c.l.b16 %v2909
    %v3477 = vunpack.c.h.b16 %v2909
    %v3478 = vunpack.c.l.b16 %v2910
    %v3479 = vunpack.c.h.b16 %v2910
    %v3480 = vunpack.c.l.b16 %v2911
    %v3481 = vunpack.c.h.b16 %v2911
    %v3482 = vunpack.c.l.b16 %v2912
    %v3483 = vunpack.c.h.b16 %v2912
    %v3484 = vunpack.c.l.b16 %v2913
    %v3485 = vunpack.c.h.b16 %v2913
    %v3486 = vunpack.c.l.b16 %v2914
    %v3487 = vunpack.c.h.b16 %v2914
    %v3488 = vunpack.c.l.b16 %v2915
    %v3489 = vunpack.c.h.b16 %v2915
    %v3490 = vunpack.c.l.b16 %v2916
    %v3491 = vunpack.c.h.b16 %v2916
    %v3492 = vunpack.c.l.b16 %v2917
    %v3493 = vunpack.c.h.b16 %v2917
    %v3494 = vunpack.c.l.b16 %v2918
    %v3495 = vunpack.c.h.b16 %v2918
    %v3496 = vunpack.c.l.b16 %v2919
    %v3497 = vunpack.c.h.b16 %v2919
    %v3498 = vunpack.c.l.b16 %v2920
    %v3499 = vunpack.c.h.b16 %v2920
    %v3500 = vunpack.c.l.b16 %v2921
    %v3501 = vunpack.c.h.b16 %v2921
    %v3502 = vunpack.c.l.b16 %v2922
    %v3503 = vunpack.c.h.b16 %v2922
    %v3504 = vunpack.c.l.b16 %v2923
    %v3505 = vunpack.c.h.b16 %v2923
    %v3506 = vunpack.c.l.b16 %v2924
    %v3507 = vunpack.c.h.b16 %v2924
    %v3508 = vunpack.c.l.b16 %v2925
    %v3509 = vunpack.c.h.b16 %v2925
    %v3510 = vunpack.c.l.b16 %v2926
    %v3511 = vunpack.c.h.b16 %v2926
    %v3512 = vunpack.c.l.b16 %v2927
    %v3513 = vunpack.c.h.b16 %v2927
    %v3514 = vunpack.c.l.b16 %v2928
    %v3515 = vunpack.c.h.b16 %v2928
    %v3516 = vunpack.c.l.b16 %v2929
    %v3517 = vunpack.c.h.b16 %v2929
    %v3518 = vunpack.c.l.b16 %v2930
    %v3519 = vunpack.c.h.b16 %v2930
    %v3520 = vunpack.c.l.b16 %v2931
    %v3521 = vunpack.c.h.b16 %v2931
    %v3522 = vunpack.c.l.b16 %v2932
    %v3523 = vunpack.c.h.b16 %v2932
    %v3524 = vunpack.c.l.b16 %v2933
    %v3525 = vunpack.c.h.b16 %v2933
    %v3526 = vunpack.c.l.b16 %v2934
    %v3527 = vunpack.c.h.b16 %v2934
    %v3528 = vunpack.c.l.b16 %v2935
    %v3529 = vunpack.c.h.b16 %v2935
    %v3530 = vunpack.c.l.b16 %v2936
    %v3531 = vunpack.c.h.b16 %v2936
    %v3532 = vunpack.c.l.b16 %v2937
    %v3533 = vunpack.c.h.b16 %v2937
    %v3534 = vunpack.c.l.b16 %v2938
    %v3535 = vunpack.c.h.b16 %v2938
    %v3536 = vunpack.c.l.b16 %v2939
    %v3537 = vunpack.c.h.b16 %v2939
    %v3538 = vunpack.c.l.b16 %v2940
    %v3539 = vunpack.c.h.b16 %v2940
    %v3540 = vunpack.c.l.b16 %v2941
    %v3541 = vunpack.c.h.b16 %v2941
    %v3542 = vunpack.c.l.b16 %v2942
    %v3543 = vunpack.c.h.b16 %v2942
    %v3544 = vunpack.c.l.b16 %v2943
    %v3545 = vunpack.c.h.b16 %v2943
    %v3546 = vunpack.c.l.b16 %v2944
    %v3547 = vunpack.c.h.b16 %v2944
    %v3548 = vunpack.c.l.b16 %v2945
    %v3549 = vunpack.c.h.b16 %v2945
    %v3550 = vunpack.c.l.b16 %v2946
    %v3551 = vunpack.c.h.b16 %v2946
    %v3552 = vunpack.c.l.b16 %v2947
    %v3553 = vunpack.c.h.b16 %v2947
    %v3554 = vunpack.c.l.b16 %v2948
    %v3555 = vunpack.c.h.b16 %v2948
    %v3556 = vunpack.c.l.b16 %v2949
    %v3557 = vunpack.c.h.b16 %v2949
    %v3558 = vunpack.c.l.b16 %v2950
    %v3559 = vunpack.c.h.b16 %v2950
    %v3560 = vunpack.c.l.b16 %v2951
    %v3561 = vunpack.c.h.b16 %v2951
    %v3562 = vunpack.c.l.b16 %v2952
    %v3563 = vunpack.c.h.b16 %v2952
    %v3564 = vunpack.c.l.b16 %v2953
    %v3565 = vunpack.c.h.b16 %v2953
    %v3566 = vunpack.c.l.b16 %v2954
    %v3567 = vunpack.c.h.b16 %v2954
    %v3568 = vunpack.c.l.b16 %v2955
    %v3569 = vunpack.c.h.b16 %v2955
    %v3570 = vunpack.c.l.b16 %v2956
    %v3571 = vunpack.c.h.b16 %v2956
    %v3572 = vunpack.c.l.b16 %v2957
    %v3573 = vunpack.c.h.b16 %v2957
    %v3574 = vunpack.c.l.b16 %v2958
    %v3575 = vunpack.c.h.b16 %v2958
    %v3576 = vunpack.c.l.b16 %v2959
    %v3577 = vunpack.c.h.b16 %v2959
    %v3578 = vunpack.c.l.b16 %v2960
    %v3579 = vunpack.c.h.b16 %v2960
    %v3580 = vunpack.c.l.b16 %v2961
    %v3581 = vunpack.c.h.b16 %v2961
    %v3582 = vunpack.c.l.b16 %v2962
    %v3583 = vunpack.c.h.b16 %v2962
    %v3584 = vunpack.c.l.b16 %v2963
    %v3585 = vunpack.c.h.b16 %v2963
    %v3586 = vunpack.c.l.b16 %v2964
    %v3587 = vunpack.c.h.b16 %v2964
    %v3588 = vunpack.c.l.b16 %v2965
    %v3589 = vunpack.c.h.b16 %v2965
    %v3590 = vunpack.c.l.b16 %v2966
    %v3591 = vunpack.c.h.b16 %v2966
    %v3592 = vunpack.c.l.b16 %v2967
    %v3593 = vunpack.c.h.b16 %v2967
    %v3594 = vunpack.c.l.b16 %v2968
    %v3595 = vunpack.c.h.b16 %v2968
    %v3596 = vunpack.c.l.b16 %v2969
    %v3597 = vunpack.c.h.b16 %v2969
    %v3598 = vunpack.c.l.b16 %v2970
    %v3599 = vunpack.c.h.b16 %v2970
    %v3600 = vunpack.c.l.b16 %v2971
    %v3601 = vunpack.c.h.b16 %v2971
    %v3602 = vunpack.c.l.b16 %v2972
    %v3603 = vunpack.c.h.b16 %v2972
    %v3604 = vunpack.c.l.b16 %v2973
    %v3605 = vunpack.c.h.b16 %v2973
    %v3606 = vunpack.c.l.b16 %v2974
    %v3607 = vunpack.c.h.b16 %v2974
    %v3608 = vunpack.c.l.b16 %v2975
    %v3609 = vunpack.c.h.b16 %v2975
    %v3610 = vunpack.c.l.b16 %v2976
    %v3611 = vunpack.c.h.b16 %v2976
    %v3612 = vunpack.c.l.b16 %v2977
    %v3613 = vunpack.c.h.b16 %v2977
    %v3614 = vunpack.c.l.b16 %v2978
    %v3615 = vunpack.c.h.b16 %v2978
    %v3616 = vunpack.c.l.b16 %v2979
    %v3617 = vunpack.c.h.b16 %v2979
    %v3618 = vunpack.c.l.b16 %v2980
    %v3619 = vunpack.c.h.b16 %v2980
    %v3620 = vunpack.c.l.b16 %v2981
    %v3621 = vunpack.c.h.b16 %v2981
    %v3622 = vpack.c.b16 %v3370, %v3366
    %v3623 = vpack.c.b16 %v3371, %v3367
    %v3624 = vpack.c.b16 %v3372, %v3368
    %v3625 = vpack.c.b16 %v3373, %v3369
    %v3626 = vpack.c.b16 %v3378, %v3374
    %v3627 = vpack.c.b16 %v3379, %v3375
    %v3628 = vpack.c.b16 %v3380, %v3376
    %v3629 = vpack.c.b16 %v3381, %v3377
    %v3630 = vpack.c.b16 %v3386, %v3382
    %v3631 = vpack.c.b16 %v3387, %v3383
    %v3632 = vpack.c.b16 %v3388, %v3384
    %v3633 = vpack.c.b16 %v3389, %v3385
    %v3634 = vpack.c.b16 %v3394, %v3390
    %v3635 = vpack.c.b16 %v3395, %v3391
    %v3636 = vpack.c.b16 %v3396, %v3392
    %v3637 = vpack.c.b16 %v3397, %v3393
    %v3638 = vpack.c.b16 %v3402, %v3398
    %v3639 = vpack.c.b16 %v3403, %v3399
    %v3640 = vpack.c.b16 %v3404, %v3400
    %v3641 = vpack.c.b16 %v3405, %v3401
    %v3642 = vpack.c.b16 %v3410, %v3406
    %v3643 = vpack.c.b16 %v3411, %v3407
    %v3644 = vpack.c.b16 %v3412, %v3408
    %v3645 = vpack.c.b16 %v3413, %v3409
    %v3646 = vpack.c.b16 %v3418, %v3414
    %v3647 = vpack.c.b16 %v3419, %v3415
    %v3648 = vpack.c.b16 %v3420, %v3416
    %v3649 = vpack.c.b16 %v3421, %v3417
    %v3650 = vpack.c.b16 %v3426, %v3422
    %v3651 = vpack.c.b16 %v3427, %v3423
    %v3652 = vpack.c.b16 %v3428, %v3424
    %v3653 = vpack.c.b16 %v3429, %v3425
    %v3654 = vpack.c.b16 %v3434, %v3430
    %v3655 = vpack.c.b16 %v3435, %v3431
    %v3656 = vpack.c.b16 %v3436, %v3432
    %v3657 = vpack.c.b16 %v3437, %v3433
    %v3658 = vpack.c.b16 %v3442, %v3438
    %v3659 = vpack.c.b16 %v3443, %v3439
    %v3660 = vpack.c.b16 %v3444, %v3440
    %v3661 = vpack.c.b16 %v3445, %v3441
    %v3662 = vpack.c.b16 %v3450, %v3446
    %v3663 = vpack.c.b16 %v3451, %v3447
    %v3664 = vpack.c.b16 %v3452, %v3448
    %v3665 = vpack.c.b16 %v3453, %v3449
    %v3666 = vpack.c.b16 %v3458, %v3454
    %v3667 = vpack.c.b16 %v3459, %v3455
    %v3668 = vpack.c.b16 %v3460, %v3456
    %v3669 = vpack.c.b16 %v3461, %v3457
    %v3670 = vpack.c.b16 %v3466, %v3462
    %v3671 = vpack.c.b16 %v3467, %v3463
    %v3672 = vpack.c.b16 %v3468, %v3464
    %v3673 = vpack.c.b16 %v3469, %v3465
    %v3674 = vpack.c.b16 %v3474, %v3470
    %v3675 = vpack.c.b16 %v3475, %v3471
    %v3676 = vpack.c.b16 %v3476, %v3472
    %v3677 = vpack.c.b16 %v3477, %v3473
    %v3678 = vpack.c.b16 %v3482, %v3478
    %v3679 = vpack.c.b16 %v3483, %v3479
    %v3680 = vpack.c.b16 %v3484, %v3480
    %v3681 = vpack.c.b16 %v3485, %v3481
    %v3682 = vpack.c.b16 %v3490, %v3486
    %v3683 = vpack.c.b16 %v3491, %v3487
    %v3684 = vpack.c.b16 %v3492, %v3488
    %v3685 = vpack.c.b16 %v3493, %v3489
    %v3686 = vpack.c.b16 %v3498, %v3494
    %v3687 = vpack.c.b16 %v3499, %v3495
    %v3688 = vpack.c.b16 %v3500, %v3496
    %v3689 = vpack.c.b16 %v3501, %v3497
    %v3690 = vpack.c.b16 %v3506, %v3502
    %v3691 = vpack.c.b16 %v3507, %v3503
    %v3692 = vpack.c.b16 %v3508, %v3504
    %v3693 = vpack.c.b16 %v3509, %v3505
    %v3694 = vpack.c.b16 %v3514, %v3510
    %v3695 = vpack.c.b16 %v3515, %v3511
    %v3696 = vpack.c.b16 %v3516, %v3512
    %v3697 = vpack.c.b16 %v3517, %v3513
    %v3698 = vpack.c.b16 %v3522, %v3518
    %v3699 = vpack.c.b16 %v3523, %v3519
    %v3700 = vpack.c.b16 %v3524, %v3520
    %v3701 = vpack.c.b16 %v3525, %v3521
    %v3702 = vpack.c.b16 %v3530, %v3526
    %v3703 = vpack.c.b16 %v3531, %v3527
    %v3704 = vpack.c.b16 %v3532, %v3528
    %v3705 = vpack.c.b16 %v3533, %v3529
    %v3706 = vpack.c.b16 %v3538, %v3534
    %v3707 = vpack.c.b16 %v3539, %v3535
    %v3708 = vpack.c.b16 %v3540, %v3536
    %v3709 = vpack.c.b16 %v3541, %v3537
    %v3710 = vpack.c.b16 %v3546, %v3542
    %v3711 = vpack.c.b16 %v3547, %v3543
    %v3712 = vpack.c.b16 %v3548, %v3544
    %v3713 = vpack.c.b16 %v3549, %v3545
    %v3714 = vpack.c.b16 %v3554, %v3550
    %v3715 = vpack.c.b16 %v3555, %v3551
    %v3716 = vpack.c.b16 %v3556, %v3552
    %v3717 = vpack.c.b16 %v3557, %v3553
    %v3718 = vpack.c.b16 %v3562, %v3558
    %v3719 = vpack.c.b16 %v3563, %v3559
    %v3720 = vpack.c.b16 %v3564, %v3560
    %v3721 = vpack.c.b16 %v3565, %v3561
    %v3722 = vpack.c.b16 %v3570, %v3566
    %v3723 = vpack.c.b16 %v3571, %v3567
    %v3724 = vpack.c.b16 %v3572, %v3568
    %v3725 = vpack.c.b16 %v3573, %v3569
    %v3726 = vpack.c.b16 %v3578, %v3574
    %v3727 = vpack.c.b16 %v3579, %v3575
    %v3728 = vpack.c.b16 %v3580, %v3576
    %v3729 = vpack.c.b16 %v3581, %v3577
    %v3730 = vpack.c.b16 %v3586, %v3582
    %v3731 = vpack.c.b16 %v3587, %v3583
    %v3732 = vpack.c.b16 %v3588, %v3584
    %v3733 = vpack.c.b16 %v3589, %v3585
    %v3734 = vpack.c.b16 %v3594, %v3590
    %v3735 = vpack.c.b16 %v3595, %v3591
    %v3736 = vpack.c.b16 %v3596, %v3592
    %v3737 = vpack.c.b16 %v3597, %v3593
    %v3738 = vpack.c.b16 %v3602, %v3598
    %v3739 = vpack.c.b16 %v3603, %v3599
    %v3740 = vpack.c.b16 %v3604, %v3600
    %v3741 = vpack.c.b16 %v3605, %v3601
    %v3742 = vpack.c.b16 %v3610, %v3606
    %v3743 = vpack.c.b16 %v3611, %v3607
    %v3744 = vpack.c.b16 %v3612, %v3608
    %v3745 = vpack.c.b16 %v3613, %v3609
    %v3746 = vpack.c.b16 %v3618, %v3614
    %v3747 = vpack.c.b16 %v3619, %v3615
    %v3748 = vpack.c.b16 %v3620, %v3616
    %v3749 = vpack.c.b16 %v3621, %v3617
    %3878 = vmatprep.subr.bf16.mxu0 0
    %3879 = vmatpush1.bf16.msra.mxu0 %v2829
    %3880 = vmatprep.subr.bf16.mxu0 0
    %3881 = vmatpush1.bf16.msra.mxu0 %v2828
    %3882 = vmatprep.subr.bf16.mxu0 0
    %3883 = vmatpush1.bf16.msra.mxu0 %v2827
    %3884 = vmatprep.subr.bf16.mxu0 0
    %3885 = vmatpush1.bf16.msra.mxu0 %v2826
    %3886 = vmatprep.subr.bf16.mxu0 0
    %3887 = vmatpush1.bf16.msra.mxu0 %v2825
    %3888 = vmatprep.subr.bf16.mxu0 0
    %3889 = vmatpush1.bf16.msra.mxu0 %v2824
    %3890 = vmatprep.subr.bf16.mxu0 0
    %3891 = vmatpush1.bf16.msra.mxu0 %v2823
    %3892 = vmatprep.subr.bf16.mxu0 0
    %3893 = vmatpush1.bf16.msra.mxu0 %v2822
    %3894 = vmatprep.subr.bf16.mxu0 0
    %3895 = vmatpush2.bf16.msra.mxu0 %v2837
    %3896 = vmatprep.subr.bf16.mxu0 0
    %3897 = vmatpush2.bf16.msra.mxu0 %v2836
    %3898 = vmatprep.subr.bf16.mxu0 0
    %3899 = vmatpush2.bf16.msra.mxu0 %v2835
    %3900 = vmatprep.subr.bf16.mxu0 0
    %3901 = vmatpush2.bf16.msra.mxu0 %v2834
    %3902 = vmatprep.subr.bf16.mxu0 0
    %3903 = vmatpush2.bf16.msra.mxu0 %v2833
    %3904 = vmatprep.subr.bf16.mxu0 0
    %3905 = vmatpush2.bf16.msra.mxu0 %v2832
    %3906 = vmatprep.subr.bf16.mxu0 0
    %3907 = vmatpush2.bf16.msra.mxu0 %v2831
    %3908 = vmatprep.subr.bf16.mxu0 0
    %3909 = vmatpush2.bf16.msra.mxu0 %v2830
    %3910 = vmatprep.mubr.bf16.mxu0 %v3623
    %3911 = vmatmul.mubr.bf16.gmra.mxu0 %v3622
    %v3912 = vpop.f32.mrf.mxu0
    %v3913 = vadd.f32 %v2984, %v3912
    %v3914 = vpop.f32.mrf.mxu0
    %v3915 = vpop.f32.mrf.mxu0
    %v3916 = vadd.f32 %v2988, %v3915
    %v3917 = vpop.f32.mrf.mxu0
    %3918 = vmatprep.mubr.bf16.mxu0 %v3627
    %3919 = vmatmul.mubr.bf16.gmra.mxu0 %v3626
    %v3920 = vpop.f32.mrf.mxu0
    %v3921 = vadd.f32 %v2992, %v3920
    %v3922 = vpop.f32.mrf.mxu0
    %v3923 = vpop.f32.mrf.mxu0
    %v3924 = vadd.f32 %v2996, %v3923
    %v3925 = vpop.f32.mrf.mxu0
    %3926 = vmatprep.mubr.bf16.mxu0 %v3631
    %3927 = vmatmul.mubr.bf16.gmra.mxu0 %v3630
    %v3928 = vpop.f32.mrf.mxu0
    %v3929 = vadd.f32 %v3000, %v3928
    %v3930 = vpop.f32.mrf.mxu0
    %v3931 = vpop.f32.mrf.mxu0
    %v3932 = vadd.f32 %v3004, %v3931
    %v3933 = vpop.f32.mrf.mxu0
    %3934 = vmatprep.mubr.bf16.mxu0 %v3635
    %3935 = vmatmul.mubr.bf16.gmra.mxu0 %v3634
    %v3936 = vpop.f32.mrf.mxu0
    %v3937 = vadd.f32 %v3008, %v3936
    %v3938 = vpop.f32.mrf.mxu0
    %v3939 = vpop.f32.mrf.mxu0
    %v3940 = vadd.f32 %v3012, %v3939
    %v3941 = vpop.f32.mrf.mxu0
    %3942 = vmatprep.mubr.bf16.mxu0 %v3639
    %3943 = vmatmul.mubr.bf16.gmra.mxu0 %v3638
    %v3944 = vpop.f32.mrf.mxu0
    %v3945 = vadd.f32 %v3016, %v3944
    %v3946 = vpop.f32.mrf.mxu0
    %v3947 = vpop.f32.mrf.mxu0
    %v3948 = vadd.f32 %v3020, %v3947
    %v3949 = vpop.f32.mrf.mxu0
    %3950 = vmatprep.mubr.bf16.mxu0 %v3643
    %3951 = vmatmul.mubr.bf16.gmra.mxu0 %v3642
    %v3952 = vpop.f32.mrf.mxu0
    %v3953 = vadd.f32 %v3024, %v3952
    %v3954 = vpop.f32.mrf.mxu0
    %v3955 = vpop.f32.mrf.mxu0
    %v3956 = vadd.f32 %v3028, %v3955
    %v3957 = vpop.f32.mrf.mxu0
    %3958 = vmatprep.mubr.bf16.mxu0 %v3647
    %3959 = vmatmul.mubr.bf16.gmra.mxu0 %v3646
    %v3960 = vpop.f32.mrf.mxu0
    %v3961 = vadd.f32 %v3032, %v3960
    %v3962 = vpop.f32.mrf.mxu0
    %v3963 = vpop.f32.mrf.mxu0
    %v3964 = vadd.f32 %v3036, %v3963
    %v3965 = vpop.f32.mrf.mxu0
    %3966 = vmatprep.mubr.bf16.mxu0 %v3651
    %3967 = vmatmul.mubr.bf16.gmra.mxu0 %v3650
    %v3968 = vpop.f32.mrf.mxu0
    %v3969 = vadd.f32 %v3040, %v3968
    %v3970 = vpop.f32.mrf.mxu0
    %v3971 = vpop.f32.mrf.mxu0
    %v3972 = vadd.f32 %v3044, %v3971
    %v3973 = vpop.f32.mrf.mxu0
    %3974 = vmatprep.mubr.bf16.mxu0 %v3655
    %3975 = vmatmul.mubr.bf16.gmra.mxu0 %v3654
    %v3976 = vpop.f32.mrf.mxu0
    %v3977 = vadd.f32 %v3048, %v3976
    %v3978 = vpop.f32.mrf.mxu0
    %v3979 = vpop.f32.mrf.mxu0
    %v3980 = vadd.f32 %v3052, %v3979
    %v3981 = vpop.f32.mrf.mxu0
    %3982 = vmatprep.mubr.bf16.mxu0 %v3659
    %3983 = vmatmul.mubr.bf16.gmra.mxu0 %v3658
    %v3984 = vpop.f32.mrf.mxu0
    %v3985 = vadd.f32 %v3056, %v3984
    %v3986 = vpop.f32.mrf.mxu0
    %v3987 = vpop.f32.mrf.mxu0
    %v3988 = vadd.f32 %v3060, %v3987
    %v3989 = vpop.f32.mrf.mxu0
    %3990 = vmatprep.mubr.bf16.mxu0 %v3663
    %3991 = vmatmul.mubr.bf16.gmra.mxu0 %v3662
    %v3992 = vpop.f32.mrf.mxu0
    %v3993 = vadd.f32 %v3064, %v3992
    %v3994 = vpop.f32.mrf.mxu0
    %v3995 = vpop.f32.mrf.mxu0
    %v3996 = vadd.f32 %v3068, %v3995
    %v3997 = vpop.f32.mrf.mxu0
    %3998 = vmatprep.mubr.bf16.mxu0 %v3667
    %3999 = vmatmul.mubr.bf16.gmra.mxu0 %v3666
    %v4000 = vpop.f32.mrf.mxu0
    %v4001 = vadd.f32 %v3072, %v4000
    %v4002 = vpop.f32.mrf.mxu0
    %v4003 = vpop.f32.mrf.mxu0
    %v4004 = vadd.f32 %v3076, %v4003
    %v4005 = vpop.f32.mrf.mxu0
    %4006 = vmatprep.mubr.bf16.mxu0 %v3671
    %4007 = vmatmul.mubr.bf16.gmra.mxu0 %v3670
    %v4008 = vpop.f32.mrf.mxu0
    %v4009 = vadd.f32 %v3080, %v4008
    %v4010 = vpop.f32.mrf.mxu0
    %v4011 = vpop.f32.mrf.mxu0
    %v4012 = vadd.f32 %v3084, %v4011
    %v4013 = vpop.f32.mrf.mxu0
    %4014 = vmatprep.mubr.bf16.mxu0 %v3675
    %4015 = vmatmul.mubr.bf16.gmra.mxu0 %v3674
    %v4016 = vpop.f32.mrf.mxu0
    %v4017 = vadd.f32 %v3088, %v4016
    %v4018 = vpop.f32.mrf.mxu0
    %v4019 = vpop.f32.mrf.mxu0
    %v4020 = vadd.f32 %v3092, %v4019
    %v4021 = vpop.f32.mrf.mxu0
    %4022 = vmatprep.mubr.bf16.mxu0 %v3679
    %4023 = vmatmul.mubr.bf16.gmra.mxu0 %v3678
    %v4024 = vpop.f32.mrf.mxu0
    %v4025 = vadd.f32 %v3096, %v4024
    %v4026 = vpop.f32.mrf.mxu0
    %v4027 = vpop.f32.mrf.mxu0
    %v4028 = vadd.f32 %v3100, %v4027
    %v4029 = vpop.f32.mrf.mxu0
    %4030 = vmatprep.mubr.bf16.mxu0 %v3683
    %4031 = vmatmul.mubr.bf16.gmra.mxu0 %v3682
    %v4032 = vpop.f32.mrf.mxu0
    %v4033 = vadd.f32 %v3104, %v4032
    %v4034 = vpop.f32.mrf.mxu0
    %v4035 = vpop.f32.mrf.mxu0
    %v4036 = vadd.f32 %v3108, %v4035
    %v4037 = vpop.f32.mrf.mxu0
    %4038 = vmatprep.mubr.bf16.mxu0 %v3687
    %4039 = vmatmul.mubr.bf16.gmra.mxu0 %v3686
    %v4040 = vpop.f32.mrf.mxu0
    %v4041 = vadd.f32 %v3112, %v4040
    %v4042 = vpop.f32.mrf.mxu0
    %v4043 = vpop.f32.mrf.mxu0
    %v4044 = vadd.f32 %v3116, %v4043
    %v4045 = vpop.f32.mrf.mxu0
    %4046 = vmatprep.mubr.bf16.mxu0 %v3691
    %4047 = vmatmul.mubr.bf16.gmra.mxu0 %v3690
    %v4048 = vpop.f32.mrf.mxu0
    %v4049 = vadd.f32 %v3120, %v4048
    %v4050 = vpop.f32.mrf.mxu0
    %v4051 = vpop.f32.mrf.mxu0
    %v4052 = vadd.f32 %v3124, %v4051
    %v4053 = vpop.f32.mrf.mxu0
    %4054 = vmatprep.mubr.bf16.mxu0 %v3695
    %4055 = vmatmul.mubr.bf16.gmra.mxu0 %v3694
    %v4056 = vpop.f32.mrf.mxu0
    %v4057 = vadd.f32 %v3128, %v4056
    %v4058 = vpop.f32.mrf.mxu0
    %v4059 = vpop.f32.mrf.mxu0
    %v4060 = vadd.f32 %v3132, %v4059
    %v4061 = vpop.f32.mrf.mxu0
    %4062 = vmatprep.mubr.bf16.mxu0 %v3699
    %4063 = vmatmul.mubr.bf16.gmra.mxu0 %v3698
    %v4064 = vpop.f32.mrf.mxu0
    %v4065 = vadd.f32 %v3136, %v4064
    %v4066 = vpop.f32.mrf.mxu0
    %v4067 = vpop.f32.mrf.mxu0
    %v4068 = vadd.f32 %v3140, %v4067
    %v4069 = vpop.f32.mrf.mxu0
    %4070 = vmatprep.mubr.bf16.mxu0 %v3703
    %4071 = vmatmul.mubr.bf16.gmra.mxu0 %v3702
    %v4072 = vpop.f32.mrf.mxu0
    %v4073 = vadd.f32 %v3144, %v4072
    %v4074 = vpop.f32.mrf.mxu0
    %v4075 = vpop.f32.mrf.mxu0
    %v4076 = vadd.f32 %v3148, %v4075
    %v4077 = vpop.f32.mrf.mxu0
    %4078 = vmatprep.mubr.bf16.mxu0 %v3707
    %4079 = vmatmul.mubr.bf16.gmra.mxu0 %v3706
    %v4080 = vpop.f32.mrf.mxu0
    %v4081 = vadd.f32 %v3152, %v4080
    %v4082 = vpop.f32.mrf.mxu0
    %v4083 = vpop.f32.mrf.mxu0
    %v4084 = vadd.f32 %v3156, %v4083
    %v4085 = vpop.f32.mrf.mxu0
    %4086 = vmatprep.mubr.bf16.mxu0 %v3711
    %4087 = vmatmul.mubr.bf16.gmra.mxu0 %v3710
    %v4088 = vpop.f32.mrf.mxu0
    %v4089 = vadd.f32 %v3160, %v4088
    %v4090 = vpop.f32.mrf.mxu0
    %v4091 = vpop.f32.mrf.mxu0
    %v4092 = vadd.f32 %v3164, %v4091
    %v4093 = vpop.f32.mrf.mxu0
    %4094 = vmatprep.mubr.bf16.mxu0 %v3715
    %4095 = vmatmul.mubr.bf16.gmra.mxu0 %v3714
    %v4096 = vpop.f32.mrf.mxu0
    %v4097 = vadd.f32 %v3168, %v4096
    %v4098 = vpop.f32.mrf.mxu0
    %v4099 = vpop.f32.mrf.mxu0
    %v4100 = vadd.f32 %v3172, %v4099
    %v4101 = vpop.f32.mrf.mxu0
    %4102 = vmatprep.mubr.bf16.mxu0 %v3719
    %4103 = vmatmul.mubr.bf16.gmra.mxu0 %v3718
    %v4104 = vpop.f32.mrf.mxu0
    %v4105 = vadd.f32 %v3176, %v4104
    %v4106 = vpop.f32.mrf.mxu0
    %v4107 = vpop.f32.mrf.mxu0
    %v4108 = vadd.f32 %v3180, %v4107
    %v4109 = vpop.f32.mrf.mxu0
    %4110 = vmatprep.mubr.bf16.mxu0 %v3723
    %4111 = vmatmul.mubr.bf16.gmra.mxu0 %v3722
    %v4112 = vpop.f32.mrf.mxu0
    %v4113 = vadd.f32 %v3184, %v4112
    %v4114 = vpop.f32.mrf.mxu0
    %v4115 = vpop.f32.mrf.mxu0
    %v4116 = vadd.f32 %v3188, %v4115
    %v4117 = vpop.f32.mrf.mxu0
    %4118 = vmatprep.mubr.bf16.mxu0 %v3727
    %4119 = vmatmul.mubr.bf16.gmra.mxu0 %v3726
    %v4120 = vpop.f32.mrf.mxu0
    %v4121 = vadd.f32 %v3192, %v4120
    %v4122 = vpop.f32.mrf.mxu0
    %v4123 = vpop.f32.mrf.mxu0
    %v4124 = vadd.f32 %v3196, %v4123
    %v4125 = vpop.f32.mrf.mxu0
    %4126 = vmatprep.mubr.bf16.mxu0 %v3731
    %4127 = vmatmul.mubr.bf16.gmra.mxu0 %v3730
    %v4128 = vpop.f32.mrf.mxu0
    %v4129 = vadd.f32 %v3200, %v4128
    %v4130 = vpop.f32.mrf.mxu0
    %v4131 = vpop.f32.mrf.mxu0
    %v4132 = vadd.f32 %v3204, %v4131
    %v4133 = vpop.f32.mrf.mxu0
    %4134 = vmatprep.mubr.bf16.mxu0 %v3735
    %4135 = vmatmul.mubr.bf16.gmra.mxu0 %v3734
    %v4136 = vpop.f32.mrf.mxu0
    %v4137 = vadd.f32 %v3208, %v4136
    %v4138 = vpop.f32.mrf.mxu0
    %v4139 = vpop.f32.mrf.mxu0
    %v4140 = vadd.f32 %v3212, %v4139
    %v4141 = vpop.f32.mrf.mxu0
    %4142 = vmatprep.mubr.bf16.mxu0 %v3739
    %4143 = vmatmul.mubr.bf16.gmra.mxu0 %v3738
    %v4144 = vpop.f32.mrf.mxu0
    %v4145 = vadd.f32 %v3216, %v4144
    %v4146 = vpop.f32.mrf.mxu0
    %v4147 = vpop.f32.mrf.mxu0
    %v4148 = vadd.f32 %v3220, %v4147
    %v4149 = vpop.f32.mrf.mxu0
    %4150 = vmatprep.mubr.bf16.mxu0 %v3743
    %4151 = vmatmul.mubr.bf16.gmra.mxu0 %v3742
    %v4152 = vpop.f32.mrf.mxu0
    %v4153 = vadd.f32 %v3224, %v4152
    %v4154 = vpop.f32.mrf.mxu0
    %v4155 = vpop.f32.mrf.mxu0
    %v4156 = vadd.f32 %v3228, %v4155
    %v4157 = vpop.f32.mrf.mxu0
    %4158 = vmatprep.mubr.bf16.mxu0 %v3747
    %4159 = vmatmul.mubr.bf16.gmra.mxu0 %v3746
    %v4160 = vpop.f32.mrf.mxu0
    %v4161 = vadd.f32 %v3232, %v4160
    %v4162 = vpop.f32.mrf.mxu0
    %v4163 = vpop.f32.mrf.mxu0
    %v4164 = vadd.f32 %v3236, %v4163
    %v4165 = vpop.f32.mrf.mxu0
    %4166 = vdwg.mxu0
    %4167 = vmatprep.subr.bf16.mxu0 0
    %4168 = vmatpush1.bf16.msra.mxu0 %v2845
    %4169 = vmatprep.subr.bf16.mxu0 0
    %4170 = vmatpush1.bf16.msra.mxu0 %v2844
    %4171 = vmatprep.subr.bf16.mxu0 0
    %4172 = vmatpush1.bf16.msra.mxu0 %v2843
    %4173 = vmatprep.subr.bf16.mxu0 0
    %4174 = vmatpush1.bf16.msra.mxu0 %v2842
    %4175 = vmatprep.subr.bf16.mxu0 0
    %4176 = vmatpush1.bf16.msra.mxu0 %v2841
    %4177 = vmatprep.subr.bf16.mxu0 0
    %4178 = vmatpush1.bf16.msra.mxu0 %v2840
    %4179 = vmatprep.subr.bf16.mxu0 0
    %4180 = vmatpush1.bf16.msra.mxu0 %v2839
    %4181 = vmatprep.subr.bf16.mxu0 0
    %4182 = vmatpush1.bf16.msra.mxu0 %v2838
    %4183 = vmatprep.subr.bf16.mxu0 0
    %4184 = vmatpush2.bf16.msra.mxu0 %v2853
    %4185 = vmatprep.subr.bf16.mxu0 0
    %4186 = vmatpush2.bf16.msra.mxu0 %v2852
    %4187 = vmatprep.subr.bf16.mxu0 0
    %4188 = vmatpush2.bf16.msra.mxu0 %v2851
    %4189 = vmatprep.subr.bf16.mxu0 0
    %4190 = vmatpush2.bf16.msra.mxu0 %v2850
    %4191 = vmatprep.subr.bf16.mxu0 0
    %4192 = vmatpush2.bf16.msra.mxu0 %v2849
    %4193 = vmatprep.subr.bf16.mxu0 0
    %4194 = vmatpush2.bf16.msra.mxu0 %v2848
    %4195 = vmatprep.subr.bf16.mxu0 0
    %4196 = vmatpush2.bf16.msra.mxu0 %v2847
    %4197 = vmatprep.subr.bf16.mxu0 0
    %4198 = vmatpush2.bf16.msra.mxu0 %v2846
    %4199 = vmatprep.mubr.bf16.mxu0 %v3625
    %4200 = vmatmul.mubr.bf16.gmra.mxu0 %v3624
    %v4201 = vpop.f32.mrf.mxu0
    %v4202 = vadd.f32 %v3913, %v4201
    %v4203 = vpop.f32.mrf.mxu0
    %v4204 = vpop.f32.mrf.mxu0
    %v4205 = vadd.f32 %v3916, %v4204
    %v4206 = vpop.f32.mrf.mxu0
    %4207 = vmatprep.mubr.bf16.mxu0 %v3629
    %4208 = vmatmul.mubr.bf16.gmra.mxu0 %v3628
    %v4209 = vpop.f32.mrf.mxu0
    %v4210 = vadd.f32 %v3921, %v4209
    %v4211 = vpop.f32.mrf.mxu0
    %v4212 = vpop.f32.mrf.mxu0
    %v4213 = vadd.f32 %v3924, %v4212
    %v4214 = vpop.f32.mrf.mxu0
    %4215 = vmatprep.mubr.bf16.mxu0 %v3633
    %4216 = vmatmul.mubr.bf16.gmra.mxu0 %v3632
    %v4217 = vpop.f32.mrf.mxu0
    %v4218 = vadd.f32 %v3929, %v4217
    %v4219 = vpop.f32.mrf.mxu0
    %v4220 = vpop.f32.mrf.mxu0
    %v4221 = vadd.f32 %v3932, %v4220
    %v4222 = vpop.f32.mrf.mxu0
    %4223 = vmatprep.mubr.bf16.mxu0 %v3637
    %4224 = vmatmul.mubr.bf16.gmra.mxu0 %v3636
    %v4225 = vpop.f32.mrf.mxu0
    %v4226 = vadd.f32 %v3937, %v4225
    %v4227 = vpop.f32.mrf.mxu0
    %v4228 = vpop.f32.mrf.mxu0
    %v4229 = vadd.f32 %v3940, %v4228
    %v4230 = vpop.f32.mrf.mxu0
    %4231 = vmatprep.mubr.bf16.mxu0 %v3641
    %4232 = vmatmul.mubr.bf16.gmra.mxu0 %v3640
    %v4233 = vpop.f32.mrf.mxu0
    %v4234 = vadd.f32 %v3945, %v4233
    %v4235 = vpop.f32.mrf.mxu0
    %v4236 = vpop.f32.mrf.mxu0
    %v4237 = vadd.f32 %v3948, %v4236
    %v4238 = vpop.f32.mrf.mxu0
    %4239 = vmatprep.mubr.bf16.mxu0 %v3645
    %4240 = vmatmul.mubr.bf16.gmra.mxu0 %v3644
    %v4241 = vpop.f32.mrf.mxu0
    %v4242 = vadd.f32 %v3953, %v4241
    %v4243 = vpop.f32.mrf.mxu0
    %v4244 = vpop.f32.mrf.mxu0
    %v4245 = vadd.f32 %v3956, %v4244
    %v4246 = vpop.f32.mrf.mxu0
    %4247 = vmatprep.mubr.bf16.mxu0 %v3649
    %4248 = vmatmul.mubr.bf16.gmra.mxu0 %v3648
    %v4249 = vpop.f32.mrf.mxu0
    %v4250 = vadd.f32 %v3961, %v4249
    %v4251 = vpop.f32.mrf.mxu0
    %v4252 = vpop.f32.mrf.mxu0
    %v4253 = vadd.f32 %v3964, %v4252
    %v4254 = vpop.f32.mrf.mxu0
    %4255 = vmatprep.mubr.bf16.mxu0 %v3653
    %4256 = vmatmul.mubr.bf16.gmra.mxu0 %v3652
    %v4257 = vpop.f32.mrf.mxu0
    %v4258 = vadd.f32 %v3969, %v4257
    %v4259 = vpop.f32.mrf.mxu0
    %v4260 = vpop.f32.mrf.mxu0
    %v4261 = vadd.f32 %v3972, %v4260
    %v4262 = vpop.f32.mrf.mxu0
    %4263 = vmatprep.mubr.bf16.mxu0 %v3657
    %4264 = vmatmul.mubr.bf16.gmra.mxu0 %v3656
    %v4265 = vpop.f32.mrf.mxu0
    %v4266 = vadd.f32 %v3977, %v4265
    %v4267 = vpop.f32.mrf.mxu0
    %v4268 = vpop.f32.mrf.mxu0
    %v4269 = vadd.f32 %v3980, %v4268
    %v4270 = vpop.f32.mrf.mxu0
    %4271 = vmatprep.mubr.bf16.mxu0 %v3661
    %4272 = vmatmul.mubr.bf16.gmra.mxu0 %v3660
    %v4273 = vpop.f32.mrf.mxu0
    %v4274 = vadd.f32 %v3985, %v4273
    %v4275 = vpop.f32.mrf.mxu0
    %v4276 = vpop.f32.mrf.mxu0
    %v4277 = vadd.f32 %v3988, %v4276
    %v4278 = vpop.f32.mrf.mxu0
    %4279 = vmatprep.mubr.bf16.mxu0 %v3665
    %4280 = vmatmul.mubr.bf16.gmra.mxu0 %v3664
    %v4281 = vpop.f32.mrf.mxu0
    %v4282 = vadd.f32 %v3993, %v4281
    %v4283 = vpop.f32.mrf.mxu0
    %v4284 = vpop.f32.mrf.mxu0
    %v4285 = vadd.f32 %v3996, %v4284
    %v4286 = vpop.f32.mrf.mxu0
    %4287 = vmatprep.mubr.bf16.mxu0 %v3669
    %4288 = vmatmul.mubr.bf16.gmra.mxu0 %v3668
    %v4289 = vpop.f32.mrf.mxu0
    %v4290 = vadd.f32 %v4001, %v4289
    %v4291 = vpop.f32.mrf.mxu0
    %v4292 = vpop.f32.mrf.mxu0
    %v4293 = vadd.f32 %v4004, %v4292
    %v4294 = vpop.f32.mrf.mxu0
    %4295 = vmatprep.mubr.bf16.mxu0 %v3673
    %4296 = vmatmul.mubr.bf16.gmra.mxu0 %v3672
    %v4297 = vpop.f32.mrf.mxu0
    %v4298 = vadd.f32 %v4009, %v4297
    %v4299 = vpop.f32.mrf.mxu0
    %v4300 = vpop.f32.mrf.mxu0
    %v4301 = vadd.f32 %v4012, %v4300
    %v4302 = vpop.f32.mrf.mxu0
    %4303 = vmatprep.mubr.bf16.mxu0 %v3677
    %4304 = vmatmul.mubr.bf16.gmra.mxu0 %v3676
    %v4305 = vpop.f32.mrf.mxu0
    %v4306 = vadd.f32 %v4017, %v4305
    %v4307 = vpop.f32.mrf.mxu0
    %v4308 = vpop.f32.mrf.mxu0
    %v4309 = vadd.f32 %v4020, %v4308
    %v4310 = vpop.f32.mrf.mxu0
    %4311 = vmatprep.mubr.bf16.mxu0 %v3681
    %4312 = vmatmul.mubr.bf16.gmra.mxu0 %v3680
    %v4313 = vpop.f32.mrf.mxu0
    %v4314 = vadd.f32 %v4025, %v4313
    %v4315 = vpop.f32.mrf.mxu0
    %v4316 = vpop.f32.mrf.mxu0
    %v4317 = vadd.f32 %v4028, %v4316
    %v4318 = vpop.f32.mrf.mxu0
    %4319 = vmatprep.mubr.bf16.mxu0 %v3685
    %4320 = vmatmul.mubr.bf16.gmra.mxu0 %v3684
    %v4321 = vpop.f32.mrf.mxu0
    %v4322 = vadd.f32 %v4033, %v4321
    %v4323 = vpop.f32.mrf.mxu0
    %v4324 = vpop.f32.mrf.mxu0
    %v4325 = vadd.f32 %v4036, %v4324
    %v4326 = vpop.f32.mrf.mxu0
    %4327 = vmatprep.mubr.bf16.mxu0 %v3689
    %4328 = vmatmul.mubr.bf16.gmra.mxu0 %v3688
    %v4329 = vpop.f32.mrf.mxu0
    %v4330 = vadd.f32 %v4041, %v4329
    %v4331 = vpop.f32.mrf.mxu0
    %v4332 = vpop.f32.mrf.mxu0
    %v4333 = vadd.f32 %v4044, %v4332
    %v4334 = vpop.f32.mrf.mxu0
    %4335 = vmatprep.mubr.bf16.mxu0 %v3693
    %4336 = vmatmul.mubr.bf16.gmra.mxu0 %v3692
    %v4337 = vpop.f32.mrf.mxu0
    %v4338 = vadd.f32 %v4049, %v4337
    %v4339 = vpop.f32.mrf.mxu0
    %v4340 = vpop.f32.mrf.mxu0
    %v4341 = vadd.f32 %v4052, %v4340
    %v4342 = vpop.f32.mrf.mxu0
    %4343 = vmatprep.mubr.bf16.mxu0 %v3697
    %4344 = vmatmul.mubr.bf16.gmra.mxu0 %v3696
    %v4345 = vpop.f32.mrf.mxu0
    %v4346 = vadd.f32 %v4057, %v4345
    %v4347 = vpop.f32.mrf.mxu0
    %v4348 = vpop.f32.mrf.mxu0
    %v4349 = vadd.f32 %v4060, %v4348
    %v4350 = vpop.f32.mrf.mxu0
    %4351 = vmatprep.mubr.bf16.mxu0 %v3701
    %4352 = vmatmul.mubr.bf16.gmra.mxu0 %v3700
    %v4353 = vpop.f32.mrf.mxu0
    %v4354 = vadd.f32 %v4065, %v4353
    %v4355 = vpop.f32.mrf.mxu0
    %v4356 = vpop.f32.mrf.mxu0
    %v4357 = vadd.f32 %v4068, %v4356
    %v4358 = vpop.f32.mrf.mxu0
    %4359 = vmatprep.mubr.bf16.mxu0 %v3705
    %4360 = vmatmul.mubr.bf16.gmra.mxu0 %v3704
    %v4361 = vpop.f32.mrf.mxu0
    %v4362 = vadd.f32 %v4073, %v4361
    %v4363 = vpop.f32.mrf.mxu0
    %v4364 = vpop.f32.mrf.mxu0
    %v4365 = vadd.f32 %v4076, %v4364
    %v4366 = vpop.f32.mrf.mxu0
    %4367 = vmatprep.mubr.bf16.mxu0 %v3709
    %4368 = vmatmul.mubr.bf16.gmra.mxu0 %v3708
    %v4369 = vpop.f32.mrf.mxu0
    %v4370 = vadd.f32 %v4081, %v4369
    %v4371 = vpop.f32.mrf.mxu0
    %v4372 = vpop.f32.mrf.mxu0
    %v4373 = vadd.f32 %v4084, %v4372
    %v4374 = vpop.f32.mrf.mxu0
    %4375 = vmatprep.mubr.bf16.mxu0 %v3713
    %4376 = vmatmul.mubr.bf16.gmra.mxu0 %v3712
    %v4377 = vpop.f32.mrf.mxu0
    %v4378 = vadd.f32 %v4089, %v4377
    %v4379 = vpop.f32.mrf.mxu0
    %v4380 = vpop.f32.mrf.mxu0
    %v4381 = vadd.f32 %v4092, %v4380
    %v4382 = vpop.f32.mrf.mxu0
    %4383 = vmatprep.mubr.bf16.mxu0 %v3717
    %4384 = vmatmul.mubr.bf16.gmra.mxu0 %v3716
    %v4385 = vpop.f32.mrf.mxu0
    %v4386 = vadd.f32 %v4097, %v4385
    %v4387 = vpop.f32.mrf.mxu0
    %v4388 = vpop.f32.mrf.mxu0
    %v4389 = vadd.f32 %v4100, %v4388
    %v4390 = vpop.f32.mrf.mxu0
    %4391 = vmatprep.mubr.bf16.mxu0 %v3721
    %4392 = vmatmul.mubr.bf16.gmra.mxu0 %v3720
    %v4393 = vpop.f32.mrf.mxu0
    %v4394 = vadd.f32 %v4105, %v4393
    %v4395 = vpop.f32.mrf.mxu0
    %v4396 = vpop.f32.mrf.mxu0
    %v4397 = vadd.f32 %v4108, %v4396
    %v4398 = vpop.f32.mrf.mxu0
    %4399 = vmatprep.mubr.bf16.mxu0 %v3725
    %4400 = vmatmul.mubr.bf16.gmra.mxu0 %v3724
    %v4401 = vpop.f32.mrf.mxu0
    %v4402 = vadd.f32 %v4113, %v4401
    %v4403 = vpop.f32.mrf.mxu0
    %v4404 = vpop.f32.mrf.mxu0
    %v4405 = vadd.f32 %v4116, %v4404
    %v4406 = vpop.f32.mrf.mxu0
    %4407 = vmatprep.mubr.bf16.mxu0 %v3729
    %4408 = vmatmul.mubr.bf16.gmra.mxu0 %v3728
    %v4409 = vpop.f32.mrf.mxu0
    %v4410 = vadd.f32 %v4121, %v4409
    %v4411 = vpop.f32.mrf.mxu0
    %v4412 = vpop.f32.mrf.mxu0
    %v4413 = vadd.f32 %v4124, %v4412
    %v4414 = vpop.f32.mrf.mxu0
    %4415 = vmatprep.mubr.bf16.mxu0 %v3733
    %4416 = vmatmul.mubr.bf16.gmra.mxu0 %v3732
    %v4417 = vpop.f32.mrf.mxu0
    %v4418 = vadd.f32 %v4129, %v4417
    %v4419 = vpop.f32.mrf.mxu0
    %v4420 = vpop.f32.mrf.mxu0
    %v4421 = vadd.f32 %v4132, %v4420
    %v4422 = vpop.f32.mrf.mxu0
    %4423 = vmatprep.mubr.bf16.mxu0 %v3737
    %4424 = vmatmul.mubr.bf16.gmra.mxu0 %v3736
    %v4425 = vpop.f32.mrf.mxu0
    %v4426 = vadd.f32 %v4137, %v4425
    %v4427 = vpop.f32.mrf.mxu0
    %v4428 = vpop.f32.mrf.mxu0
    %v4429 = vadd.f32 %v4140, %v4428
    %v4430 = vpop.f32.mrf.mxu0
    %4431 = vmatprep.mubr.bf16.mxu0 %v3741
    %4432 = vmatmul.mubr.bf16.gmra.mxu0 %v3740
    %v4433 = vpop.f32.mrf.mxu0
    %v4434 = vadd.f32 %v4145, %v4433
    %v4435 = vpop.f32.mrf.mxu0
    %v4436 = vpop.f32.mrf.mxu0
    %v4437 = vadd.f32 %v4148, %v4436
    %v4438 = vpop.f32.mrf.mxu0
    %4439 = vmatprep.mubr.bf16.mxu0 %v3745
    %4440 = vmatmul.mubr.bf16.gmra.mxu0 %v3744
    %v4441 = vpop.f32.mrf.mxu0
    %v4442 = vadd.f32 %v4153, %v4441
    %v4443 = vpop.f32.mrf.mxu0
    %v4444 = vpop.f32.mrf.mxu0
    %v4445 = vadd.f32 %v4156, %v4444
    %v4446 = vpop.f32.mrf.mxu0
    %4447 = vmatprep.mubr.bf16.mxu0 %v3749
    %4448 = vmatmul.mubr.bf16.gmra.mxu0 %v3748
    %v4449 = vpop.f32.mrf.mxu0
    %v4450 = vadd.f32 %v4161, %v4449
    %v4451 = vpop.f32.mrf.mxu0
    %v4452 = vpop.f32.mrf.mxu0
    %v4453 = vadd.f32 %v4164, %v4452
    %v4454 = vpop.f32.mrf.mxu0
    %4455 = vdwg.mxu0
    %v4456 = vmax.f32 %v4202, 0.0
    %v4457 = vmax.f32 %v4205, 0.0
    %v4458 = vmax.f32 %v4210, 0.0
    %v4459 = vmax.f32 %v4213, 0.0
    %v4460 = vmax.f32 %v4218, 0.0
    %v4461 = vmax.f32 %v4221, 0.0
    %v4462 = vmax.f32 %v4226, 0.0
    %v4463 = vmax.f32 %v4229, 0.0
    %v4464 = vmax.f32 %v4234, 0.0
    %v4465 = vmax.f32 %v4237, 0.0
    %v4466 = vmax.f32 %v4242, 0.0
    %v4467 = vmax.f32 %v4245, 0.0
    %v4468 = vmax.f32 %v4250, 0.0
    %v4469 = vmax.f32 %v4253, 0.0
    %v4470 = vmax.f32 %v4258, 0.0
    %v4471 = vmax.f32 %v4261, 0.0
    %v4472 = vmax.f32 %v4266, 0.0
    %v4473 = vmax.f32 %v4269, 0.0
    %v4474 = vmax.f32 %v4274, 0.0
    %v4475 = vmax.f32 %v4277, 0.0
    %v4476 = vmax.f32 %v4282, 0.0
    %v4477 = vmax.f32 %v4285, 0.0
    %v4478 = vmax.f32 %v4290, 0.0
    %v4479 = vmax.f32 %v4293, 0.0
    %v4480 = vmax.f32 %v4298, 0.0
    %v4481 = vmax.f32 %v4301, 0.0
    %v4482 = vmax.f32 %v4306, 0.0
    %v4483 = vmax.f32 %v4309, 0.0
    %v4484 = vmax.f32 %v4314, 0.0
    %v4485 = vmax.f32 %v4317, 0.0
    %v4486 = vmax.f32 %v4322, 0.0
    %v4487 = vmax.f32 %v4325, 0.0
    %v4488 = vmax.f32 %v4330, 0.0
    %v4489 = vmax.f32 %v4333, 0.0
    %v4490 = vmax.f32 %v4338, 0.0
    %v4491 = vmax.f32 %v4341, 0.0
    %v4492 = vmax.f32 %v4346, 0.0
    %v4493 = vmax.f32 %v4349, 0.0
    %v4494 = vmax.f32 %v4354, 0.0
    %v4495 = vmax.f32 %v4357, 0.0
    %v4496 = vmax.f32 %v4362, 0.0
    %v4497 = vmax.f32 %v4365, 0.0
    %v4498 = vmax.f32 %v4370, 0.0
    %v4499 = vmax.f32 %v4373, 0.0
    %v4500 = vmax.f32 %v4378, 0.0
    %v4501 = vmax.f32 %v4381, 0.0
    %v4502 = vmax.f32 %v4386, 0.0
    %v4503 = vmax.f32 %v4389, 0.0
    %v4504 = vmax.f32 %v4394, 0.0
    %v4505 = vmax.f32 %v4397, 0.0
    %v4506 = vmax.f32 %v4402, 0.0
    %v4507 = vmax.f32 %v4405, 0.0
    %v4508 = vmax.f32 %v4410, 0.0
    %v4509 = vmax.f32 %v4413, 0.0
    %v4510 = vmax.f32 %v4418, 0.0
    %v4511 = vmax.f32 %v4421, 0.0
    %v4512 = vmax.f32 %v4426, 0.0
    %v4513 = vmax.f32 %v4429, 0.0
    %v4514 = vmax.f32 %v4434, 0.0
    %v4515 = vmax.f32 %v4437, 0.0
    %v4516 = vmax.f32 %v4442, 0.0
    %v4517 = vmax.f32 %v4445, 0.0
    %v4518 = vmax.f32 %v4450, 0.0
    %v4519 = vmax.f32 %v4453, 0.0
    %v4520 = vpack.c.bf16 %v4457, %v4456
    %v4521 = vpack.c.bf16 %v4459, %v4458
    %v4522 = vpack.c.bf16 %v4461, %v4460
    %v4523 = vpack.c.bf16 %v4463, %v4462
    %v4524 = vpack.c.bf16 %v4465, %v4464
    %v4525 = vpack.c.bf16 %v4467, %v4466
    %v4526 = vpack.c.bf16 %v4469, %v4468
    %v4527 = vpack.c.bf16 %v4471, %v4470
    %v4528 = vpack.c.bf16 %v4473, %v4472
    %v4529 = vpack.c.bf16 %v4475, %v4474
    %v4530 = vpack.c.bf16 %v4477, %v4476
    %v4531 = vpack.c.bf16 %v4479, %v4478
    %v4532 = vpack.c.bf16 %v4481, %v4480
    %v4533 = vpack.c.bf16 %v4483, %v4482
    %v4534 = vpack.c.bf16 %v4485, %v4484
    %v4535 = vpack.c.bf16 %v4487, %v4486
    %v4536 = vpack.c.bf16 %v4489, %v4488
    %v4537 = vpack.c.bf16 %v4491, %v4490
    %v4538 = vpack.c.bf16 %v4493, %v4492
    %v4539 = vpack.c.bf16 %v4495, %v4494
    %v4540 = vpack.c.bf16 %v4497, %v4496
    %v4541 = vpack.c.bf16 %v4499, %v4498
    %v4542 = vpack.c.bf16 %v4501, %v4500
    %v4543 = vpack.c.bf16 %v4503, %v4502
    %v4544 = vpack.c.bf16 %v4505, %v4504
    %v4545 = vpack.c.bf16 %v4507, %v4506
    %v4546 = vpack.c.bf16 %v4509, %v4508
    %v4547 = vpack.c.bf16 %v4511, %v4510
    %v4548 = vpack.c.bf16 %v4513, %v4512
    %v4549 = vpack.c.bf16 %v4515, %v4514
    %v4550 = vpack.c.bf16 %v4517, %v4516
    %v4551 = vpack.c.bf16 %v4519, %v4518
    %v4552 = vld [vmem:[#allocation7] sm:$0xff]
    %v4553 = vld [vmem:[#allocation7 + $0x8] sm:$0xff]
    %v4554 = vld [vmem:[#allocation7 + $0x10] sm:$0xff]
    %v4555 = vld [vmem:[#allocation7 + $0x18] sm:$0xff]
    %v4556 = vld [vmem:[#allocation7 + $0x20] sm:$0xff]
    %v4557 = vld [vmem:[#allocation7 + $0x28] sm:$0xff]
    %v4558 = vld [vmem:[#allocation7 + $0x30] sm:$0xff]
    %v4559 = vld [vmem:[#allocation7 + $0x38] sm:$0xff]
    %v4560 = vld [vmem:[#allocation7 + $0x40] sm:$0xff]
    %v4561 = vld [vmem:[#allocation7 + $0x48] sm:$0xff]
    %v4562 = vld [vmem:[#allocation7 + $0x50] sm:$0xff]
    %v4563 = vld [vmem:[#allocation7 + $0x58] sm:$0xff]
    %v4564 = vld [vmem:[#allocation7 + $0x60] sm:$0xff]
    %v4565 = vld [vmem:[#allocation7 + $0x68] sm:$0xff]
    %v4566 = vld [vmem:[#allocation7 + $0x70] sm:$0xff]
    %v4567 = vld [vmem:[#allocation7 + $0x78] sm:$0xff]
    %v4568 = vld [vmem:[#allocation7 + $0x80] sm:$0xff]
    %v4569 = vld [vmem:[#allocation7 + $0x88] sm:$0xff]
    %v4570 = vld [vmem:[#allocation7 + $0x90] sm:$0xff]
    %v4571 = vld [vmem:[#allocation7 + $0x98] sm:$0xff]
    %v4572 = vld [vmem:[#allocation7 + $0xa0] sm:$0xff]
    %v4573 = vld [vmem:[#allocation7 + $0xa8] sm:$0xff]
    %v4574 = vld [vmem:[#allocation7 + $0xb0] sm:$0xff]
    %v4575 = vld [vmem:[#allocation7 + $0xb8] sm:$0xff]
    %v4576 = vld [vmem:[#allocation7 + $0xc0] sm:$0xff]
    %v4577 = vld [vmem:[#allocation7 + $0xc8] sm:$0xff]
    %v4578 = vld [vmem:[#allocation7 + $0xd0] sm:$0xff]
    %v4579 = vld [vmem:[#allocation7 + $0xd8] sm:$0xff]
    %v4580 = vld [vmem:[#allocation7 + $0xe0] sm:$0xff]
    %v4581 = vld [vmem:[#allocation7 + $0xe8] sm:$0xff]
    %v4582 = vld [vmem:[#allocation7 + $0xf0] sm:$0xff]
    %v4583 = vld [vmem:[#allocation7 + $0xf8] sm:$0xff]
    %v4584 = vld [vmem:[#allocation7 + $0x100] sm:$0xff]
    %v4585 = vld [vmem:[#allocation7 + $0x108] sm:$0xff]
    %v4586 = vld [vmem:[#allocation7 + $0x110] sm:$0xff]
    %v4587 = vld [vmem:[#allocation7 + $0x118] sm:$0xff]
    %v4588 = vld [vmem:[#allocation7 + $0x120] sm:$0xff]
    %v4589 = vld [vmem:[#allocation7 + $0x128] sm:$0xff]
    %v4590 = vld [vmem:[#allocation7 + $0x130] sm:$0xff]
    %v4591 = vld [vmem:[#allocation7 + $0x138] sm:$0xff]
    %v4592 = vld [vmem:[#allocation7 + $0x140] sm:$0xff]
    %v4593 = vld [vmem:[#allocation7 + $0x148] sm:$0xff]
    %v4594 = vld [vmem:[#allocation7 + $0x150] sm:$0xff]
    %v4595 = vld [vmem:[#allocation7 + $0x158] sm:$0xff]
    %v4596 = vld [vmem:[#allocation7 + $0x160] sm:$0xff]
    %v4597 = vld [vmem:[#allocation7 + $0x168] sm:$0xff]
    %v4598 = vld [vmem:[#allocation7 + $0x170] sm:$0xff]
    %v4599 = vld [vmem:[#allocation7 + $0x178] sm:$0xff]
    %v4600 = vld [vmem:[#allocation7 + $0x180] sm:$0xff]
    %v4601 = vld [vmem:[#allocation7 + $0x188] sm:$0xff]
    %v4602 = vld [vmem:[#allocation7 + $0x190] sm:$0xff]
    %v4603 = vld [vmem:[#allocation7 + $0x198] sm:$0xff]
    %v4604 = vld [vmem:[#allocation7 + $0x1a0] sm:$0xff]
    %v4605 = vld [vmem:[#allocation7 + $0x1a8] sm:$0xff]
    %v4606 = vld [vmem:[#allocation7 + $0x1b0] sm:$0xff]
    %v4607 = vld [vmem:[#allocation7 + $0x1b8] sm:$0xff]
    %v4608 = vld [vmem:[#allocation7 + $0x1c0] sm:$0xff]
    %v4609 = vld [vmem:[#allocation7 + $0x1c8] sm:$0xff]
    %v4610 = vld [vmem:[#allocation7 + $0x1d0] sm:$0xff]
    %v4611 = vld [vmem:[#allocation7 + $0x1d8] sm:$0xff]
    %v4612 = vld [vmem:[#allocation7 + $0x1e0] sm:$0xff]
    %v4613 = vld [vmem:[#allocation7 + $0x1e8] sm:$0xff]
    %v4614 = vld [vmem:[#allocation7 + $0x1f0] sm:$0xff]
    %v4615 = vld [vmem:[#allocation7 + $0x1f8] sm:$0xff]
    %v4616 = vld [vmem:[#allocation7 + $0x200] sm:$0xff]
    %v4617 = vld [vmem:[#allocation7 + $0x208] sm:$0xff]
    %v4618 = vld [vmem:[#allocation7 + $0x210] sm:$0xff]
    %v4619 = vld [vmem:[#allocation7 + $0x218] sm:$0xff]
    %v4620 = vld [vmem:[#allocation7 + $0x220] sm:$0xff]
    %v4621 = vld [vmem:[#allocation7 + $0x228] sm:$0xff]
    %v4622 = vld [vmem:[#allocation7 + $0x230] sm:$0xff]
    %v4623 = vld [vmem:[#allocation7 + $0x238] sm:$0xff]
    %v4624 = vld [vmem:[#allocation7 + $0x240] sm:$0xff]
    %v4625 = vld [vmem:[#allocation7 + $0x248] sm:$0xff]
    %v4626 = vld [vmem:[#allocation7 + $0x250] sm:$0xff]
    %v4627 = vld [vmem:[#allocation7 + $0x258] sm:$0xff]
    %v4628 = vld [vmem:[#allocation7 + $0x260] sm:$0xff]
    %v4629 = vld [vmem:[#allocation7 + $0x268] sm:$0xff]
    %v4630 = vld [vmem:[#allocation7 + $0x270] sm:$0xff]
    %v4631 = vld [vmem:[#allocation7 + $0x278] sm:$0xff]
    %v4632 = vld [vmem:[#allocation7 + $0x280] sm:$0xff]
    %v4633 = vld [vmem:[#allocation7 + $0x288] sm:$0xff]
    %v4634 = vld [vmem:[#allocation7 + $0x290] sm:$0xff]
    %v4635 = vld [vmem:[#allocation7 + $0x298] sm:$0xff]
    %v4636 = vld [vmem:[#allocation7 + $0x2a0] sm:$0xff]
    %v4637 = vld [vmem:[#allocation7 + $0x2a8] sm:$0xff]
    %v4638 = vld [vmem:[#allocation7 + $0x2b0] sm:$0xff]
    %v4639 = vld [vmem:[#allocation7 + $0x2b8] sm:$0xff]
    %v4640 = vld [vmem:[#allocation7 + $0x2c0] sm:$0xff]
    %v4641 = vld [vmem:[#allocation7 + $0x2c8] sm:$0xff]
    %v4642 = vld [vmem:[#allocation7 + $0x2d0] sm:$0xff]
    %v4643 = vld [vmem:[#allocation7 + $0x2d8] sm:$0xff]
    %v4644 = vld [vmem:[#allocation7 + $0x2e0] sm:$0xff]
    %v4645 = vld [vmem:[#allocation7 + $0x2e8] sm:$0xff]
    %v4646 = vld [vmem:[#allocation7 + $0x2f0] sm:$0xff]
    %v4647 = vld [vmem:[#allocation7 + $0x2f8] sm:$0xff]
    %v4648 = vld [vmem:[#allocation7 + $0x300] sm:$0xff]
    %v4649 = vld [vmem:[#allocation7 + $0x308] sm:$0xff]
    %v4650 = vld [vmem:[#allocation7 + $0x310] sm:$0xff]
    %v4651 = vld [vmem:[#allocation7 + $0x318] sm:$0xff]
    %v4652 = vld [vmem:[#allocation7 + $0x320] sm:$0xff]
    %v4653 = vld [vmem:[#allocation7 + $0x328] sm:$0xff]
    %v4654 = vld [vmem:[#allocation7 + $0x330] sm:$0xff]
    %v4655 = vld [vmem:[#allocation7 + $0x338] sm:$0xff]
    %v4656 = vld [vmem:[#allocation7 + $0x340] sm:$0xff]
    %v4657 = vld [vmem:[#allocation7 + $0x348] sm:$0xff]
    %v4658 = vld [vmem:[#allocation7 + $0x350] sm:$0xff]
    %v4659 = vld [vmem:[#allocation7 + $0x358] sm:$0xff]
    %v4660 = vld [vmem:[#allocation7 + $0x360] sm:$0xff]
    %v4661 = vld [vmem:[#allocation7 + $0x368] sm:$0xff]
    %v4662 = vld [vmem:[#allocation7 + $0x370] sm:$0xff]
    %v4663 = vld [vmem:[#allocation7 + $0x378] sm:$0xff]
    %v4664 = vld [vmem:[#allocation7 + $0x380] sm:$0xff]
    %v4665 = vld [vmem:[#allocation7 + $0x388] sm:$0xff]
    %v4666 = vld [vmem:[#allocation7 + $0x390] sm:$0xff]
    %v4667 = vld [vmem:[#allocation7 + $0x398] sm:$0xff]
    %v4668 = vld [vmem:[#allocation7 + $0x3a0] sm:$0xff]
    %v4669 = vld [vmem:[#allocation7 + $0x3a8] sm:$0xff]
    %v4670 = vld [vmem:[#allocation7 + $0x3b0] sm:$0xff]
    %v4671 = vld [vmem:[#allocation7 + $0x3b8] sm:$0xff]
    %v4672 = vld [vmem:[#allocation7 + $0x3c0] sm:$0xff]
    %v4673 = vld [vmem:[#allocation7 + $0x3c8] sm:$0xff]
    %v4674 = vld [vmem:[#allocation7 + $0x3d0] sm:$0xff]
    %v4675 = vld [vmem:[#allocation7 + $0x3d8] sm:$0xff]
    %v4676 = vld [vmem:[#allocation7 + $0x3e0] sm:$0xff]
    %v4677 = vld [vmem:[#allocation7 + $0x3e8] sm:$0xff]
    %v4678 = vld [vmem:[#allocation7 + $0x3f0] sm:$0xff]
    %v4679 = vld [vmem:[#allocation7 + $0x3f8] sm:$0xff]
    %4680 = vset.pattern.permute.xlu0 3
    %4681 = vperm.xlu0 %4680, %v66
    %v4682 = vpop.permute.xlu0 %4681
    %4684 = vset.pattern.permute.xlu0 3
    %4685 = vperm.xlu0 %4684, %v67
    %v4686 = vpop.permute.xlu0 %4685
    %4688 = vset.pattern.permute.xlu0 3
    %4689 = vperm.xlu0 %4688, %v68
    %v4690 = vpop.permute.xlu0 %4689
    %4692 = vset.pattern.permute.xlu0 3
    %4693 = vperm.xlu0 %4692, %v69
    %v4694 = vpop.permute.xlu0 %4693
    %4696 = vset.pattern.permute.xlu0 3
    %4697 = vperm.xlu0 %4696, %v70
    %v4698 = vpop.permute.xlu0 %4697
    %4700 = vset.pattern.permute.xlu0 3
    %4701 = vperm.xlu0 %4700, %v71
    %v4702 = vpop.permute.xlu0 %4701
    %4704 = vset.pattern.permute.xlu0 3
    %4705 = vperm.xlu0 %4704, %v72
    %v4706 = vpop.permute.xlu0 %4705
    %4708 = vset.pattern.permute.xlu0 3
    %4709 = vperm.xlu0 %4708, %v73
    %v4710 = vpop.permute.xlu0 %4709
    %4712 = vset.pattern.permute.xlu0 3
    %4713 = vperm.xlu0 %4712, %v74
    %v4714 = vpop.permute.xlu0 %4713
    %4716 = vset.pattern.permute.xlu0 3
    %4717 = vperm.xlu0 %4716, %v75
    %v4718 = vpop.permute.xlu0 %4717
    %4720 = vset.pattern.permute.xlu0 3
    %4721 = vperm.xlu0 %4720, %v76
    %v4722 = vpop.permute.xlu0 %4721
    %4724 = vset.pattern.permute.xlu0 3
    %4725 = vperm.xlu0 %4724, %v77
    %v4726 = vpop.permute.xlu0 %4725
    %4728 = vset.pattern.permute.xlu0 3
    %4729 = vperm.xlu0 %4728, %v78
    %v4730 = vpop.permute.xlu0 %4729
    %4732 = vset.pattern.permute.xlu0 3
    %4733 = vperm.xlu0 %4732, %v79
    %v4734 = vpop.permute.xlu0 %4733
    %4736 = vset.pattern.permute.xlu0 3
    %4737 = vperm.xlu0 %4736, %v80
    %v4738 = vpop.permute.xlu0 %4737
    %4740 = vset.pattern.permute.xlu0 3
    %4741 = vperm.xlu0 %4740, %v81
    %v4742 = vpop.permute.xlu0 %4741
    %4744 = vset.pattern.permute.xlu0 3
    %4745 = vperm.xlu0 %4744, %v82
    %v4746 = vpop.permute.xlu0 %4745
    %4748 = vset.pattern.permute.xlu0 3
    %4749 = vperm.xlu0 %4748, %v83
    %v4750 = vpop.permute.xlu0 %4749
    %4752 = vset.pattern.permute.xlu0 3
    %4753 = vperm.xlu0 %4752, %v84
    %v4754 = vpop.permute.xlu0 %4753
    %4756 = vset.pattern.permute.xlu0 3
    %4757 = vperm.xlu0 %4756, %v85
    %v4758 = vpop.permute.xlu0 %4757
    %4760 = vset.pattern.permute.xlu0 3
    %4761 = vperm.xlu0 %4760, %v86
    %v4762 = vpop.permute.xlu0 %4761
    %4764 = vset.pattern.permute.xlu0 3
    %4765 = vperm.xlu0 %4764, %v87
    %v4766 = vpop.permute.xlu0 %4765
    %4768 = vset.pattern.permute.xlu0 3
    %4769 = vperm.xlu0 %4768, %v88
    %v4770 = vpop.permute.xlu0 %4769
    %4772 = vset.pattern.permute.xlu0 3
    %4773 = vperm.xlu0 %4772, %v89
    %v4774 = vpop.permute.xlu0 %4773
    %4776 = vset.pattern.permute.xlu0 3
    %4777 = vperm.xlu0 %4776, %v90
    %v4778 = vpop.permute.xlu0 %4777
    %4780 = vset.pattern.permute.xlu0 3
    %4781 = vperm.xlu0 %4780, %v91
    %v4782 = vpop.permute.xlu0 %4781
    %4784 = vset.pattern.permute.xlu0 3
    %4785 = vperm.xlu0 %4784, %v92
    %v4786 = vpop.permute.xlu0 %4785
    %4788 = vset.pattern.permute.xlu0 3
    %4789 = vperm.xlu0 %4788, %v93
    %v4790 = vpop.permute.xlu0 %4789
    %4792 = vset.pattern.permute.xlu0 3
    %4793 = vperm.xlu0 %4792, %v94
    %v4794 = vpop.permute.xlu0 %4793
    %4796 = vset.pattern.permute.xlu0 3
    %4797 = vperm.xlu0 %4796, %v95
    %v4798 = vpop.permute.xlu0 %4797
    %4800 = vset.pattern.permute.xlu0 3
    %4801 = vperm.xlu0 %4800, %v96
    %v4802 = vpop.permute.xlu0 %4801
    %4804 = vset.pattern.permute.xlu0 3
    %4805 = vperm.xlu0 %4804, %v97
    %v4806 = vpop.permute.xlu0 %4805
    %4808 = vset.pattern.permute.xlu0 3
    %4809 = vperm.xlu0 %4808, %v98
    %v4810 = vpop.permute.xlu0 %4809
    %4812 = vset.pattern.permute.xlu0 3
    %4813 = vperm.xlu0 %4812, %v99
    %v4814 = vpop.permute.xlu0 %4813
    %4816 = vset.pattern.permute.xlu0 3
    %4817 = vperm.xlu0 %4816, %v100
    %v4818 = vpop.permute.xlu0 %4817
    %4820 = vset.pattern.permute.xlu0 3
    %4821 = vperm.xlu0 %4820, %v101
    %v4822 = vpop.permute.xlu0 %4821
    %4824 = vset.pattern.permute.xlu0 3
    %4825 = vperm.xlu0 %4824, %v102
    %v4826 = vpop.permute.xlu0 %4825
    %4828 = vset.pattern.permute.xlu0 3
    %4829 = vperm.xlu0 %4828, %v103
    %v4830 = vpop.permute.xlu0 %4829
    %4832 = vset.pattern.permute.xlu0 3
    %4833 = vperm.xlu0 %4832, %v104
    %v4834 = vpop.permute.xlu0 %4833
    %4836 = vset.pattern.permute.xlu0 3
    %4837 = vperm.xlu0 %4836, %v105
    %v4838 = vpop.permute.xlu0 %4837
    %4840 = vset.pattern.permute.xlu0 3
    %4841 = vperm.xlu0 %4840, %v106
    %v4842 = vpop.permute.xlu0 %4841
    %4844 = vset.pattern.permute.xlu0 3
    %4845 = vperm.xlu0 %4844, %v107
    %v4846 = vpop.permute.xlu0 %4845
    %4848 = vset.pattern.permute.xlu0 3
    %4849 = vperm.xlu0 %4848, %v108
    %v4850 = vpop.permute.xlu0 %4849
    %4852 = vset.pattern.permute.xlu0 3
    %4853 = vperm.xlu0 %4852, %v109
    %v4854 = vpop.permute.xlu0 %4853
    %4856 = vset.pattern.permute.xlu0 3
    %4857 = vperm.xlu0 %4856, %v110
    %v4858 = vpop.permute.xlu0 %4857
    %4860 = vset.pattern.permute.xlu0 3
    %4861 = vperm.xlu0 %4860, %v111
    %v4862 = vpop.permute.xlu0 %4861
    %4864 = vset.pattern.permute.xlu0 3
    %4865 = vperm.xlu0 %4864, %v112
    %v4866 = vpop.permute.xlu0 %4865
    %4868 = vset.pattern.permute.xlu0 3
    %4869 = vperm.xlu0 %4868, %v113
    %v4870 = vpop.permute.xlu0 %4869
    %4872 = vset.pattern.permute.xlu0 3
    %4873 = vperm.xlu0 %4872, %v114
    %v4874 = vpop.permute.xlu0 %4873
    %4876 = vset.pattern.permute.xlu0 3
    %4877 = vperm.xlu0 %4876, %v115
    %v4878 = vpop.permute.xlu0 %4877
    %4880 = vset.pattern.permute.xlu0 3
    %4881 = vperm.xlu0 %4880, %v116
    %v4882 = vpop.permute.xlu0 %4881
    %4884 = vset.pattern.permute.xlu0 3
    %4885 = vperm.xlu0 %4884, %v117
    %v4886 = vpop.permute.xlu0 %4885
    %4888 = vset.pattern.permute.xlu0 3
    %4889 = vperm.xlu0 %4888, %v118
    %v4890 = vpop.permute.xlu0 %4889
    %4892 = vset.pattern.permute.xlu0 3
    %4893 = vperm.xlu0 %4892, %v119
    %v4894 = vpop.permute.xlu0 %4893
    %4896 = vset.pattern.permute.xlu0 3
    %4897 = vperm.xlu0 %4896, %v120
    %v4898 = vpop.permute.xlu0 %4897
    %4900 = vset.pattern.permute.xlu0 3
    %4901 = vperm.xlu0 %4900, %v121
    %v4902 = vpop.permute.xlu0 %4901
    %4904 = vset.pattern.permute.xlu0 3
    %4905 = vperm.xlu0 %4904, %v122
    %v4906 = vpop.permute.xlu0 %4905
    %4908 = vset.pattern.permute.xlu0 3
    %4909 = vperm.xlu0 %4908, %v123
    %v4910 = vpop.permute.xlu0 %4909
    %4912 = vset.pattern.permute.xlu0 3
    %4913 = vperm.xlu0 %4912, %v124
    %v4914 = vpop.permute.xlu0 %4913
    %4916 = vset.pattern.permute.xlu0 3
    %4917 = vperm.xlu0 %4916, %v125
    %v4918 = vpop.permute.xlu0 %4917
    %4920 = vset.pattern.permute.xlu0 3
    %4921 = vperm.xlu0 %4920, %v126
    %v4922 = vpop.permute.xlu0 %4921
    %4924 = vset.pattern.permute.xlu0 3
    %4925 = vperm.xlu0 %4924, %v127
    %v4926 = vpop.permute.xlu0 %4925
    %4928 = vset.pattern.permute.xlu0 3
    %4929 = vperm.xlu0 %4928, %v128
    %v4930 = vpop.permute.xlu0 %4929
    %4932 = vset.pattern.permute.xlu0 3
    %4933 = vperm.xlu0 %4932, %v129
    %v4934 = vpop.permute.xlu0 %4933
    %v5064 = vunpack.c.l.b16 %v4552
    %v5065 = vunpack.c.h.b16 %v4552
    %v5066 = vunpack.c.l.b16 %v4553
    %v5067 = vunpack.c.h.b16 %v4553
    %v5068 = vunpack.c.l.b16 %v4554
    %v5069 = vunpack.c.h.b16 %v4554
    %v5070 = vunpack.c.l.b16 %v4555
    %v5071 = vunpack.c.h.b16 %v4555
    %v5072 = vunpack.c.l.b16 %v4556
    %v5073 = vunpack.c.h.b16 %v4556
    %v5074 = vunpack.c.l.b16 %v4557
    %v5075 = vunpack.c.h.b16 %v4557
    %v5076 = vunpack.c.l.b16 %v4558
    %v5077 = vunpack.c.h.b16 %v4558
    %v5078 = vunpack.c.l.b16 %v4559
    %v5079 = vunpack.c.h.b16 %v4559
    %v5080 = vunpack.c.l.b16 %v4560
    %v5081 = vunpack.c.h.b16 %v4560
    %v5082 = vunpack.c.l.b16 %v4561
    %v5083 = vunpack.c.h.b16 %v4561
    %v5084 = vunpack.c.l.b16 %v4562
    %v5085 = vunpack.c.h.b16 %v4562
    %v5086 = vunpack.c.l.b16 %v4563
    %v5087 = vunpack.c.h.b16 %v4563
    %v5088 = vunpack.c.l.b16 %v4564
    %v5089 = vunpack.c.h.b16 %v4564
    %v5090 = vunpack.c.l.b16 %v4565
    %v5091 = vunpack.c.h.b16 %v4565
    %v5092 = vunpack.c.l.b16 %v4566
    %v5093 = vunpack.c.h.b16 %v4566
    %v5094 = vunpack.c.l.b16 %v4567
    %v5095 = vunpack.c.h.b16 %v4567
    %v5096 = vunpack.c.l.b16 %v4568
    %v5097 = vunpack.c.h.b16 %v4568
    %v5098 = vunpack.c.l.b16 %v4569
    %v5099 = vunpack.c.h.b16 %v4569
    %v5100 = vunpack.c.l.b16 %v4570
    %v5101 = vunpack.c.h.b16 %v4570
    %v5102 = vunpack.c.l.b16 %v4571
    %v5103 = vunpack.c.h.b16 %v4571
    %v5104 = vunpack.c.l.b16 %v4572
    %v5105 = vunpack.c.h.b16 %v4572
    %v5106 = vunpack.c.l.b16 %v4573
    %v5107 = vunpack.c.h.b16 %v4573
    %v5108 = vunpack.c.l.b16 %v4574
    %v5109 = vunpack.c.h.b16 %v4574
    %v5110 = vunpack.c.l.b16 %v4575
    %v5111 = vunpack.c.h.b16 %v4575
    %v5112 = vunpack.c.l.b16 %v4576
    %v5113 = vunpack.c.h.b16 %v4576
    %v5114 = vunpack.c.l.b16 %v4577
    %v5115 = vunpack.c.h.b16 %v4577
    %v5116 = vunpack.c.l.b16 %v4578
    %v5117 = vunpack.c.h.b16 %v4578
    %v5118 = vunpack.c.l.b16 %v4579
    %v5119 = vunpack.c.h.b16 %v4579
    %v5120 = vunpack.c.l.b16 %v4580
    %v5121 = vunpack.c.h.b16 %v4580
    %v5122 = vunpack.c.l.b16 %v4581
    %v5123 = vunpack.c.h.b16 %v4581
    %v5124 = vunpack.c.l.b16 %v4582
    %v5125 = vunpack.c.h.b16 %v4582
    %v5126 = vunpack.c.l.b16 %v4583
    %v5127 = vunpack.c.h.b16 %v4583
    %v5128 = vunpack.c.l.b16 %v4584
    %v5129 = vunpack.c.h.b16 %v4584
    %v5130 = vunpack.c.l.b16 %v4585
    %v5131 = vunpack.c.h.b16 %v4585
    %v5132 = vunpack.c.l.b16 %v4586
    %v5133 = vunpack.c.h.b16 %v4586
    %v5134 = vunpack.c.l.b16 %v4587
    %v5135 = vunpack.c.h.b16 %v4587
    %v5136 = vunpack.c.l.b16 %v4588
    %v5137 = vunpack.c.h.b16 %v4588
    %v5138 = vunpack.c.l.b16 %v4589
    %v5139 = vunpack.c.h.b16 %v4589
    %v5140 = vunpack.c.l.b16 %v4590
    %v5141 = vunpack.c.h.b16 %v4590
    %v5142 = vunpack.c.l.b16 %v4591
    %v5143 = vunpack.c.h.b16 %v4591
    %v5144 = vunpack.c.l.b16 %v4592
    %v5145 = vunpack.c.h.b16 %v4592
    %v5146 = vunpack.c.l.b16 %v4593
    %v5147 = vunpack.c.h.b16 %v4593
    %v5148 = vunpack.c.l.b16 %v4594
    %v5149 = vunpack.c.h.b16 %v4594
    %v5150 = vunpack.c.l.b16 %v4595
    %v5151 = vunpack.c.h.b16 %v4595
    %v5152 = vunpack.c.l.b16 %v4596
    %v5153 = vunpack.c.h.b16 %v4596
    %v5154 = vunpack.c.l.b16 %v4597
    %v5155 = vunpack.c.h.b16 %v4597
    %v5156 = vunpack.c.l.b16 %v4598
    %v5157 = vunpack.c.h.b16 %v4598
    %v5158 = vunpack.c.l.b16 %v4599
    %v5159 = vunpack.c.h.b16 %v4599
    %v5160 = vunpack.c.l.b16 %v4600
    %v5161 = vunpack.c.h.b16 %v4600
    %v5162 = vunpack.c.l.b16 %v4601
    %v5163 = vunpack.c.h.b16 %v4601
    %v5164 = vunpack.c.l.b16 %v4602
    %v5165 = vunpack.c.h.b16 %v4602
    %v5166 = vunpack.c.l.b16 %v4603
    %v5167 = vunpack.c.h.b16 %v4603
    %v5168 = vunpack.c.l.b16 %v4604
    %v5169 = vunpack.c.h.b16 %v4604
    %v5170 = vunpack.c.l.b16 %v4605
    %v5171 = vunpack.c.h.b16 %v4605
    %v5172 = vunpack.c.l.b16 %v4606
    %v5173 = vunpack.c.h.b16 %v4606
    %v5174 = vunpack.c.l.b16 %v4607
    %v5175 = vunpack.c.h.b16 %v4607
    %v5176 = vunpack.c.l.b16 %v4608
    %v5177 = vunpack.c.h.b16 %v4608
    %v5178 = vunpack.c.l.b16 %v4609
    %v5179 = vunpack.c.h.b16 %v4609
    %v5180 = vunpack.c.l.b16 %v4610
    %v5181 = vunpack.c.h.b16 %v4610
    %v5182 = vunpack.c.l.b16 %v4611
    %v5183 = vunpack.c.h.b16 %v4611
    %v5184 = vunpack.c.l.b16 %v4612
    %v5185 = vunpack.c.h.b16 %v4612
    %v5186 = vunpack.c.l.b16 %v4613
    %v5187 = vunpack.c.h.b16 %v4613
    %v5188 = vunpack.c.l.b16 %v4614
    %v5189 = vunpack.c.h.b16 %v4614
    %v5190 = vunpack.c.l.b16 %v4615
    %v5191 = vunpack.c.h.b16 %v4615
    %v5192 = vunpack.c.l.b16 %v4616
    %v5193 = vunpack.c.h.b16 %v4616
    %v5194 = vunpack.c.l.b16 %v4617
    %v5195 = vunpack.c.h.b16 %v4617
    %v5196 = vunpack.c.l.b16 %v4618
    %v5197 = vunpack.c.h.b16 %v4618
    %v5198 = vunpack.c.l.b16 %v4619
    %v5199 = vunpack.c.h.b16 %v4619
    %v5200 = vunpack.c.l.b16 %v4620
    %v5201 = vunpack.c.h.b16 %v4620
    %v5202 = vunpack.c.l.b16 %v4621
    %v5203 = vunpack.c.h.b16 %v4621
    %v5204 = vunpack.c.l.b16 %v4622
    %v5205 = vunpack.c.h.b16 %v4622
    %v5206 = vunpack.c.l.b16 %v4623
    %v5207 = vunpack.c.h.b16 %v4623
    %v5208 = vunpack.c.l.b16 %v4624
    %v5209 = vunpack.c.h.b16 %v4624
    %v5210 = vunpack.c.l.b16 %v4625
    %v5211 = vunpack.c.h.b16 %v4625
    %v5212 = vunpack.c.l.b16 %v4626
    %v5213 = vunpack.c.h.b16 %v4626
    %v5214 = vunpack.c.l.b16 %v4627
    %v5215 = vunpack.c.h.b16 %v4627
    %v5216 = vunpack.c.l.b16 %v4628
    %v5217 = vunpack.c.h.b16 %v4628
    %v5218 = vunpack.c.l.b16 %v4629
    %v5219 = vunpack.c.h.b16 %v4629
    %v5220 = vunpack.c.l.b16 %v4630
    %v5221 = vunpack.c.h.b16 %v4630
    %v5222 = vunpack.c.l.b16 %v4631
    %v5223 = vunpack.c.h.b16 %v4631
    %v5224 = vunpack.c.l.b16 %v4632
    %v5225 = vunpack.c.h.b16 %v4632
    %v5226 = vunpack.c.l.b16 %v4633
    %v5227 = vunpack.c.h.b16 %v4633
    %v5228 = vunpack.c.l.b16 %v4634
    %v5229 = vunpack.c.h.b16 %v4634
    %v5230 = vunpack.c.l.b16 %v4635
    %v5231 = vunpack.c.h.b16 %v4635
    %v5232 = vunpack.c.l.b16 %v4636
    %v5233 = vunpack.c.h.b16 %v4636
    %v5234 = vunpack.c.l.b16 %v4637
    %v5235 = vunpack.c.h.b16 %v4637
    %v5236 = vunpack.c.l.b16 %v4638
    %v5237 = vunpack.c.h.b16 %v4638
    %v5238 = vunpack.c.l.b16 %v4639
    %v5239 = vunpack.c.h.b16 %v4639
    %v5240 = vunpack.c.l.b16 %v4640
    %v5241 = vunpack.c.h.b16 %v4640
    %v5242 = vunpack.c.l.b16 %v4641
    %v5243 = vunpack.c.h.b16 %v4641
    %v5244 = vunpack.c.l.b16 %v4642
    %v5245 = vunpack.c.h.b16 %v4642
    %v5246 = vunpack.c.l.b16 %v4643
    %v5247 = vunpack.c.h.b16 %v4643
    %v5248 = vunpack.c.l.b16 %v4644
    %v5249 = vunpack.c.h.b16 %v4644
    %v5250 = vunpack.c.l.b16 %v4645
    %v5251 = vunpack.c.h.b16 %v4645
    %v5252 = vunpack.c.l.b16 %v4646
    %v5253 = vunpack.c.h.b16 %v4646
    %v5254 = vunpack.c.l.b16 %v4647
    %v5255 = vunpack.c.h.b16 %v4647
    %v5256 = vunpack.c.l.b16 %v4648
    %v5257 = vunpack.c.h.b16 %v4648
    %v5258 = vunpack.c.l.b16 %v4649
    %v5259 = vunpack.c.h.b16 %v4649
    %v5260 = vunpack.c.l.b16 %v4650
    %v5261 = vunpack.c.h.b16 %v4650
    %v5262 = vunpack.c.l.b16 %v4651
    %v5263 = vunpack.c.h.b16 %v4651
    %v5264 = vunpack.c.l.b16 %v4652
    %v5265 = vunpack.c.h.b16 %v4652
    %v5266 = vunpack.c.l.b16 %v4653
    %v5267 = vunpack.c.h.b16 %v4653
    %v5268 = vunpack.c.l.b16 %v4654
    %v5269 = vunpack.c.h.b16 %v4654
    %v5270 = vunpack.c.l.b16 %v4655
    %v5271 = vunpack.c.h.b16 %v4655
    %v5272 = vunpack.c.l.b16 %v4656
    %v5273 = vunpack.c.h.b16 %v4656
    %v5274 = vunpack.c.l.b16 %v4657
    %v5275 = vunpack.c.h.b16 %v4657
    %v5276 = vunpack.c.l.b16 %v4658
    %v5277 = vunpack.c.h.b16 %v4658
    %v5278 = vunpack.c.l.b16 %v4659
    %v5279 = vunpack.c.h.b16 %v4659
    %v5280 = vunpack.c.l.b16 %v4660
    %v5281 = vunpack.c.h.b16 %v4660
    %v5282 = vunpack.c.l.b16 %v4661
    %v5283 = vunpack.c.h.b16 %v4661
    %v5284 = vunpack.c.l.b16 %v4662
    %v5285 = vunpack.c.h.b16 %v4662
    %v5286 = vunpack.c.l.b16 %v4663
    %v5287 = vunpack.c.h.b16 %v4663
    %v5288 = vunpack.c.l.b16 %v4664
    %v5289 = vunpack.c.h.b16 %v4664
    %v5290 = vunpack.c.l.b16 %v4665
    %v5291 = vunpack.c.h.b16 %v4665
    %v5292 = vunpack.c.l.b16 %v4666
    %v5293 = vunpack.c.h.b16 %v4666
    %v5294 = vunpack.c.l.b16 %v4667
    %v5295 = vunpack.c.h.b16 %v4667
    %v5296 = vunpack.c.l.b16 %v4668
    %v5297 = vunpack.c.h.b16 %v4668
    %v5298 = vunpack.c.l.b16 %v4669
    %v5299 = vunpack.c.h.b16 %v4669
    %v5300 = vunpack.c.l.b16 %v4670
    %v5301 = vunpack.c.h.b16 %v4670
    %v5302 = vunpack.c.l.b16 %v4671
    %v5303 = vunpack.c.h.b16 %v4671
    %v5304 = vunpack.c.l.b16 %v4672
    %v5305 = vunpack.c.h.b16 %v4672
    %v5306 = vunpack.c.l.b16 %v4673
    %v5307 = vunpack.c.h.b16 %v4673
    %v5308 = vunpack.c.l.b16 %v4674
    %v5309 = vunpack.c.h.b16 %v4674
    %v5310 = vunpack.c.l.b16 %v4675
    %v5311 = vunpack.c.h.b16 %v4675
    %v5312 = vunpack.c.l.b16 %v4676
    %v5313 = vunpack.c.h.b16 %v4676
    %v5314 = vunpack.c.l.b16 %v4677
    %v5315 = vunpack.c.h.b16 %v4677
    %v5316 = vunpack.c.l.b16 %v4678
    %v5317 = vunpack.c.h.b16 %v4678
    %v5318 = vunpack.c.l.b16 %v4679
    %v5319 = vunpack.c.h.b16 %v4679
    %v5320 = vpack.c.b16 %v5068, %v5064
    %v5321 = vpack.c.b16 %v5069, %v5065
    %v5322 = vpack.c.b16 %v5070, %v5066
    %v5323 = vpack.c.b16 %v5071, %v5067
    %v5324 = vpack.c.b16 %v5076, %v5072
    %v5325 = vpack.c.b16 %v5077, %v5073
    %v5326 = vpack.c.b16 %v5078, %v5074
    %v5327 = vpack.c.b16 %v5079, %v5075
    %v5328 = vpack.c.b16 %v5084, %v5080
    %v5329 = vpack.c.b16 %v5085, %v5081
    %v5330 = vpack.c.b16 %v5086, %v5082
    %v5331 = vpack.c.b16 %v5087, %v5083
    %v5332 = vpack.c.b16 %v5092, %v5088
    %v5333 = vpack.c.b16 %v5093, %v5089
    %v5334 = vpack.c.b16 %v5094, %v5090
    %v5335 = vpack.c.b16 %v5095, %v5091
    %v5336 = vpack.c.b16 %v5100, %v5096
    %v5337 = vpack.c.b16 %v5101, %v5097
    %v5338 = vpack.c.b16 %v5102, %v5098
    %v5339 = vpack.c.b16 %v5103, %v5099
    %v5340 = vpack.c.b16 %v5108, %v5104
    %v5341 = vpack.c.b16 %v5109, %v5105
    %v5342 = vpack.c.b16 %v5110, %v5106
    %v5343 = vpack.c.b16 %v5111, %v5107
    %v5344 = vpack.c.b16 %v5116, %v5112
    %v5345 = vpack.c.b16 %v5117, %v5113
    %v5346 = vpack.c.b16 %v5118, %v5114
    %v5347 = vpack.c.b16 %v5119, %v5115
    %v5348 = vpack.c.b16 %v5124, %v5120
    %v5349 = vpack.c.b16 %v5125, %v5121
    %v5350 = vpack.c.b16 %v5126, %v5122
    %v5351 = vpack.c.b16 %v5127, %v5123
    %v5352 = vpack.c.b16 %v5132, %v5128
    %v5353 = vpack.c.b16 %v5133, %v5129
    %v5354 = vpack.c.b16 %v5134, %v5130
    %v5355 = vpack.c.b16 %v5135, %v5131
    %v5356 = vpack.c.b16 %v5140, %v5136
    %v5357 = vpack.c.b16 %v5141, %v5137
    %v5358 = vpack.c.b16 %v5142, %v5138
    %v5359 = vpack.c.b16 %v5143, %v5139
    %v5360 = vpack.c.b16 %v5148, %v5144
    %v5361 = vpack.c.b16 %v5149, %v5145
    %v5362 = vpack.c.b16 %v5150, %v5146
    %v5363 = vpack.c.b16 %v5151, %v5147
    %v5364 = vpack.c.b16 %v5156, %v5152
    %v5365 = vpack.c.b16 %v5157, %v5153
    %v5366 = vpack.c.b16 %v5158, %v5154
    %v5367 = vpack.c.b16 %v5159, %v5155
    %v5368 = vpack.c.b16 %v5164, %v5160
    %v5369 = vpack.c.b16 %v5165, %v5161
    %v5370 = vpack.c.b16 %v5166, %v5162
    %v5371 = vpack.c.b16 %v5167, %v5163
    %v5372 = vpack.c.b16 %v5172, %v5168
    %v5373 = vpack.c.b16 %v5173, %v5169
    %v5374 = vpack.c.b16 %v5174, %v5170
    %v5375 = vpack.c.b16 %v5175, %v5171
    %v5376 = vpack.c.b16 %v5180, %v5176
    %v5377 = vpack.c.b16 %v5181, %v5177
    %v5378 = vpack.c.b16 %v5182, %v5178
    %v5379 = vpack.c.b16 %v5183, %v5179
    %v5380 = vpack.c.b16 %v5188, %v5184
    %v5381 = vpack.c.b16 %v5189, %v5185
    %v5382 = vpack.c.b16 %v5190, %v5186
    %v5383 = vpack.c.b16 %v5191, %v5187
    %v5384 = vpack.c.b16 %v5196, %v5192
    %v5385 = vpack.c.b16 %v5197, %v5193
    %v5386 = vpack.c.b16 %v5198, %v5194
    %v5387 = vpack.c.b16 %v5199, %v5195
    %v5388 = vpack.c.b16 %v5204, %v5200
    %v5389 = vpack.c.b16 %v5205, %v5201
    %v5390 = vpack.c.b16 %v5206, %v5202
    %v5391 = vpack.c.b16 %v5207, %v5203
    %v5392 = vpack.c.b16 %v5212, %v5208
    %v5393 = vpack.c.b16 %v5213, %v5209
    %v5394 = vpack.c.b16 %v5214, %v5210
    %v5395 = vpack.c.b16 %v5215, %v5211
    %v5396 = vpack.c.b16 %v5220, %v5216
    %v5397 = vpack.c.b16 %v5221, %v5217
    %v5398 = vpack.c.b16 %v5222, %v5218
    %v5399 = vpack.c.b16 %v5223, %v5219
    %v5400 = vpack.c.b16 %v5228, %v5224
    %v5401 = vpack.c.b16 %v5229, %v5225
    %v5402 = vpack.c.b16 %v5230, %v5226
    %v5403 = vpack.c.b16 %v5231, %v5227
    %v5404 = vpack.c.b16 %v5236, %v5232
    %v5405 = vpack.c.b16 %v5237, %v5233
    %v5406 = vpack.c.b16 %v5238, %v5234
    %v5407 = vpack.c.b16 %v5239, %v5235
    %v5408 = vpack.c.b16 %v5244, %v5240
    %v5409 = vpack.c.b16 %v5245, %v5241
    %v5410 = vpack.c.b16 %v5246, %v5242
    %v5411 = vpack.c.b16 %v5247, %v5243
    %v5412 = vpack.c.b16 %v5252, %v5248
    %v5413 = vpack.c.b16 %v5253, %v5249
    %v5414 = vpack.c.b16 %v5254, %v5250
    %v5415 = vpack.c.b16 %v5255, %v5251
    %v5416 = vpack.c.b16 %v5260, %v5256
    %v5417 = vpack.c.b16 %v5261, %v5257
    %v5418 = vpack.c.b16 %v5262, %v5258
    %v5419 = vpack.c.b16 %v5263, %v5259
    %v5420 = vpack.c.b16 %v5268, %v5264
    %v5421 = vpack.c.b16 %v5269, %v5265
    %v5422 = vpack.c.b16 %v5270, %v5266
    %v5423 = vpack.c.b16 %v5271, %v5267
    %v5424 = vpack.c.b16 %v5276, %v5272
    %v5425 = vpack.c.b16 %v5277, %v5273
    %v5426 = vpack.c.b16 %v5278, %v5274
    %v5427 = vpack.c.b16 %v5279, %v5275
    %v5428 = vpack.c.b16 %v5284, %v5280
    %v5429 = vpack.c.b16 %v5285, %v5281
    %v5430 = vpack.c.b16 %v5286, %v5282
    %v5431 = vpack.c.b16 %v5287, %v5283
    %v5432 = vpack.c.b16 %v5292, %v5288
    %v5433 = vpack.c.b16 %v5293, %v5289
    %v5434 = vpack.c.b16 %v5294, %v5290
    %v5435 = vpack.c.b16 %v5295, %v5291
    %v5436 = vpack.c.b16 %v5300, %v5296
    %v5437 = vpack.c.b16 %v5301, %v5297
    %v5438 = vpack.c.b16 %v5302, %v5298
    %v5439 = vpack.c.b16 %v5303, %v5299
    %v5440 = vpack.c.b16 %v5308, %v5304
    %v5441 = vpack.c.b16 %v5309, %v5305
    %v5442 = vpack.c.b16 %v5310, %v5306
    %v5443 = vpack.c.b16 %v5311, %v5307
    %v5444 = vpack.c.b16 %v5316, %v5312
    %v5445 = vpack.c.b16 %v5317, %v5313
    %v5446 = vpack.c.b16 %v5318, %v5314
    %v5447 = vpack.c.b16 %v5319, %v5315
    %5576 = vmatprep.subr.bf16.mxu0 0
    %5577 = vmatpush1.bf16.msra.mxu0 %v4527
    %5578 = vmatprep.subr.bf16.mxu0 0
    %5579 = vmatpush1.bf16.msra.mxu0 %v4526
    %5580 = vmatprep.subr.bf16.mxu0 0
    %5581 = vmatpush1.bf16.msra.mxu0 %v4525
    %5582 = vmatprep.subr.bf16.mxu0 0
    %5583 = vmatpush1.bf16.msra.mxu0 %v4524
    %5584 = vmatprep.subr.bf16.mxu0 0
    %5585 = vmatpush1.bf16.msra.mxu0 %v4523
    %5586 = vmatprep.subr.bf16.mxu0 0
    %5587 = vmatpush1.bf16.msra.mxu0 %v4522
    %5588 = vmatprep.subr.bf16.mxu0 0
    %5589 = vmatpush1.bf16.msra.mxu0 %v4521
    %5590 = vmatprep.subr.bf16.mxu0 0
    %5591 = vmatpush1.bf16.msra.mxu0 %v4520
    %5592 = vmatprep.subr.bf16.mxu0 0
    %5593 = vmatpush2.bf16.msra.mxu0 %v4535
    %5594 = vmatprep.subr.bf16.mxu0 0
    %5595 = vmatpush2.bf16.msra.mxu0 %v4534
    %5596 = vmatprep.subr.bf16.mxu0 0
    %5597 = vmatpush2.bf16.msra.mxu0 %v4533
    %5598 = vmatprep.subr.bf16.mxu0 0
    %5599 = vmatpush2.bf16.msra.mxu0 %v4532
    %5600 = vmatprep.subr.bf16.mxu0 0
    %5601 = vmatpush2.bf16.msra.mxu0 %v4531
    %5602 = vmatprep.subr.bf16.mxu0 0
    %5603 = vmatpush2.bf16.msra.mxu0 %v4530
    %5604 = vmatprep.subr.bf16.mxu0 0
    %5605 = vmatpush2.bf16.msra.mxu0 %v4529
    %5606 = vmatprep.subr.bf16.mxu0 0
    %5607 = vmatpush2.bf16.msra.mxu0 %v4528
    %5608 = vmatprep.mubr.bf16.mxu0 %v5321
    %5609 = vmatmul.mubr.bf16.gmra.mxu0 %v5320
    %v5610 = vpop.f32.mrf.mxu0
    %v5611 = vadd.f32 %v4682, %v5610
    %v5612 = vpop.f32.mrf.mxu0
    %v5613 = vpop.f32.mrf.mxu0
    %v5614 = vadd.f32 %v4686, %v5613
    %v5615 = vpop.f32.mrf.mxu0
    %5616 = vmatprep.mubr.bf16.mxu0 %v5325
    %5617 = vmatmul.mubr.bf16.gmra.mxu0 %v5324
    %v5618 = vpop.f32.mrf.mxu0
    %v5619 = vadd.f32 %v4690, %v5618
    %v5620 = vpop.f32.mrf.mxu0
    %v5621 = vpop.f32.mrf.mxu0
    %v5622 = vadd.f32 %v4694, %v5621
    %v5623 = vpop.f32.mrf.mxu0
    %5624 = vmatprep.mubr.bf16.mxu0 %v5329
    %5625 = vmatmul.mubr.bf16.gmra.mxu0 %v5328
    %v5626 = vpop.f32.mrf.mxu0
    %v5627 = vadd.f32 %v4698, %v5626
    %v5628 = vpop.f32.mrf.mxu0
    %v5629 = vpop.f32.mrf.mxu0
    %v5630 = vadd.f32 %v4702, %v5629
    %v5631 = vpop.f32.mrf.mxu0
    %5632 = vmatprep.mubr.bf16.mxu0 %v5333
    %5633 = vmatmul.mubr.bf16.gmra.mxu0 %v5332
    %v5634 = vpop.f32.mrf.mxu0
    %v5635 = vadd.f32 %v4706, %v5634
    %v5636 = vpop.f32.mrf.mxu0
    %v5637 = vpop.f32.mrf.mxu0
    %v5638 = vadd.f32 %v4710, %v5637
    %v5639 = vpop.f32.mrf.mxu0
    %5640 = vmatprep.mubr.bf16.mxu0 %v5337
    %5641 = vmatmul.mubr.bf16.gmra.mxu0 %v5336
    %v5642 = vpop.f32.mrf.mxu0
    %v5643 = vadd.f32 %v4714, %v5642
    %v5644 = vpop.f32.mrf.mxu0
    %v5645 = vpop.f32.mrf.mxu0
    %v5646 = vadd.f32 %v4718, %v5645
    %v5647 = vpop.f32.mrf.mxu0
    %5648 = vmatprep.mubr.bf16.mxu0 %v5341
    %5649 = vmatmul.mubr.bf16.gmra.mxu0 %v5340
    %v5650 = vpop.f32.mrf.mxu0
    %v5651 = vadd.f32 %v4722, %v5650
    %v5652 = vpop.f32.mrf.mxu0
    %v5653 = vpop.f32.mrf.mxu0
    %v5654 = vadd.f32 %v4726, %v5653
    %v5655 = vpop.f32.mrf.mxu0
    %5656 = vmatprep.mubr.bf16.mxu0 %v5345
    %5657 = vmatmul.mubr.bf16.gmra.mxu0 %v5344
    %v5658 = vpop.f32.mrf.mxu0
    %v5659 = vadd.f32 %v4730, %v5658
    %v5660 = vpop.f32.mrf.mxu0
    %v5661 = vpop.f32.mrf.mxu0
    %v5662 = vadd.f32 %v4734, %v5661
    %v5663 = vpop.f32.mrf.mxu0
    %5664 = vmatprep.mubr.bf16.mxu0 %v5349
    %5665 = vmatmul.mubr.bf16.gmra.mxu0 %v5348
    %v5666 = vpop.f32.mrf.mxu0
    %v5667 = vadd.f32 %v4738, %v5666
    %v5668 = vpop.f32.mrf.mxu0
    %v5669 = vpop.f32.mrf.mxu0
    %v5670 = vadd.f32 %v4742, %v5669
    %v5671 = vpop.f32.mrf.mxu0
    %5672 = vmatprep.mubr.bf16.mxu0 %v5353
    %5673 = vmatmul.mubr.bf16.gmra.mxu0 %v5352
    %v5674 = vpop.f32.mrf.mxu0
    %v5675 = vadd.f32 %v4746, %v5674
    %v5676 = vpop.f32.mrf.mxu0
    %v5677 = vpop.f32.mrf.mxu0
    %v5678 = vadd.f32 %v4750, %v5677
    %v5679 = vpop.f32.mrf.mxu0
    %5680 = vmatprep.mubr.bf16.mxu0 %v5357
    %5681 = vmatmul.mubr.bf16.gmra.mxu0 %v5356
    %v5682 = vpop.f32.mrf.mxu0
    %v5683 = vadd.f32 %v4754, %v5682
    %v5684 = vpop.f32.mrf.mxu0
    %v5685 = vpop.f32.mrf.mxu0
    %v5686 = vadd.f32 %v4758, %v5685
    %v5687 = vpop.f32.mrf.mxu0
    %5688 = vmatprep.mubr.bf16.mxu0 %v5361
    %5689 = vmatmul.mubr.bf16.gmra.mxu0 %v5360
    %v5690 = vpop.f32.mrf.mxu0
    %v5691 = vadd.f32 %v4762, %v5690
    %v5692 = vpop.f32.mrf.mxu0
    %v5693 = vpop.f32.mrf.mxu0
    %v5694 = vadd.f32 %v4766, %v5693
    %v5695 = vpop.f32.mrf.mxu0
    %5696 = vmatprep.mubr.bf16.mxu0 %v5365
    %5697 = vmatmul.mubr.bf16.gmra.mxu0 %v5364
    %v5698 = vpop.f32.mrf.mxu0
    %v5699 = vadd.f32 %v4770, %v5698
    %v5700 = vpop.f32.mrf.mxu0
    %v5701 = vpop.f32.mrf.mxu0
    %v5702 = vadd.f32 %v4774, %v5701
    %v5703 = vpop.f32.mrf.mxu0
    %5704 = vmatprep.mubr.bf16.mxu0 %v5369
    %5705 = vmatmul.mubr.bf16.gmra.mxu0 %v5368
    %v5706 = vpop.f32.mrf.mxu0
    %v5707 = vadd.f32 %v4778, %v5706
    %v5708 = vpop.f32.mrf.mxu0
    %v5709 = vpop.f32.mrf.mxu0
    %v5710 = vadd.f32 %v4782, %v5709
    %v5711 = vpop.f32.mrf.mxu0
    %5712 = vmatprep.mubr.bf16.mxu0 %v5373
    %5713 = vmatmul.mubr.bf16.gmra.mxu0 %v5372
    %v5714 = vpop.f32.mrf.mxu0
    %v5715 = vadd.f32 %v4786, %v5714
    %v5716 = vpop.f32.mrf.mxu0
    %v5717 = vpop.f32.mrf.mxu0
    %v5718 = vadd.f32 %v4790, %v5717
    %v5719 = vpop.f32.mrf.mxu0
    %5720 = vmatprep.mubr.bf16.mxu0 %v5377
    %5721 = vmatmul.mubr.bf16.gmra.mxu0 %v5376
    %v5722 = vpop.f32.mrf.mxu0
    %v5723 = vadd.f32 %v4794, %v5722
    %v5724 = vpop.f32.mrf.mxu0
    %v5725 = vpop.f32.mrf.mxu0
    %v5726 = vadd.f32 %v4798, %v5725
    %v5727 = vpop.f32.mrf.mxu0
    %5728 = vmatprep.mubr.bf16.mxu0 %v5381
    %5729 = vmatmul.mubr.bf16.gmra.mxu0 %v5380
    %v5730 = vpop.f32.mrf.mxu0
    %v5731 = vadd.f32 %v4802, %v5730
    %v5732 = vpop.f32.mrf.mxu0
    %v5733 = vpop.f32.mrf.mxu0
    %v5734 = vadd.f32 %v4806, %v5733
    %v5735 = vpop.f32.mrf.mxu0
    %5736 = vmatprep.mubr.bf16.mxu0 %v5385
    %5737 = vmatmul.mubr.bf16.gmra.mxu0 %v5384
    %v5738 = vpop.f32.mrf.mxu0
    %v5739 = vadd.f32 %v4810, %v5738
    %v5740 = vpop.f32.mrf.mxu0
    %v5741 = vpop.f32.mrf.mxu0
    %v5742 = vadd.f32 %v4814, %v5741
    %v5743 = vpop.f32.mrf.mxu0
    %5744 = vmatprep.mubr.bf16.mxu0 %v5389
    %5745 = vmatmul.mubr.bf16.gmra.mxu0 %v5388
    %v5746 = vpop.f32.mrf.mxu0
    %v5747 = vadd.f32 %v4818, %v5746
    %v5748 = vpop.f32.mrf.mxu0
    %v5749 = vpop.f32.mrf.mxu0
    %v5750 = vadd.f32 %v4822, %v5749
    %v5751 = vpop.f32.mrf.mxu0
    %5752 = vmatprep.mubr.bf16.mxu0 %v5393
    %5753 = vmatmul.mubr.bf16.gmra.mxu0 %v5392
    %v5754 = vpop.f32.mrf.mxu0
    %v5755 = vadd.f32 %v4826, %v5754
    %v5756 = vpop.f32.mrf.mxu0
    %v5757 = vpop.f32.mrf.mxu0
    %v5758 = vadd.f32 %v4830, %v5757
    %v5759 = vpop.f32.mrf.mxu0
    %5760 = vmatprep.mubr.bf16.mxu0 %v5397
    %5761 = vmatmul.mubr.bf16.gmra.mxu0 %v5396
    %v5762 = vpop.f32.mrf.mxu0
    %v5763 = vadd.f32 %v4834, %v5762
    %v5764 = vpop.f32.mrf.mxu0
    %v5765 = vpop.f32.mrf.mxu0
    %v5766 = vadd.f32 %v4838, %v5765
    %v5767 = vpop.f32.mrf.mxu0
    %5768 = vmatprep.mubr.bf16.mxu0 %v5401
    %5769 = vmatmul.mubr.bf16.gmra.mxu0 %v5400
    %v5770 = vpop.f32.mrf.mxu0
    %v5771 = vadd.f32 %v4842, %v5770
    %v5772 = vpop.f32.mrf.mxu0
    %v5773 = vpop.f32.mrf.mxu0
    %v5774 = vadd.f32 %v4846, %v5773
    %v5775 = vpop.f32.mrf.mxu0
    %5776 = vmatprep.mubr.bf16.mxu0 %v5405
    %5777 = vmatmul.mubr.bf16.gmra.mxu0 %v5404
    %v5778 = vpop.f32.mrf.mxu0
    %v5779 = vadd.f32 %v4850, %v5778
    %v5780 = vpop.f32.mrf.mxu0
    %v5781 = vpop.f32.mrf.mxu0
    %v5782 = vadd.f32 %v4854, %v5781
    %v5783 = vpop.f32.mrf.mxu0
    %5784 = vmatprep.mubr.bf16.mxu0 %v5409
    %5785 = vmatmul.mubr.bf16.gmra.mxu0 %v5408
    %v5786 = vpop.f32.mrf.mxu0
    %v5787 = vadd.f32 %v4858, %v5786
    %v5788 = vpop.f32.mrf.mxu0
    %v5789 = vpop.f32.mrf.mxu0
    %v5790 = vadd.f32 %v4862, %v5789
    %v5791 = vpop.f32.mrf.mxu0
    %5792 = vmatprep.mubr.bf16.mxu0 %v5413
    %5793 = vmatmul.mubr.bf16.gmra.mxu0 %v5412
    %v5794 = vpop.f32.mrf.mxu0
    %v5795 = vadd.f32 %v4866, %v5794
    %v5796 = vpop.f32.mrf.mxu0
    %v5797 = vpop.f32.mrf.mxu0
    %v5798 = vadd.f32 %v4870, %v5797
    %v5799 = vpop.f32.mrf.mxu0
    %5800 = vmatprep.mubr.bf16.mxu0 %v5417
    %5801 = vmatmul.mubr.bf16.gmra.mxu0 %v5416
    %v5802 = vpop.f32.mrf.mxu0
    %v5803 = vadd.f32 %v4874, %v5802
    %v5804 = vpop.f32.mrf.mxu0
    %v5805 = vpop.f32.mrf.mxu0
    %v5806 = vadd.f32 %v4878, %v5805
    %v5807 = vpop.f32.mrf.mxu0
    %5808 = vmatprep.mubr.bf16.mxu0 %v5421
    %5809 = vmatmul.mubr.bf16.gmra.mxu0 %v5420
    %v5810 = vpop.f32.mrf.mxu0
    %v5811 = vadd.f32 %v4882, %v5810
    %v5812 = vpop.f32.mrf.mxu0
    %v5813 = vpop.f32.mrf.mxu0
    %v5814 = vadd.f32 %v4886, %v5813
    %v5815 = vpop.f32.mrf.mxu0
    %5816 = vmatprep.mubr.bf16.mxu0 %v5425
    %5817 = vmatmul.mubr.bf16.gmra.mxu0 %v5424
    %v5818 = vpop.f32.mrf.mxu0
    %v5819 = vadd.f32 %v4890, %v5818
    %v5820 = vpop.f32.mrf.mxu0
    %v5821 = vpop.f32.mrf.mxu0
    %v5822 = vadd.f32 %v4894, %v5821
    %v5823 = vpop.f32.mrf.mxu0
    %5824 = vmatprep.mubr.bf16.mxu0 %v5429
    %5825 = vmatmul.mubr.bf16.gmra.mxu0 %v5428
    %v5826 = vpop.f32.mrf.mxu0
    %v5827 = vadd.f32 %v4898, %v5826
    %v5828 = vpop.f32.mrf.mxu0
    %v5829 = vpop.f32.mrf.mxu0
    %v5830 = vadd.f32 %v4902, %v5829
    %v5831 = vpop.f32.mrf.mxu0
    %5832 = vmatprep.mubr.bf16.mxu0 %v5433
    %5833 = vmatmul.mubr.bf16.gmra.mxu0 %v5432
    %v5834 = vpop.f32.mrf.mxu0
    %v5835 = vadd.f32 %v4906, %v5834
    %v5836 = vpop.f32.mrf.mxu0
    %v5837 = vpop.f32.mrf.mxu0
    %v5838 = vadd.f32 %v4910, %v5837
    %v5839 = vpop.f32.mrf.mxu0
    %5840 = vmatprep.mubr.bf16.mxu0 %v5437
    %5841 = vmatmul.mubr.bf16.gmra.mxu0 %v5436
    %v5842 = vpop.f32.mrf.mxu0
    %v5843 = vadd.f32 %v4914, %v5842
    %v5844 = vpop.f32.mrf.mxu0
    %v5845 = vpop.f32.mrf.mxu0
    %v5846 = vadd.f32 %v4918, %v5845
    %v5847 = vpop.f32.mrf.mxu0
    %5848 = vmatprep.mubr.bf16.mxu0 %v5441
    %5849 = vmatmul.mubr.bf16.gmra.mxu0 %v5440
    %v5850 = vpop.f32.mrf.mxu0
    %v5851 = vadd.f32 %v4922, %v5850
    %v5852 = vpop.f32.mrf.mxu0
    %v5853 = vpop.f32.mrf.mxu0
    %v5854 = vadd.f32 %v4926, %v5853
    %v5855 = vpop.f32.mrf.mxu0
    %5856 = vmatprep.mubr.bf16.mxu0 %v5445
    %5857 = vmatmul.mubr.bf16.gmra.mxu0 %v5444
    %v5858 = vpop.f32.mrf.mxu0
    %v5859 = vadd.f32 %v4930, %v5858
    %v5860 = vpop.f32.mrf.mxu0
    %v5861 = vpop.f32.mrf.mxu0
    %v5862 = vadd.f32 %v4934, %v5861
    %v5863 = vpop.f32.mrf.mxu0
    %5864 = vdwg.mxu0
    %5865 = vmatprep.subr.bf16.mxu0 0
    %5866 = vmatpush1.bf16.msra.mxu0 %v4543
    %5867 = vmatprep.subr.bf16.mxu0 0
    %5868 = vmatpush1.bf16.msra.mxu0 %v4542
    %5869 = vmatprep.subr.bf16.mxu0 0
    %5870 = vmatpush1.bf16.msra.mxu0 %v4541
    %5871 = vmatprep.subr.bf16.mxu0 0
    %5872 = vmatpush1.bf16.msra.mxu0 %v4540
    %5873 = vmatprep.subr.bf16.mxu0 0
    %5874 = vmatpush1.bf16.msra.mxu0 %v4539
    %5875 = vmatprep.subr.bf16.mxu0 0
    %5876 = vmatpush1.bf16.msra.mxu0 %v4538
    %5877 = vmatprep.subr.bf16.mxu0 0
    %5878 = vmatpush1.bf16.msra.mxu0 %v4537
    %5879 = vmatprep.subr.bf16.mxu0 0
    %5880 = vmatpush1.bf16.msra.mxu0 %v4536
    %5881 = vmatprep.subr.bf16.mxu0 0
    %5882 = vmatpush2.bf16.msra.mxu0 %v4551
    %5883 = vmatprep.subr.bf16.mxu0 0
    %5884 = vmatpush2.bf16.msra.mxu0 %v4550
    %5885 = vmatprep.subr.bf16.mxu0 0
    %5886 = vmatpush2.bf16.msra.mxu0 %v4549
    %5887 = vmatprep.subr.bf16.mxu0 0
    %5888 = vmatpush2.bf16.msra.mxu0 %v4548
    %5889 = vmatprep.subr.bf16.mxu0 0
    %5890 = vmatpush2.bf16.msra.mxu0 %v4547
    %5891 = vmatprep.subr.bf16.mxu0 0
    %5892 = vmatpush2.bf16.msra.mxu0 %v4546
    %5893 = vmatprep.subr.bf16.mxu0 0
    %5894 = vmatpush2.bf16.msra.mxu0 %v4545
    %5895 = vmatprep.subr.bf16.mxu0 0
    %5896 = vmatpush2.bf16.msra.mxu0 %v4544
    %5897 = vmatprep.mubr.bf16.mxu0 %v5323
    %5898 = vmatmul.mubr.bf16.gmra.mxu0 %v5322
    %v5899 = vpop.f32.mrf.mxu0
    %v5900 = vadd.f32 %v5611, %v5899
    %v5901 = vpop.f32.mrf.mxu0
    %v5902 = vpop.f32.mrf.mxu0
    %v5903 = vadd.f32 %v5614, %v5902
    %v5904 = vpop.f32.mrf.mxu0
    %5905 = vmatprep.mubr.bf16.mxu0 %v5327
    %5906 = vmatmul.mubr.bf16.gmra.mxu0 %v5326
    %v5907 = vpop.f32.mrf.mxu0
    %v5908 = vadd.f32 %v5619, %v5907
    %v5909 = vpop.f32.mrf.mxu0
    %v5910 = vpop.f32.mrf.mxu0
    %v5911 = vadd.f32 %v5622, %v5910
    %v5912 = vpop.f32.mrf.mxu0
    %5913 = vmatprep.mubr.bf16.mxu0 %v5331
    %5914 = vmatmul.mubr.bf16.gmra.mxu0 %v5330
    %v5915 = vpop.f32.mrf.mxu0
    %v5916 = vadd.f32 %v5627, %v5915
    %v5917 = vpop.f32.mrf.mxu0
    %v5918 = vpop.f32.mrf.mxu0
    %v5919 = vadd.f32 %v5630, %v5918
    %v5920 = vpop.f32.mrf.mxu0
    %5921 = vmatprep.mubr.bf16.mxu0 %v5335
    %5922 = vmatmul.mubr.bf16.gmra.mxu0 %v5334
    %v5923 = vpop.f32.mrf.mxu0
    %v5924 = vadd.f32 %v5635, %v5923
    %v5925 = vpop.f32.mrf.mxu0
    %v5926 = vpop.f32.mrf.mxu0
    %v5927 = vadd.f32 %v5638, %v5926
    %v5928 = vpop.f32.mrf.mxu0
    %5929 = vmatprep.mubr.bf16.mxu0 %v5339
    %5930 = vmatmul.mubr.bf16.gmra.mxu0 %v5338
    %v5931 = vpop.f32.mrf.mxu0
    %v5932 = vadd.f32 %v5643, %v5931
    %v5933 = vpop.f32.mrf.mxu0
    %v5934 = vpop.f32.mrf.mxu0
    %v5935 = vadd.f32 %v5646, %v5934
    %v5936 = vpop.f32.mrf.mxu0
    %5937 = vmatprep.mubr.bf16.mxu0 %v5343
    %5938 = vmatmul.mubr.bf16.gmra.mxu0 %v5342
    %v5939 = vpop.f32.mrf.mxu0
    %v5940 = vadd.f32 %v5651, %v5939
    %v5941 = vpop.f32.mrf.mxu0
    %v5942 = vpop.f32.mrf.mxu0
    %v5943 = vadd.f32 %v5654, %v5942
    %v5944 = vpop.f32.mrf.mxu0
    %5945 = vmatprep.mubr.bf16.mxu0 %v5347
    %5946 = vmatmul.mubr.bf16.gmra.mxu0 %v5346
    %v5947 = vpop.f32.mrf.mxu0
    %v5948 = vadd.f32 %v5659, %v5947
    %v5949 = vpop.f32.mrf.mxu0
    %v5950 = vpop.f32.mrf.mxu0
    %v5951 = vadd.f32 %v5662, %v5950
    %v5952 = vpop.f32.mrf.mxu0
    %5953 = vmatprep.mubr.bf16.mxu0 %v5351
    %5954 = vmatmul.mubr.bf16.gmra.mxu0 %v5350
    %v5955 = vpop.f32.mrf.mxu0
    %v5956 = vadd.f32 %v5667, %v5955
    %v5957 = vpop.f32.mrf.mxu0
    %v5958 = vpop.f32.mrf.mxu0
    %v5959 = vadd.f32 %v5670, %v5958
    %v5960 = vpop.f32.mrf.mxu0
    %5961 = vmatprep.mubr.bf16.mxu0 %v5355
    %5962 = vmatmul.mubr.bf16.gmra.mxu0 %v5354
    %v5963 = vpop.f32.mrf.mxu0
    %v5964 = vadd.f32 %v5675, %v5963
    %v5965 = vpop.f32.mrf.mxu0
    %v5966 = vpop.f32.mrf.mxu0
    %v5967 = vadd.f32 %v5678, %v5966
    %v5968 = vpop.f32.mrf.mxu0
    %5969 = vmatprep.mubr.bf16.mxu0 %v5359
    %5970 = vmatmul.mubr.bf16.gmra.mxu0 %v5358
    %v5971 = vpop.f32.mrf.mxu0
    %v5972 = vadd.f32 %v5683, %v5971
    %v5973 = vpop.f32.mrf.mxu0
    %v5974 = vpop.f32.mrf.mxu0
    %v5975 = vadd.f32 %v5686, %v5974
    %v5976 = vpop.f32.mrf.mxu0
    %5977 = vmatprep.mubr.bf16.mxu0 %v5363
    %5978 = vmatmul.mubr.bf16.gmra.mxu0 %v5362
    %v5979 = vpop.f32.mrf.mxu0
    %v5980 = vadd.f32 %v5691, %v5979
    %v5981 = vpop.f32.mrf.mxu0
    %v5982 = vpop.f32.mrf.mxu0
    %v5983 = vadd.f32 %v5694, %v5982
    %v5984 = vpop.f32.mrf.mxu0
    %5985 = vmatprep.mubr.bf16.mxu0 %v5367
    %5986 = vmatmul.mubr.bf16.gmra.mxu0 %v5366
    %v5987 = vpop.f32.mrf.mxu0
    %v5988 = vadd.f32 %v5699, %v5987
    %v5989 = vpop.f32.mrf.mxu0
    %v5990 = vpop.f32.mrf.mxu0
    %v5991 = vadd.f32 %v5702, %v5990
    %v5992 = vpop.f32.mrf.mxu0
    %5993 = vmatprep.mubr.bf16.mxu0 %v5371
    %5994 = vmatmul.mubr.bf16.gmra.mxu0 %v5370
    %v5995 = vpop.f32.mrf.mxu0
    %v5996 = vadd.f32 %v5707, %v5995
    %v5997 = vpop.f32.mrf.mxu0
    %v5998 = vpop.f32.mrf.mxu0
    %v5999 = vadd.f32 %v5710, %v5998
    %v6000 = vpop.f32.mrf.mxu0
    %6001 = vmatprep.mubr.bf16.mxu0 %v5375
    %6002 = vmatmul.mubr.bf16.gmra.mxu0 %v5374
    %v6003 = vpop.f32.mrf.mxu0
    %v6004 = vadd.f32 %v5715, %v6003
    %v6005 = vpop.f32.mrf.mxu0
    %v6006 = vpop.f32.mrf.mxu0
    %v6007 = vadd.f32 %v5718, %v6006
    %v6008 = vpop.f32.mrf.mxu0
    %6009 = vmatprep.mubr.bf16.mxu0 %v5379
    %6010 = vmatmul.mubr.bf16.gmra.mxu0 %v5378
    %v6011 = vpop.f32.mrf.mxu0
    %v6012 = vadd.f32 %v5723, %v6011
    %v6013 = vpop.f32.mrf.mxu0
    %v6014 = vpop.f32.mrf.mxu0
    %v6015 = vadd.f32 %v5726, %v6014
    %v6016 = vpop.f32.mrf.mxu0
    %6017 = vmatprep.mubr.bf16.mxu0 %v5383
    %6018 = vmatmul.mubr.bf16.gmra.mxu0 %v5382
    %v6019 = vpop.f32.mrf.mxu0
    %v6020 = vadd.f32 %v5731, %v6019
    %v6021 = vpop.f32.mrf.mxu0
    %v6022 = vpop.f32.mrf.mxu0
    %v6023 = vadd.f32 %v5734, %v6022
    %v6024 = vpop.f32.mrf.mxu0
    %6025 = vmatprep.mubr.bf16.mxu0 %v5387
    %6026 = vmatmul.mubr.bf16.gmra.mxu0 %v5386
    %v6027 = vpop.f32.mrf.mxu0
    %v6028 = vadd.f32 %v5739, %v6027
    %v6029 = vpop.f32.mrf.mxu0
    %v6030 = vpop.f32.mrf.mxu0
    %v6031 = vadd.f32 %v5742, %v6030
    %v6032 = vpop.f32.mrf.mxu0
    %6033 = vmatprep.mubr.bf16.mxu0 %v5391
    %6034 = vmatmul.mubr.bf16.gmra.mxu0 %v5390
    %v6035 = vpop.f32.mrf.mxu0
    %v6036 = vadd.f32 %v5747, %v6035
    %v6037 = vpop.f32.mrf.mxu0
    %v6038 = vpop.f32.mrf.mxu0
    %v6039 = vadd.f32 %v5750, %v6038
    %v6040 = vpop.f32.mrf.mxu0
    %6041 = vmatprep.mubr.bf16.mxu0 %v5395
    %6042 = vmatmul.mubr.bf16.gmra.mxu0 %v5394
    %v6043 = vpop.f32.mrf.mxu0
    %v6044 = vadd.f32 %v5755, %v6043
    %v6045 = vpop.f32.mrf.mxu0
    %v6046 = vpop.f32.mrf.mxu0
    %v6047 = vadd.f32 %v5758, %v6046
    %v6048 = vpop.f32.mrf.mxu0
    %6049 = vmatprep.mubr.bf16.mxu0 %v5399
    %6050 = vmatmul.mubr.bf16.gmra.mxu0 %v5398
    %v6051 = vpop.f32.mrf.mxu0
    %v6052 = vadd.f32 %v5763, %v6051
    %v6053 = vpop.f32.mrf.mxu0
    %v6054 = vpop.f32.mrf.mxu0
    %v6055 = vadd.f32 %v5766, %v6054
    %v6056 = vpop.f32.mrf.mxu0
    %6057 = vmatprep.mubr.bf16.mxu0 %v5403
    %6058 = vmatmul.mubr.bf16.gmra.mxu0 %v5402
    %v6059 = vpop.f32.mrf.mxu0
    %v6060 = vadd.f32 %v5771, %v6059
    %v6061 = vpop.f32.mrf.mxu0
    %v6062 = vpop.f32.mrf.mxu0
    %v6063 = vadd.f32 %v5774, %v6062
    %v6064 = vpop.f32.mrf.mxu0
    %6065 = vmatprep.mubr.bf16.mxu0 %v5407
    %6066 = vmatmul.mubr.bf16.gmra.mxu0 %v5406
    %v6067 = vpop.f32.mrf.mxu0
    %v6068 = vadd.f32 %v5779, %v6067
    %v6069 = vpop.f32.mrf.mxu0
    %v6070 = vpop.f32.mrf.mxu0
    %v6071 = vadd.f32 %v5782, %v6070
    %v6072 = vpop.f32.mrf.mxu0
    %6073 = vmatprep.mubr.bf16.mxu0 %v5411
    %6074 = vmatmul.mubr.bf16.gmra.mxu0 %v5410
    %v6075 = vpop.f32.mrf.mxu0
    %v6076 = vadd.f32 %v5787, %v6075
    %v6077 = vpop.f32.mrf.mxu0
    %v6078 = vpop.f32.mrf.mxu0
    %v6079 = vadd.f32 %v5790, %v6078
    %v6080 = vpop.f32.mrf.mxu0
    %6081 = vmatprep.mubr.bf16.mxu0 %v5415
    %6082 = vmatmul.mubr.bf16.gmra.mxu0 %v5414
    %v6083 = vpop.f32.mrf.mxu0
    %v6084 = vadd.f32 %v5795, %v6083
    %v6085 = vpop.f32.mrf.mxu0
    %v6086 = vpop.f32.mrf.mxu0
    %v6087 = vadd.f32 %v5798, %v6086
    %v6088 = vpop.f32.mrf.mxu0
    %6089 = vmatprep.mubr.bf16.mxu0 %v5419
    %6090 = vmatmul.mubr.bf16.gmra.mxu0 %v5418
    %v6091 = vpop.f32.mrf.mxu0
    %v6092 = vadd.f32 %v5803, %v6091
    %v6093 = vpop.f32.mrf.mxu0
    %v6094 = vpop.f32.mrf.mxu0
    %v6095 = vadd.f32 %v5806, %v6094
    %v6096 = vpop.f32.mrf.mxu0
    %6097 = vmatprep.mubr.bf16.mxu0 %v5423
    %6098 = vmatmul.mubr.bf16.gmra.mxu0 %v5422
    %v6099 = vpop.f32.mrf.mxu0
    %v6100 = vadd.f32 %v5811, %v6099
    %v6101 = vpop.f32.mrf.mxu0
    %v6102 = vpop.f32.mrf.mxu0
    %v6103 = vadd.f32 %v5814, %v6102
    %v6104 = vpop.f32.mrf.mxu0
    %6105 = vmatprep.mubr.bf16.mxu0 %v5427
    %6106 = vmatmul.mubr.bf16.gmra.mxu0 %v5426
    %v6107 = vpop.f32.mrf.mxu0
    %v6108 = vadd.f32 %v5819, %v6107
    %v6109 = vpop.f32.mrf.mxu0
    %v6110 = vpop.f32.mrf.mxu0
    %v6111 = vadd.f32 %v5822, %v6110
    %v6112 = vpop.f32.mrf.mxu0
    %6113 = vmatprep.mubr.bf16.mxu0 %v5431
    %6114 = vmatmul.mubr.bf16.gmra.mxu0 %v5430
    %v6115 = vpop.f32.mrf.mxu0
    %v6116 = vadd.f32 %v5827, %v6115
    %v6117 = vpop.f32.mrf.mxu0
    %v6118 = vpop.f32.mrf.mxu0
    %v6119 = vadd.f32 %v5830, %v6118
    %v6120 = vpop.f32.mrf.mxu0
    %6121 = vmatprep.mubr.bf16.mxu0 %v5435
    %6122 = vmatmul.mubr.bf16.gmra.mxu0 %v5434
    %v6123 = vpop.f32.mrf.mxu0
    %v6124 = vadd.f32 %v5835, %v6123
    %v6125 = vpop.f32.mrf.mxu0
    %v6126 = vpop.f32.mrf.mxu0
    %v6127 = vadd.f32 %v5838, %v6126
    %v6128 = vpop.f32.mrf.mxu0
    %6129 = vmatprep.mubr.bf16.mxu0 %v5439
    %6130 = vmatmul.mubr.bf16.gmra.mxu0 %v5438
    %v6131 = vpop.f32.mrf.mxu0
    %v6132 = vadd.f32 %v5843, %v6131
    %v6133 = vpop.f32.mrf.mxu0
    %v6134 = vpop.f32.mrf.mxu0
    %v6135 = vadd.f32 %v5846, %v6134
    %v6136 = vpop.f32.mrf.mxu0
    %6137 = vmatprep.mubr.bf16.mxu0 %v5443
    %6138 = vmatmul.mubr.bf16.gmra.mxu0 %v5442
    %v6139 = vpop.f32.mrf.mxu0
    %v6140 = vadd.f32 %v5851, %v6139
    %v6141 = vpop.f32.mrf.mxu0
    %v6142 = vpop.f32.mrf.mxu0
    %v6143 = vadd.f32 %v5854, %v6142
    %v6144 = vpop.f32.mrf.mxu0
    %6145 = vmatprep.mubr.bf16.mxu0 %v5447
    %6146 = vmatmul.mubr.bf16.gmra.mxu0 %v5446
    %v6147 = vpop.f32.mrf.mxu0
    %v6148 = vadd.f32 %v5859, %v6147
    %v6149 = vpop.f32.mrf.mxu0
    %v6150 = vpop.f32.mrf.mxu0
    %v6151 = vadd.f32 %v5862, %v6150
    %v6152 = vpop.f32.mrf.mxu0
    %6153 = vdwg.mxu0
    %v6154 = vmax.f32 %v5900, 0.0
    %v6155 = vmax.f32 %v5903, 0.0
    %v6156 = vmax.f32 %v5908, 0.0
    %v6157 = vmax.f32 %v5911, 0.0
    %v6158 = vmax.f32 %v5916, 0.0
    %v6159 = vmax.f32 %v5919, 0.0
    %v6160 = vmax.f32 %v5924, 0.0
    %v6161 = vmax.f32 %v5927, 0.0
    %v6162 = vmax.f32 %v5932, 0.0
    %v6163 = vmax.f32 %v5935, 0.0
    %v6164 = vmax.f32 %v5940, 0.0
    %v6165 = vmax.f32 %v5943, 0.0
    %v6166 = vmax.f32 %v5948, 0.0
    %v6167 = vmax.f32 %v5951, 0.0
    %v6168 = vmax.f32 %v5956, 0.0
    %v6169 = vmax.f32 %v5959, 0.0
    %v6170 = vmax.f32 %v5964, 0.0
    %v6171 = vmax.f32 %v5967, 0.0
    %v6172 = vmax.f32 %v5972, 0.0
    %v6173 = vmax.f32 %v5975, 0.0
    %v6174 = vmax.f32 %v5980, 0.0
    %v6175 = vmax.f32 %v5983, 0.0
    %v6176 = vmax.f32 %v5988, 0.0
    %v6177 = vmax.f32 %v5991, 0.0
    %v6178 = vmax.f32 %v5996, 0.0
    %v6179 = vmax.f32 %v5999, 0.0
    %v6180 = vmax.f32 %v6004, 0.0
    %v6181 = vmax.f32 %v6007, 0.0
    %v6182 = vmax.f32 %v6012, 0.0
    %v6183 = vmax.f32 %v6015, 0.0
    %v6184 = vmax.f32 %v6020, 0.0
    %v6185 = vmax.f32 %v6023, 0.0
    %v6186 = vmax.f32 %v6028, 0.0
    %v6187 = vmax.f32 %v6031, 0.0
    %v6188 = vmax.f32 %v6036, 0.0
    %v6189 = vmax.f32 %v6039, 0.0
    %v6190 = vmax.f32 %v6044, 0.0
    %v6191 = vmax.f32 %v6047, 0.0
    %v6192 = vmax.f32 %v6052, 0.0
    %v6193 = vmax.f32 %v6055, 0.0
    %v6194 = vmax.f32 %v6060, 0.0
    %v6195 = vmax.f32 %v6063, 0.0
    %v6196 = vmax.f32 %v6068, 0.0
    %v6197 = vmax.f32 %v6071, 0.0
    %v6198 = vmax.f32 %v6076, 0.0
    %v6199 = vmax.f32 %v6079, 0.0
    %v6200 = vmax.f32 %v6084, 0.0
    %v6201 = vmax.f32 %v6087, 0.0
    %v6202 = vmax.f32 %v6092, 0.0
    %v6203 = vmax.f32 %v6095, 0.0
    %v6204 = vmax.f32 %v6100, 0.0
    %v6205 = vmax.f32 %v6103, 0.0
    %v6206 = vmax.f32 %v6108, 0.0
    %v6207 = vmax.f32 %v6111, 0.0
    %v6208 = vmax.f32 %v6116, 0.0
    %v6209 = vmax.f32 %v6119, 0.0
    %v6210 = vmax.f32 %v6124, 0.0
    %v6211 = vmax.f32 %v6127, 0.0
    %v6212 = vmax.f32 %v6132, 0.0
    %v6213 = vmax.f32 %v6135, 0.0
    %v6214 = vmax.f32 %v6140, 0.0
    %v6215 = vmax.f32 %v6143, 0.0
    %v6216 = vmax.f32 %v6148, 0.0
    %v6217 = vmax.f32 %v6151, 0.0
    %v6218 = vpack.c.bf16 %v6155, %v6154
    %v6219 = vpack.c.bf16 %v6157, %v6156
    %v6220 = vpack.c.bf16 %v6159, %v6158
    %v6221 = vpack.c.bf16 %v6161, %v6160
    %v6222 = vpack.c.bf16 %v6163, %v6162
    %v6223 = vpack.c.bf16 %v6165, %v6164
    %v6224 = vpack.c.bf16 %v6167, %v6166
    %v6225 = vpack.c.bf16 %v6169, %v6168
    %v6226 = vpack.c.bf16 %v6171, %v6170
    %v6227 = vpack.c.bf16 %v6173, %v6172
    %v6228 = vpack.c.bf16 %v6175, %v6174
    %v6229 = vpack.c.bf16 %v6177, %v6176
    %v6230 = vpack.c.bf16 %v6179, %v6178
    %v6231 = vpack.c.bf16 %v6181, %v6180
    %v6232 = vpack.c.bf16 %v6183, %v6182
    %v6233 = vpack.c.bf16 %v6185, %v6184
    %v6234 = vpack.c.bf16 %v6187, %v6186
    %v6235 = vpack.c.bf16 %v6189, %v6188
    %v6236 = vpack.c.bf16 %v6191, %v6190
    %v6237 = vpack.c.bf16 %v6193, %v6192
    %v6238 = vpack.c.bf16 %v6195, %v6194
    %v6239 = vpack.c.bf16 %v6197, %v6196
    %v6240 = vpack.c.bf16 %v6199, %v6198
    %v6241 = vpack.c.bf16 %v6201, %v6200
    %v6242 = vpack.c.bf16 %v6203, %v6202
    %v6243 = vpack.c.bf16 %v6205, %v6204
    %v6244 = vpack.c.bf16 %v6207, %v6206
    %v6245 = vpack.c.bf16 %v6209, %v6208
    %v6246 = vpack.c.bf16 %v6211, %v6210
    %v6247 = vpack.c.bf16 %v6213, %v6212
    %v6248 = vpack.c.bf16 %v6215, %v6214
    %v6249 = vpack.c.bf16 %v6217, %v6216
    %v6250 = vunpack.c.l.bf16 %v6218
    %v6251 = vunpack.c.h.bf16 %v6218
    %v6252 = vunpack.c.l.bf16 %v6219
    %v6253 = vunpack.c.h.bf16 %v6219
    %v6254 = vunpack.c.l.bf16 %v6220
    %v6255 = vunpack.c.h.bf16 %v6220
    %v6256 = vunpack.c.l.bf16 %v6221
    %v6257 = vunpack.c.h.bf16 %v6221
    %v6258 = vunpack.c.l.bf16 %v6222
    %v6259 = vunpack.c.h.bf16 %v6222
    %v6260 = vunpack.c.l.bf16 %v6223
    %v6261 = vunpack.c.h.bf16 %v6223
    %v6262 = vunpack.c.l.bf16 %v6224
    %v6263 = vunpack.c.h.bf16 %v6224
    %v6264 = vunpack.c.l.bf16 %v6225
    %v6265 = vunpack.c.h.bf16 %v6225
    %v6266 = vunpack.c.l.bf16 %v6226
    %v6267 = vunpack.c.h.bf16 %v6226
    %v6268 = vunpack.c.l.bf16 %v6227
    %v6269 = vunpack.c.h.bf16 %v6227
    %v6270 = vunpack.c.l.bf16 %v6228
    %v6271 = vunpack.c.h.bf16 %v6228
    %v6272 = vunpack.c.l.bf16 %v6229
    %v6273 = vunpack.c.h.bf16 %v6229
    %v6274 = vunpack.c.l.bf16 %v6230
    %v6275 = vunpack.c.h.bf16 %v6230
    %v6276 = vunpack.c.l.bf16 %v6231
    %v6277 = vunpack.c.h.bf16 %v6231
    %v6278 = vunpack.c.l.bf16 %v6232
    %v6279 = vunpack.c.h.bf16 %v6232
    %v6280 = vunpack.c.l.bf16 %v6233
    %v6281 = vunpack.c.h.bf16 %v6233
    %v6282 = vunpack.c.l.bf16 %v6234
    %v6283 = vunpack.c.h.bf16 %v6234
    %v6284 = vunpack.c.l.bf16 %v6235
    %v6285 = vunpack.c.h.bf16 %v6235
    %v6286 = vunpack.c.l.bf16 %v6236
    %v6287 = vunpack.c.h.bf16 %v6236
    %v6288 = vunpack.c.l.bf16 %v6237
    %v6289 = vunpack.c.h.bf16 %v6237
    %v6290 = vunpack.c.l.bf16 %v6238
    %v6291 = vunpack.c.h.bf16 %v6238
    %v6292 = vunpack.c.l.bf16 %v6239
    %v6293 = vunpack.c.h.bf16 %v6239
    %v6294 = vunpack.c.l.bf16 %v6240
    %v6295 = vunpack.c.h.bf16 %v6240
    %v6296 = vunpack.c.l.bf16 %v6241
    %v6297 = vunpack.c.h.bf16 %v6241
    %v6298 = vunpack.c.l.bf16 %v6242
    %v6299 = vunpack.c.h.bf16 %v6242
    %v6300 = vunpack.c.l.bf16 %v6243
    %v6301 = vunpack.c.h.bf16 %v6243
    %v6302 = vunpack.c.l.bf16 %v6244
    %v6303 = vunpack.c.h.bf16 %v6244
    %v6304 = vunpack.c.l.bf16 %v6245
    %v6305 = vunpack.c.h.bf16 %v6245
    %v6306 = vunpack.c.l.bf16 %v6246
    %v6307 = vunpack.c.h.bf16 %v6246
    %v6308 = vunpack.c.l.bf16 %v6247
    %v6309 = vunpack.c.h.bf16 %v6247
    %v6310 = vunpack.c.l.bf16 %v6248
    %v6311 = vunpack.c.h.bf16 %v6248
    %v6312 = vunpack.c.l.bf16 %v6249
    %v6313 = vunpack.c.h.bf16 %v6249
    %6314 = vset.pattern.permute.xlu0 4
    %6315 = vperm.xlu0 %6314, %v66
    %v6316 = vpop.permute.xlu0 %6315
    %6318 = vset.pattern.permute.xlu0 4
    %6319 = vperm.xlu0 %6318, %v67
    %v6320 = vpop.permute.xlu0 %6319
    %6322 = vset.pattern.permute.xlu0 4
    %6323 = vperm.xlu0 %6322, %v68
    %v6324 = vpop.permute.xlu0 %6323
    %6326 = vset.pattern.permute.xlu0 4
    %6327 = vperm.xlu0 %6326, %v69
    %v6328 = vpop.permute.xlu0 %6327
    %6330 = vset.pattern.permute.xlu0 4
    %6331 = vperm.xlu0 %6330, %v70
    %v6332 = vpop.permute.xlu0 %6331
    %6334 = vset.pattern.permute.xlu0 4
    %6335 = vperm.xlu0 %6334, %v71
    %v6336 = vpop.permute.xlu0 %6335
    %6338 = vset.pattern.permute.xlu0 4
    %6339 = vperm.xlu0 %6338, %v72
    %v6340 = vpop.permute.xlu0 %6339
    %6342 = vset.pattern.permute.xlu0 4
    %6343 = vperm.xlu0 %6342, %v73
    %v6344 = vpop.permute.xlu0 %6343
    %6346 = vset.pattern.permute.xlu0 4
    %6347 = vperm.xlu0 %6346, %v74
    %v6348 = vpop.permute.xlu0 %6347
    %6350 = vset.pattern.permute.xlu0 4
    %6351 = vperm.xlu0 %6350, %v75
    %v6352 = vpop.permute.xlu0 %6351
    %6354 = vset.pattern.permute.xlu0 4
    %6355 = vperm.xlu0 %6354, %v76
    %v6356 = vpop.permute.xlu0 %6355
    %6358 = vset.pattern.permute.xlu0 4
    %6359 = vperm.xlu0 %6358, %v77
    %v6360 = vpop.permute.xlu0 %6359
    %6362 = vset.pattern.permute.xlu0 4
    %6363 = vperm.xlu0 %6362, %v78
    %v6364 = vpop.permute.xlu0 %6363
    %6366 = vset.pattern.permute.xlu0 4
    %6367 = vperm.xlu0 %6366, %v79
    %v6368 = vpop.permute.xlu0 %6367
    %6370 = vset.pattern.permute.xlu0 4
    %6371 = vperm.xlu0 %6370, %v80
    %v6372 = vpop.permute.xlu0 %6371
    %6374 = vset.pattern.permute.xlu0 4
    %6375 = vperm.xlu0 %6374, %v81
    %v6376 = vpop.permute.xlu0 %6375
    %6378 = vset.pattern.permute.xlu0 4
    %6379 = vperm.xlu0 %6378, %v82
    %v6380 = vpop.permute.xlu0 %6379
    %6382 = vset.pattern.permute.xlu0 4
    %6383 = vperm.xlu0 %6382, %v83
    %v6384 = vpop.permute.xlu0 %6383
    %6386 = vset.pattern.permute.xlu0 4
    %6387 = vperm.xlu0 %6386, %v84
    %v6388 = vpop.permute.xlu0 %6387
    %6390 = vset.pattern.permute.xlu0 4
    %6391 = vperm.xlu0 %6390, %v85
    %v6392 = vpop.permute.xlu0 %6391
    %6394 = vset.pattern.permute.xlu0 4
    %6395 = vperm.xlu0 %6394, %v86
    %v6396 = vpop.permute.xlu0 %6395
    %6398 = vset.pattern.permute.xlu0 4
    %6399 = vperm.xlu0 %6398, %v87
    %v6400 = vpop.permute.xlu0 %6399
    %6402 = vset.pattern.permute.xlu0 4
    %6403 = vperm.xlu0 %6402, %v88
    %v6404 = vpop.permute.xlu0 %6403
    %6406 = vset.pattern.permute.xlu0 4
    %6407 = vperm.xlu0 %6406, %v89
    %v6408 = vpop.permute.xlu0 %6407
    %6410 = vset.pattern.permute.xlu0 4
    %6411 = vperm.xlu0 %6410, %v90
    %v6412 = vpop.permute.xlu0 %6411
    %6414 = vset.pattern.permute.xlu0 4
    %6415 = vperm.xlu0 %6414, %v91
    %v6416 = vpop.permute.xlu0 %6415
    %6418 = vset.pattern.permute.xlu0 4
    %6419 = vperm.xlu0 %6418, %v92
    %v6420 = vpop.permute.xlu0 %6419
    %6422 = vset.pattern.permute.xlu0 4
    %6423 = vperm.xlu0 %6422, %v93
    %v6424 = vpop.permute.xlu0 %6423
    %6426 = vset.pattern.permute.xlu0 4
    %6427 = vperm.xlu0 %6426, %v94
    %v6428 = vpop.permute.xlu0 %6427
    %6430 = vset.pattern.permute.xlu0 4
    %6431 = vperm.xlu0 %6430, %v95
    %v6432 = vpop.permute.xlu0 %6431
    %6434 = vset.pattern.permute.xlu0 4
    %6435 = vperm.xlu0 %6434, %v96
    %v6436 = vpop.permute.xlu0 %6435
    %6438 = vset.pattern.permute.xlu0 4
    %6439 = vperm.xlu0 %6438, %v97
    %v6440 = vpop.permute.xlu0 %6439
    %6442 = vset.pattern.permute.xlu0 4
    %6443 = vperm.xlu0 %6442, %v98
    %v6444 = vpop.permute.xlu0 %6443
    %6446 = vset.pattern.permute.xlu0 4
    %6447 = vperm.xlu0 %6446, %v99
    %v6448 = vpop.permute.xlu0 %6447
    %6450 = vset.pattern.permute.xlu0 4
    %6451 = vperm.xlu0 %6450, %v100
    %v6452 = vpop.permute.xlu0 %6451
    %6454 = vset.pattern.permute.xlu0 4
    %6455 = vperm.xlu0 %6454, %v101
    %v6456 = vpop.permute.xlu0 %6455
    %6458 = vset.pattern.permute.xlu0 4
    %6459 = vperm.xlu0 %6458, %v102
    %v6460 = vpop.permute.xlu0 %6459
    %6462 = vset.pattern.permute.xlu0 4
    %6463 = vperm.xlu0 %6462, %v103
    %v6464 = vpop.permute.xlu0 %6463
    %6466 = vset.pattern.permute.xlu0 4
    %6467 = vperm.xlu0 %6466, %v104
    %v6468 = vpop.permute.xlu0 %6467
    %6470 = vset.pattern.permute.xlu0 4
    %6471 = vperm.xlu0 %6470, %v105
    %v6472 = vpop.permute.xlu0 %6471
    %6474 = vset.pattern.permute.xlu0 4
    %6475 = vperm.xlu0 %6474, %v106
    %v6476 = vpop.permute.xlu0 %6475
    %6478 = vset.pattern.permute.xlu0 4
    %6479 = vperm.xlu0 %6478, %v107
    %v6480 = vpop.permute.xlu0 %6479
    %6482 = vset.pattern.permute.xlu0 4
    %6483 = vperm.xlu0 %6482, %v108
    %v6484 = vpop.permute.xlu0 %6483
    %6486 = vset.pattern.permute.xlu0 4
    %6487 = vperm.xlu0 %6486, %v109
    %v6488 = vpop.permute.xlu0 %6487
    %6490 = vset.pattern.permute.xlu0 4
    %6491 = vperm.xlu0 %6490, %v110
    %v6492 = vpop.permute.xlu0 %6491
    %6494 = vset.pattern.permute.xlu0 4
    %6495 = vperm.xlu0 %6494, %v111
    %v6496 = vpop.permute.xlu0 %6495
    %6498 = vset.pattern.permute.xlu0 4
    %6499 = vperm.xlu0 %6498, %v112
    %v6500 = vpop.permute.xlu0 %6499
    %6502 = vset.pattern.permute.xlu0 4
    %6503 = vperm.xlu0 %6502, %v113
    %v6504 = vpop.permute.xlu0 %6503
    %6506 = vset.pattern.permute.xlu0 4
    %6507 = vperm.xlu0 %6506, %v114
    %v6508 = vpop.permute.xlu0 %6507
    %6510 = vset.pattern.permute.xlu0 4
    %6511 = vperm.xlu0 %6510, %v115
    %v6512 = vpop.permute.xlu0 %6511
    %6514 = vset.pattern.permute.xlu0 4
    %6515 = vperm.xlu0 %6514, %v116
    %v6516 = vpop.permute.xlu0 %6515
    %6518 = vset.pattern.permute.xlu0 4
    %6519 = vperm.xlu0 %6518, %v117
    %v6520 = vpop.permute.xlu0 %6519
    %6522 = vset.pattern.permute.xlu0 4
    %6523 = vperm.xlu0 %6522, %v118
    %v6524 = vpop.permute.xlu0 %6523
    %6526 = vset.pattern.permute.xlu0 4
    %6527 = vperm.xlu0 %6526, %v119
    %v6528 = vpop.permute.xlu0 %6527
    %6530 = vset.pattern.permute.xlu0 4
    %6531 = vperm.xlu0 %6530, %v120
    %v6532 = vpop.permute.xlu0 %6531
    %6534 = vset.pattern.permute.xlu0 4
    %6535 = vperm.xlu0 %6534, %v121
    %v6536 = vpop.permute.xlu0 %6535
    %6538 = vset.pattern.permute.xlu0 4
    %6539 = vperm.xlu0 %6538, %v122
    %v6540 = vpop.permute.xlu0 %6539
    %6542 = vset.pattern.permute.xlu0 4
    %6543 = vperm.xlu0 %6542, %v123
    %v6544 = vpop.permute.xlu0 %6543
    %6546 = vset.pattern.permute.xlu0 4
    %6547 = vperm.xlu0 %6546, %v124
    %v6548 = vpop.permute.xlu0 %6547
    %6550 = vset.pattern.permute.xlu0 4
    %6551 = vperm.xlu0 %6550, %v125
    %v6552 = vpop.permute.xlu0 %6551
    %6554 = vset.pattern.permute.xlu0 4
    %6555 = vperm.xlu0 %6554, %v126
    %v6556 = vpop.permute.xlu0 %6555
    %6558 = vset.pattern.permute.xlu0 4
    %6559 = vperm.xlu0 %6558, %v127
    %v6560 = vpop.permute.xlu0 %6559
    %6562 = vset.pattern.permute.xlu0 4
    %6563 = vperm.xlu0 %6562, %v128
    %v6564 = vpop.permute.xlu0 %6563
    %6566 = vset.pattern.permute.xlu0 4
    %6567 = vperm.xlu0 %6566, %v129
    %v6568 = vpop.permute.xlu0 %6567
    %v6570 = vmul.f32 %v6250, %v6316
    %v6571 = vmul.f32 %v6251, %v6320
    %v6572 = vmul.f32 %v6252, %v6324
    %v6573 = vmul.f32 %v6253, %v6328
    %v6574 = vmul.f32 %v6254, %v6332
    %v6575 = vmul.f32 %v6255, %v6336
    %v6576 = vmul.f32 %v6256, %v6340
    %v6577 = vmul.f32 %v6257, %v6344
    %v6578 = vmul.f32 %v6258, %v6348
    %v6579 = vmul.f32 %v6259, %v6352
    %v6580 = vmul.f32 %v6260, %v6356
    %v6581 = vmul.f32 %v6261, %v6360
    %v6582 = vmul.f32 %v6262, %v6364
    %v6583 = vmul.f32 %v6263, %v6368
    %v6584 = vmul.f32 %v6264, %v6372
    %v6585 = vmul.f32 %v6265, %v6376
    %v6586 = vmul.f32 %v6266, %v6380
    %v6587 = vmul.f32 %v6267, %v6384
    %v6588 = vmul.f32 %v6268, %v6388
    %v6589 = vmul.f32 %v6269, %v6392
    %v6590 = vmul.f32 %v6270, %v6396
    %v6591 = vmul.f32 %v6271, %v6400
    %v6592 = vmul.f32 %v6272, %v6404
    %v6593 = vmul.f32 %v6273, %v6408
    %v6594 = vmul.f32 %v6274, %v6412
    %v6595 = vmul.f32 %v6275, %v6416
    %v6596 = vmul.f32 %v6276, %v6420
    %v6597 = vmul.f32 %v6277, %v6424
    %v6598 = vmul.f32 %v6278, %v6428
    %v6599 = vmul.f32 %v6279, %v6432
    %v6600 = vmul.f32 %v6280, %v6436
    %v6601 = vmul.f32 %v6281, %v6440
    %v6602 = vmul.f32 %v6282, %v6444
    %v6603 = vmul.f32 %v6283, %v6448
    %v6604 = vmul.f32 %v6284, %v6452
    %v6605 = vmul.f32 %v6285, %v6456
    %v6606 = vmul.f32 %v6286, %v6460
    %v6607 = vmul.f32 %v6287, %v6464
    %v6608 = vmul.f32 %v6288, %v6468
    %v6609 = vmul.f32 %v6289, %v6472
    %v6610 = vmul.f32 %v6290, %v6476
    %v6611 = vmul.f32 %v6291, %v6480
    %v6612 = vmul.f32 %v6292, %v6484
    %v6613 = vmul.f32 %v6293, %v6488
    %v6614 = vmul.f32 %v6294, %v6492
    %v6615 = vmul.f32 %v6295, %v6496
    %v6616 = vmul.f32 %v6296, %v6500
    %v6617 = vmul.f32 %v6297, %v6504
    %v6618 = vmul.f32 %v6298, %v6508
    %v6619 = vmul.f32 %v6299, %v6512
    %v6620 = vmul.f32 %v6300, %v6516
    %v6621 = vmul.f32 %v6301, %v6520
    %v6622 = vmul.f32 %v6302, %v6524
    %v6623 = vmul.f32 %v6303, %v6528
    %v6624 = vmul.f32 %v6304, %v6532
    %v6625 = vmul.f32 %v6305, %v6536
    %v6626 = vmul.f32 %v6306, %v6540
    %v6627 = vmul.f32 %v6307, %v6544
    %v6628 = vmul.f32 %v6308, %v6548
    %v6629 = vmul.f32 %v6309, %v6552
    %v6630 = vmul.f32 %v6310, %v6556
    %v6631 = vmul.f32 %v6311, %v6560
    %v6632 = vmul.f32 %v6312, %v6564
    %v6633 = vmul.f32 %v6313, %v6568
    %v6634 = vadd.f32 %v6570, %v6571
    %v6635 = vadd.f32 %v6634, %v6572
    %v6636 = vadd.f32 %v6635, %v6573
    %v6637 = vadd.f32 %v6636, %v6574
    %v6638 = vadd.f32 %v6637, %v6575
    %v6639 = vadd.f32 %v6638, %v6576
    %v6640 = vadd.f32 %v6639, %v6577
    %v6641 = vadd.f32 %v6640, %v6578
    %v6642 = vadd.f32 %v6641, %v6579
    %v6643 = vadd.f32 %v6642, %v6580
    %v6644 = vadd.f32 %v6643, %v6581
    %v6645 = vadd.f32 %v6644, %v6582
    %v6646 = vadd.f32 %v6645, %v6583
    %v6647 = vadd.f32 %v6646, %v6584
    %v6648 = vadd.f32 %v6647, %v6585
    %v6649 = vadd.f32 %v6648, %v6586
    %v6650 = vadd.f32 %v6649, %v6587
    %v6651 = vadd.f32 %v6650, %v6588
    %v6652 = vadd.f32 %v6651, %v6589
    %v6653 = vadd.f32 %v6652, %v6590
    %v6654 = vadd.f32 %v6653, %v6591
    %v6655 = vadd.f32 %v6654, %v6592
    %v6656 = vadd.f32 %v6655, %v6593
    %v6657 = vadd.f32 %v6656, %v6594
    %v6658 = vadd.f32 %v6657, %v6595
    %v6659 = vadd.f32 %v6658, %v6596
    %v6660 = vadd.f32 %v6659, %v6597
    %v6661 = vadd.f32 %v6660, %v6598
    %v6662 = vadd.f32 %v6661, %v6599
    %v6663 = vadd.f32 %v6662, %v6600
    %v6664 = vadd.f32 %v6663, %v6601
    %v6665 = vadd.f32 %v6664, %v6602
    %v6666 = vadd.f32 %v6665, %v6603
    %v6667 = vadd.f32 %v6666, %v6604
    %v6668 = vadd.f32 %v6667, %v6605
    %v6669 = vadd.f32 %v6668, %v6606
    %v6670 = vadd.f32 %v6669, %v6607
    %v6671 = vadd.f32 %v6670, %v6608
    %v6672 = vadd.f32 %v6671, %v6609
    %v6673 = vadd.f32 %v6672, %v6610
    %v6674 = vadd.f32 %v6673, %v6611
    %v6675 = vadd.f32 %v6674, %v6612
    %v6676 = vadd.f32 %v6675, %v6613
    %v6677 = vadd.f32 %v6676, %v6614
    %v6678 = vadd.f32 %v6677, %v6615
    %v6679 = vadd.f32 %v6678, %v6616
    %v6680 = vadd.f32 %v6679, %v6617
    %v6681 = vadd.f32 %v6680, %v6618
    %v6682 = vadd.f32 %v6681, %v6619
    %v6683 = vadd.f32 %v6682, %v6620
    %v6684 = vadd.f32 %v6683, %v6621
    %v6685 = vadd.f32 %v6684, %v6622
    %v6686 = vadd.f32 %v6685, %v6623
    %v6687 = vadd.f32 %v6686, %v6624
    %v6688 = vadd.f32 %v6687, %v6625
    %v6689 = vadd.f32 %v6688, %v6626
    %v6690 = vadd.f32 %v6689, %v6627
    %v6691 = vadd.f32 %v6690, %v6628
    %v6692 = vadd.f32 %v6691, %v6629
    %v6693 = vadd.f32 %v6692, %v6630
    %v6694 = vadd.f32 %v6693, %v6631
    %v6695 = vadd.f32 %v6694, %v6632
    %v6696 = vadd.f32 %v6695, %v6633
    %v6697 = vrot.slane %v6696, 4
    %v6698 = vadd.f32 %v6696, %v6697
    %v6699 = vrot.slane %v6698, 2
    %v6700 = vadd.f32 %v6698, %v6699
    %v6701 = vrot.slane %v6700, 1
    %v6702 = vadd.f32 %v6700, %v6701
    %6704 = vset.pattern.permute.xlu0 5
    %6705 = vperm.xlu0 %6704, %v130
    %v6706 = vpop.permute.xlu0 %6705
    %v6708 = vadd.f32 %v6702, %v6706
    %v6709 = vxor.u32 %v6708, 2147483648
    %v6710 = vmul.f32 %v6709, 1.442695
    %v6711 = vpow.pop %v6710
    %v6712 = vadd.f32 %v6711, 1.0
    %v6713 = vrcp.pop %v6712
    %v6714 = vmul.f32 1.0, %v6713
    %6715 = vst [vmem:[#allocation8] sm:$0x1] %v6714
    // Predicated region
    $region38: #{tpu_custom_call.1} parent=1 // pred_check
      _
    $region39: #{tpu_custom_call.1} parent=1 // pred_check_branch
      %6717 = sbr.rel (0) target = $region41
    $region40: #{tpu_custom_call.1} parent=1 // pred_region
      %s6719 = ssub.s32 16, 16
      %6720 = vsyncadd [#allocation4], %s6719
      %s6722 = sshll.u32 [#allocation8], 4
      %s6723 = int_to_ptr.vmem [resolvable:$true] %s6722
      %6725 = dma.vmem_to_hbm [thread:$0]  %s6723, 16, %s6, [#allocation4]
    $region41: #{tpu_custom_call.1} parent=1 // pred_fallthru
      _
    // Predicated region
    $region42: #{tpu_custom_call.1} parent=1 // pred_check
      _
    $region43: #{tpu_custom_call.1} parent=1 // pred_check_branch
      %6727 = sbr.rel (0) target = $region45
    $region44: #{tpu_custom_call.1} parent=1 // pred_region
      %6728 = dma.done [#allocation4], 16
    $region45: #{tpu_custom_call.1} parent=1 // pred_fallthru
      _
    %6729 = vsyncpa [#allocation3], 1
    %6730 = vsyncpa [#allocation6], 1
    %6731 = vsyncpa [#allocation4], 1

</llo_original>
